<compile_context>
chip_gen: v7x
topology: tpu7x:2x2x1
jax: 0.10.0
libtpu: 0.0.40
codegen_flags: <defaults>
</compile_context>

<pallas_src>
import math
import numpy as np
import jax
import jax.numpy as jnp
from jax import lax
from jax.experimental import pallas as pl
from jax.experimental.pallas import tpu as pltpu


# ---------------------------------------------------------------------------
# Shape-only trilinear x2 interpolation matrix (PyTorch align_corners=False),
# built in numpy so it is a compile-time constant.
# ---------------------------------------------------------------------------
def upsample_matrix_np(in_size: int, scale: int = 2) -> np.ndarray:
    out_size = in_size * scale
    o = np.arange(out_size, dtype=np.float64)
    src = np.maximum((o + 0.5) / scale - 0.5, 0.0)  # PyTorch clamps negatives
    i0 = np.minimum(np.floor(src).astype(np.int64), in_size - 1)
    i1 = np.minimum(i0 + 1, in_size - 1)
    lam = src - i0
    M = np.zeros((out_size, in_size), np.float32)
    M[np.arange(out_size), i0] += (1.0 - lam).astype(np.float32)
    M[np.arange(out_size), i1] += lam.astype(np.float32)
    return M


def _pick_td(Dm, D, H, Hm, WCIN, WMCIN, WCOUT_PAD, budget=10 * 1024 * 1024):
    """Largest divisor of Dm whose per-step working set fits a VMEM budget
    (and keeps the output block's second-to-last dim a multiple of 8)."""
    valid = [td for td in range(Dm, 0, -1)
             if Dm % td == 0 and (td == Dm or (td * Hm) % 8 == 0)]

    def est(td):
        tdp = td + 2
        b = 2 * D * H * WCIN * 4                 # x block (double-buffered)
        b += 2 * tdp * H * D * H * 4             # depth-upsample operator
        b += 2 * 3 * tdp * Hm * tdp * H * 4      # fused H-upsample operator
        b += 2 * 9 * WMCIN * WCOUT_PAD * 4       # conv band weights
        b += 2 * td * Hm * WCOUT_PAD * 4         # output block
        b += (D * H + tdp * H + 3 * tdp * Hm) * WMCIN * 4   # intermediates
        b += td * Hm * WCOUT_PAD * 4             # accumulator
        return b

    for td in valid:
        if est(td) <= budget:
            return td
    return valid[-1]


# ---------------------------------------------------------------------------
# Fused forward: upsample x2 + Conv3d(k=3, pad=1) + bias + ReLU in one kernel
# ---------------------------------------------------------------------------
def upsampling_forward(x_ncdhw, weight_oidhw, bias, *, scale=2):
    """x: (N, Cin, D, H, W); weight: (Cout, Cin, 3, 3, 3); bias: (Cout,).
    Returns (N, Cout, 2D, 2H, 2W)."""
    N, Cin, D, H, W = x_ncdhw.shape
    Cout = weight_oidhw.shape[0]
    Dm, Hm, Wm = scale * D, scale * H, scale * W

    WCIN = W * Cin                             # input lane width   (w, cin)
    WMCIN = Wm * Cin                           # upsampled lane width (w_up, cin)
    WCOUT = Wm * Cout                          # output lane width  (w_out, cout)
    WCOUT_PAD = ((WCOUT + 127) // 128) * 128   # lane-dense (unmasked vst) output
    f32 = jnp.float32

    TD = _pick_td(Dm, D, H, Hm, WCIN, WMCIN, WCOUT_PAD)   # TD = Dm here
    NT = Dm // TD
    TDp = TD + 2                               # + depth halo row on each side
    TDHm = TD * Hm
    TDpHm = TDp * Hm

    # ---- static upsample / padding operators (compile-time constants) ------
    Md = upsample_matrix_np(D, scale)                         # (Dm, D)
    Mh = upsample_matrix_np(H, scale)                         # (Hm, H)
    Mw = upsample_matrix_np(W, scale)                         # (Wm, W)
    Md_pad = np.concatenate([np.zeros((1, D), np.float32), Md,
                             np.zeros((1, D), np.float32)], 0)  # (Dm+2, D)
    Mh_pad = np.concatenate([np.zeros((1, H), np.float32), Mh,
                             np.zeros((1, H), np.float32)], 0)  # (Hm+2, H)

    # Per depth tile t: D-upsample + depth conv zero-pad halo, on rows (d, h).
    # (With TD == Dm this is a single tile; when NT > 1 the full D*H input
    #  block is reused per tile -- acceptable fallback for large Dm.)
    kd_tiles = np.stack(
        [np.kron(Md_pad[t * TD: t * TD + TDp], np.eye(H, dtype=np.float32))
         for t in range(NT)], axis=0)                      # (NT, TDp*H, D*H)
    # All three kh taps FUSED into one operator: H-upsample + H zero-pad +
    # kh shift, applied on rows (p, h).
    kh_all = np.concatenate(
        [np.kron(np.eye(TDp, dtype=np.float32), Mh_pad[kh: kh + Hm])
         for kh in range(3)], axis=0)                      # (3*TDp*Hm, TDp*H)
    # W-upsample along the (w, cin) lane axis (no zero lane padding).
    mw_lane = np.kron(Mw.T, np.eye(Cin, dtype=np.float32))  # (WCIN, WMCIN)

    # ---- conv band weights: (9, WMCIN, WCOUT_PAD), one slab per (kd, kh) ----
    # slab rows: w_in*Cin + ci ; cols: w_out*Cout + co.  kw taps and the W
    # zero-padding are folded into the band structure (w_in = w_out + kw - 1).
    w_taps = jnp.transpose(weight_oidhw, (2, 3, 4, 1, 0)).astype(f32)  # (3,3,3,Cin,Cout)
    blocks = []
    for kd in range(3):
        for kh in range(3):
            blk = jnp.zeros((WMCIN, WCOUT), f32)
            for kw in range(3):
                band = np.eye(Wm, k=1 - kw, dtype=np.float32)
                blk = blk + jnp.kron(jnp.asarray(band), w_taps[kd, kh, kw])
            if WCOUT_PAD > WCOUT:
                blk = jnp.pad(blk, ((0, 0), (0, WCOUT_PAD - WCOUT)))
            blocks.append(blk)
    w_big = jnp.stack(blocks, axis=0)                       # (9, WMCIN, WCOUT_PAD)

    bias_row = jnp.tile(bias.astype(f32), Wm)               # (WCOUT,)
    if WCOUT_PAD > WCOUT:
        bias_row = jnp.pad(bias_row, (0, WCOUT_PAD - WCOUT))
    bias_row = bias_row.reshape(1, WCOUT_PAD)

    # Input: NCDHW -> (N, D*H, W*Cin)   (rows = (d, h), lanes = (w, cin))
    x2d = jnp.transpose(x_ncdhw, (0, 2, 3, 4, 1)).astype(f32).reshape(N, D * H, WCIN)

    def kernel(x_ref, kd_ref, kh_ref, mw_ref, w_ref, b_ref, o_ref):
        # W upsample on the lane axis:                          (D*H, WMCIN)
        c0 = jnp.dot(x_ref[0], mw_ref[...], preferred_element_type=f32)
        # D upsample + depth zero-pad halo for this tile:       (TDp*H, WMCIN)
        c1 = jnp.dot(kd_ref[0], c0, preferred_element_type=f32)
        # H upsample + H zero-pad, all three kh shifts in ONE matmul:
        #                                                       (3*TDp*Hm, WMCIN)
        f_all = jnp.dot(kh_ref[...], c1, preferred_element_type=f32)
        # 27-tap conv: 9 accumulating dots fed by 8-aligned row slices of
        # f_all (no im2col concat, no zero-lane padding in the contraction).
        acc = None
        for kd in range(3):
            for kh in range(3):
                r0 = kh * TDpHm + kd * Hm
                part = jnp.dot(f_all[r0:r0 + TDHm, :], w_ref[kd * 3 + kh],
                               preferred_element_type=f32)    # (TD*Hm, WCOUT_PAD)
                acc = part if acc is None else acc + part
        # Bias + ReLU; lane-dense (multiple-of-128) store.
        o_ref[0] = jnp.maximum(acc + b_ref[...], 0.0).astype(o_ref.dtype)

    y = pl.pallas_call(
        kernel,
        out_shape=jax.ShapeDtypeStruct((N, Dm * Hm, WCOUT_PAD), f32),
        grid_spec=pltpu.PrefetchScalarGridSpec(
            num_scalar_prefetch=0,
            grid=(N, NT),
            in_specs=[
                pl.BlockSpec((1, D * H, WCIN), lambda n, t: (n, 0, 0)),       # x
                pl.BlockSpec((1, TDp * H, D * H), lambda n, t: (t, 0, 0)),    # D op
                pl.BlockSpec((3 * TDpHm, TDp * H), lambda n, t: (0, 0)),      # H op (fused)
                pl.BlockSpec((WCIN, WMCIN), lambda n, t: (0, 0)),             # W op
                pl.BlockSpec((9, WMCIN, WCOUT_PAD), lambda n, t: (0, 0, 0)),  # conv weights
                pl.BlockSpec((1, WCOUT_PAD), lambda n, t: (0, 0)),            # bias
            ],
            out_specs=pl.BlockSpec((1, TDHm, WCOUT_PAD), lambda n, t: (n, t, 0)),
        ),
        compiler_params=pltpu.CompilerParams(
            dimension_semantics=("parallel", "parallel")),
    )(x2d, jnp.asarray(kd_tiles), jnp.asarray(kh_all), jnp.asarray(mw_lane),
      w_big, bias_row)

    # (N, Dm*Hm, WCOUT_PAD) -> NCDHW (slice off the lane pad; no-op here)
    y = y[:, :, :WCOUT].reshape(N, Dm, Hm, Wm, Cout)
    return jnp.transpose(y, (0, 4, 1, 2, 3))


# ---------------------------------------------------------------------------
# Pure-JAX reference (for correctness check)
# ---------------------------------------------------------------------------
def reference_forward(x_ncdhw, weight_oidhw, bias, *, scale=2):
    N, Cin, D, H, W = x_ncdhw.shape
    x = jnp.transpose(x_ncdhw, (0, 2, 3, 4, 1)).astype(jnp.float32)
    Md = jnp.asarray(upsample_matrix_np(D, scale))
    Mh = jnp.asarray(upsample_matrix_np(H, scale))
    Mw = jnp.asarray(upsample_matrix_np(W, scale))
    x = jnp.einsum("od,ndhwc->nohwc", Md, x)
    x = jnp.einsum("ph,nohwc->nopwc", Mh, x)
    x = jnp.einsum("qw,nopwc->nopqc", Mw, x)
    w = jnp.transpose(weight_oidhw, (2, 3, 4, 1, 0)).astype(jnp.float32)
    y = lax.conv_general_dilated(
        x, w, window_strides=(1, 1, 1), padding="SAME",
        dimension_numbers=("NDHWC", "DHWIO", "NDHWC"))
    y = jnp.maximum(y + bias.reshape(1, 1, 1, 1, -1), 0.0)
    return jnp.transpose(y, (0, 4, 1, 2, 3))


if __name__ == "__main__":
    # Small shapes: batch=2, n_filters_in=4, n_filters_out=8, spatial 8 -> 16
    N, Cin, Cout, S = 2, 4, 8, 8
    key = jax.random.PRNGKey(0)
    kx, kw, kb = jax.random.split(key, 3)

    x = jax.random.normal(kx, (N, Cin, S, S, S), dtype=jnp.float32)        # NCDHW
    weight = jax.random.normal(kw, (Cout, Cin, 3, 3, 3), dtype=jnp.float32) * 0.05
    bias = jax.random.normal(kb, (Cout,), dtype=jnp.float32) * 0.05

    out = jax.block_until_ready(jax.jit(upsampling_forward)(x, weight, bias))
    ref = jax.block_until_ready(reference_forward(x, weight, bias))

    assert out.shape == (N, Cout, 2 * S, 2 * S, 2 * S), out.shape
    max_err = float(jnp.max(jnp.abs(out - ref)))
    assert jnp.allclose(out, ref, atol=2e-4, rtol=2e-4), max_err

    print("KERNEL_OK")
</pallas_src>

<mosaic_0001>
module attributes {stable_mosaic.version = 11 : i64} {
  func.func @kernel(%arg0: i32, %arg1: i32, %arg2: memref<1x64x32xf32, #tpu.memory_space<vmem>>, %arg3: memref<1x144x64xf32, #tpu.memory_space<vmem>>, %arg4: memref<864x144xf32, #tpu.memory_space<vmem>>, %arg5: memref<32x64xf32, #tpu.memory_space<vmem>>, %arg6: memref<9x64x128xf32, #tpu.memory_space<vmem>>, %arg7: memref<1x128xf32, #tpu.memory_space<vmem>>, %arg8: memref<1x256x128xf32, #tpu.memory_space<vmem>>) attributes {dimension_semantics = [#tpu.dimension_semantics<parallel>, #tpu.dimension_semantics<parallel>], iteration_bounds = array<i64: 2, 1>, scalar_prefetch = 0 : i64, scratch_operands = 0 : i64, tpu.core_type = #tpu.core_type<tc>, window_params = [{transform_indices = @transform_0, window_bounds = array<i64: 1, 64, 32>}, {transform_indices = @transform_1, window_bounds = array<i64: 1, 144, 64>}, {pipeline_mode = #tpu.pipeline_mode<synchronous>, transform_indices = @transform_2, window_bounds = array<i64: 864, 144>}, {pipeline_mode = #tpu.pipeline_mode<synchronous>, transform_indices = @transform_3, window_bounds = array<i64: 32, 64>}, {pipeline_mode = #tpu.pipeline_mode<synchronous>, transform_indices = @transform_4, window_bounds = array<i64: 9, 64, 128>}, {pipeline_mode = #tpu.pipeline_mode<synchronous>, transform_indices = @transform_5, window_bounds = array<i64: 1, 128>}, {transform_indices = @transform_6, window_bounds = array<i64: 1, 256, 128>}]} {
    %c0 = arith.constant 0 : index
    %c0_0 = arith.constant 0 : index
    %c0_1 = arith.constant 0 : index
    %0 = vector.load %arg2[%c0, %c0_0, %c0_1] : memref<1x64x32xf32, #tpu.memory_space<vmem>>, vector<1x64x32xf32>
    %1 = vector.shape_cast %0 : vector<1x64x32xf32> to vector<64x32xf32>
    %c0_2 = arith.constant 0 : index
    %c0_3 = arith.constant 0 : index
    %2 = vector.load %arg5[%c0_2, %c0_3] : memref<32x64xf32, #tpu.memory_space<vmem>>, vector<32x64xf32>
    %cst = arith.constant dense<0.000000e+00> : vector<64x64xf32>
    %3 = tpu.matmul %1, %2, %cst {dimension_numbers = #tpu.dot_dimension_numbers<[1], [0], [0], [1], [0, 0, 1, 1], [], []>} : vector<64x32xf32>, vector<32x64xf32>, vector<64x64xf32> -> vector<64x64xf32>
    %c0_4 = arith.constant 0 : index
    %c0_5 = arith.constant 0 : index
    %c0_6 = arith.constant 0 : index
    %4 = vector.load %arg3[%c0_4, %c0_5, %c0_6] : memref<1x144x64xf32, #tpu.memory_space<vmem>>, vector<1x144x64xf32>
    %5 = vector.shape_cast %4 : vector<1x144x64xf32> to vector<144x64xf32>
    %cst_7 = arith.constant dense<0.000000e+00> : vector<144x64xf32>
    %6 = tpu.matmul %5, %3, %cst_7 {dimension_numbers = #tpu.dot_dimension_numbers<[1], [0], [0], [1], [0, 0, 1, 1], [], []>} : vector<144x64xf32>, vector<64x64xf32>, vector<144x64xf32> -> vector<144x64xf32>
    %c0_8 = arith.constant 0 : index
    %c0_9 = arith.constant 0 : index
    %7 = vector.load %arg4[%c0_8, %c0_9] : memref<864x144xf32, #tpu.memory_space<vmem>>, vector<864x144xf32>
    %cst_10 = arith.constant dense<0.000000e+00> : vector<864x64xf32>
    %8 = tpu.matmul %7, %6, %cst_10 {dimension_numbers = #tpu.dot_dimension_numbers<[1], [0], [0], [1], [0, 0, 1, 1], [], []>} : vector<864x144xf32>, vector<144x64xf32>, vector<864x64xf32> -> vector<864x64xf32>
    %9 = vector.extract_strided_slice %8 {offsets = [0, 0], sizes = [256, 64], strides = [1, 1]} : vector<864x64xf32> to vector<256x64xf32>
    %c0_11 = arith.constant 0 : index
    %c0_12 = arith.constant 0 : index
    %c0_13 = arith.constant 0 : index
    %10 = vector.load %arg6[%c0_11, %c0_12, %c0_13] : memref<9x64x128xf32, #tpu.memory_space<vmem>>, vector<1x64x128xf32>
    %11 = vector.shape_cast %10 : vector<1x64x128xf32> to vector<64x128xf32>
    %cst_14 = arith.constant dense<0.000000e+00> : vector<256x128xf32>
    %12 = tpu.matmul %9, %11, %cst_14 {dimension_numbers = #tpu.dot_dimension_numbers<[1], [0], [0], [1], [0, 0, 1, 1], [], []>} : vector<256x64xf32>, vector<64x128xf32>, vector<256x128xf32> -> vector<256x128xf32>
    %13 = vector.extract_strided_slice %8 {offsets = [288, 0], sizes = [256, 64], strides = [1, 1]} : vector<864x64xf32> to vector<256x64xf32>
    %c1 = arith.constant 1 : index
    %c0_15 = arith.constant 0 : index
    %c0_16 = arith.constant 0 : index
    %14 = vector.load %arg6[%c1, %c0_15, %c0_16] : memref<9x64x128xf32, #tpu.memory_space<vmem>>, vector<1x64x128xf32>
    %15 = vector.shape_cast %14 : vector<1x64x128xf32> to vector<64x128xf32>
    %cst_17 = arith.constant dense<0.000000e+00> : vector<256x128xf32>
    %16 = tpu.matmul %13, %15, %cst_17 {dimension_numbers = #tpu.dot_dimension_numbers<[1], [0], [0], [1], [0, 0, 1, 1], [], []>} : vector<256x64xf32>, vector<64x128xf32>, vector<256x128xf32> -> vector<256x128xf32>
    %17 = arith.addf %12, %16 : vector<256x128xf32>
    %18 = vector.extract_strided_slice %8 {offsets = [576, 0], sizes = [256, 64], strides = [1, 1]} : vector<864x64xf32> to vector<256x64xf32>
    %c2 = arith.constant 2 : index
    %c0_18 = arith.constant 0 : index
    %c0_19 = arith.constant 0 : index
    %19 = vector.load %arg6[%c2, %c0_18, %c0_19] : memref<9x64x128xf32, #tpu.memory_space<vmem>>, vector<1x64x128xf32>
    %20 = vector.shape_cast %19 : vector<1x64x128xf32> to vector<64x128xf32>
    %cst_20 = arith.constant dense<0.000000e+00> : vector<256x128xf32>
    %21 = tpu.matmul %18, %20, %cst_20 {dimension_numbers = #tpu.dot_dimension_numbers<[1], [0], [0], [1], [0, 0, 1, 1], [], []>} : vector<256x64xf32>, vector<64x128xf32>, vector<256x128xf32> -> vector<256x128xf32>
    %22 = arith.addf %17, %21 : vector<256x128xf32>
    %23 = vector.extract_strided_slice %8 {offsets = [16, 0], sizes = [256, 64], strides = [1, 1]} : vector<864x64xf32> to vector<256x64xf32>
    %c3 = arith.constant 3 : index
    %c0_21 = arith.constant 0 : index
    %c0_22 = arith.constant 0 : index
    %24 = vector.load %arg6[%c3, %c0_21, %c0_22] : memref<9x64x128xf32, #tpu.memory_space<vmem>>, vector<1x64x128xf32>
    %25 = vector.shape_cast %24 : vector<1x64x128xf32> to vector<64x128xf32>
    %cst_23 = arith.constant dense<0.000000e+00> : vector<256x128xf32>
    %26 = tpu.matmul %23, %25, %cst_23 {dimension_numbers = #tpu.dot_dimension_numbers<[1], [0], [0], [1], [0, 0, 1, 1], [], []>} : vector<256x64xf32>, vector<64x128xf32>, vector<256x128xf32> -> vector<256x128xf32>
    %27 = arith.addf %22, %26 : vector<256x128xf32>
    %28 = vector.extract_strided_slice %8 {offsets = [304, 0], sizes = [256, 64], strides = [1, 1]} : vector<864x64xf32> to vector<256x64xf32>
    %c4 = arith.constant 4 : index
    %c0_24 = arith.constant 0 : index
    %c0_25 = arith.constant 0 : index
    %29 = vector.load %arg6[%c4, %c0_24, %c0_25] : memref<9x64x128xf32, #tpu.memory_space<vmem>>, vector<1x64x128xf32>
    %30 = vector.shape_cast %29 : vector<1x64x128xf32> to vector<64x128xf32>
    %cst_26 = arith.constant dense<0.000000e+00> : vector<256x128xf32>
    %31 = tpu.matmul %28, %30, %cst_26 {dimension_numbers = #tpu.dot_dimension_numbers<[1], [0], [0], [1], [0, 0, 1, 1], [], []>} : vector<256x64xf32>, vector<64x128xf32>, vector<256x128xf32> -> vector<256x128xf32>
    %32 = arith.addf %27, %31 : vector<256x128xf32>
    %33 = vector.extract_strided_slice %8 {offsets = [592, 0], sizes = [256, 64], strides = [1, 1]} : vector<864x64xf32> to vector<256x64xf32>
    %c5 = arith.constant 5 : index
    %c0_27 = arith.constant 0 : index
    %c0_28 = arith.constant 0 : index
    %34 = vector.load %arg6[%c5, %c0_27, %c0_28] : memref<9x64x128xf32, #tpu.memory_space<vmem>>, vector<1x64x128xf32>
    %35 = vector.shape_cast %34 : vector<1x64x128xf32> to vector<64x128xf32>
    %cst_29 = arith.constant dense<0.000000e+00> : vector<256x128xf32>
    %36 = tpu.matmul %33, %35, %cst_29 {dimension_numbers = #tpu.dot_dimension_numbers<[1], [0], [0], [1], [0, 0, 1, 1], [], []>} : vector<256x64xf32>, vector<64x128xf32>, vector<256x128xf32> -> vector<256x128xf32>
    %37 = arith.addf %32, %36 : vector<256x128xf32>
    %38 = vector.extract_strided_slice %8 {offsets = [32, 0], sizes = [256, 64], strides = [1, 1]} : vector<864x64xf32> to vector<256x64xf32>
    %c6 = arith.constant 6 : index
    %c0_30 = arith.constant 0 : index
    %c0_31 = arith.constant 0 : index
    %39 = vector.load %arg6[%c6, %c0_30, %c0_31] : memref<9x64x128xf32, #tpu.memory_space<vmem>>, vector<1x64x128xf32>
    %40 = vector.shape_cast %39 : vector<1x64x128xf32> to vector<64x128xf32>
    %cst_32 = arith.constant dense<0.000000e+00> : vector<256x128xf32>
    %41 = tpu.matmul %38, %40, %cst_32 {dimension_numbers = #tpu.dot_dimension_numbers<[1], [0], [0], [1], [0, 0, 1, 1], [], []>} : vector<256x64xf32>, vector<64x128xf32>, vector<256x128xf32> -> vector<256x128xf32>
    %42 = arith.addf %37, %41 : vector<256x128xf32>
    %43 = vector.extract_strided_slice %8 {offsets = [320, 0], sizes = [256, 64], strides = [1, 1]} : vector<864x64xf32> to vector<256x64xf32>
    %c7 = arith.constant 7 : index
    %c0_33 = arith.constant 0 : index
    %c0_34 = arith.constant 0 : index
    %44 = vector.load %arg6[%c7, %c0_33, %c0_34] : memref<9x64x128xf32, #tpu.memory_space<vmem>>, vector<1x64x128xf32>
    %45 = vector.shape_cast %44 : vector<1x64x128xf32> to vector<64x128xf32>
    %cst_35 = arith.constant dense<0.000000e+00> : vector<256x128xf32>
    %46 = tpu.matmul %43, %45, %cst_35 {dimension_numbers = #tpu.dot_dimension_numbers<[1], [0], [0], [1], [0, 0, 1, 1], [], []>} : vector<256x64xf32>, vector<64x128xf32>, vector<256x128xf32> -> vector<256x128xf32>
    %47 = arith.addf %42, %46 : vector<256x128xf32>
    %48 = vector.extract_strided_slice %8 {offsets = [608, 0], sizes = [256, 64], strides = [1, 1]} : vector<864x64xf32> to vector<256x64xf32>
    %c8 = arith.constant 8 : index
    %c0_36 = arith.constant 0 : index
    %c0_37 = arith.constant 0 : index
    %49 = vector.load %arg6[%c8, %c0_36, %c0_37] : memref<9x64x128xf32, #tpu.memory_space<vmem>>, vector<1x64x128xf32>
    %50 = vector.shape_cast %49 : vector<1x64x128xf32> to vector<64x128xf32>
    %cst_38 = arith.constant dense<0.000000e+00> : vector<256x128xf32>
    %51 = tpu.matmul %48, %50, %cst_38 {dimension_numbers = #tpu.dot_dimension_numbers<[1], [0], [0], [1], [0, 0, 1, 1], [], []>} : vector<256x64xf32>, vector<64x128xf32>, vector<256x128xf32> -> vector<256x128xf32>
    %52 = arith.addf %47, %51 : vector<256x128xf32>
    %c0_39 = arith.constant 0 : index
    %c0_40 = arith.constant 0 : index
    %53 = vector.load %arg7[%c0_39, %c0_40] : memref<1x128xf32, #tpu.memory_space<vmem>>, vector<1x128xf32>
    %54 = vector.broadcast %53 : vector<1x128xf32> to vector<256x128xf32>
    %55 = arith.addf %52, %54 : vector<256x128xf32>
    %cst_41 = arith.constant 0.000000e+00 : f32
    %56 = vector.broadcast %cst_41 : f32 to vector<256x128xf32>
    %57 = arith.maximumf %55, %56 : vector<256x128xf32>
    %c0_42 = arith.constant 0 : index
    %c0_43 = arith.constant 0 : index
    %c0_44 = arith.constant 0 : index
    %58 = vector.load %arg8[%c0_42, %c0_43, %c0_44] : memref<1x256x128xf32, #tpu.memory_space<vmem>>, vector<1x256x128xf32>
    %59 = vector.shape_cast %58 : vector<1x256x128xf32> to vector<256x128xf32>
    %60 = vector.shape_cast %57 : vector<256x128xf32> to vector<1x256x128xf32>
    tpu.vector_store %arg8[%c0_42, %c0_43, %c0_44], %60 {strides = array<i32>} : memref<1x256x128xf32, #tpu.memory_space<vmem>>, vector<1x256x128xf32>,
    return
  }
  func.func @transform_0(%arg0: i32, %arg1: i32) -> (i32, i32, i32) {
    %c0_i32 = arith.constant 0 : i32
    %c0_i32_0 = arith.constant 0 : i32
    %c0_i32_1 = arith.constant 0 : i32
    return %arg0, %c0_i32, %c0_i32_0 : i32, i32, i32
  }
  func.func @transform_1(%arg0: i32, %arg1: i32) -> (i32, i32, i32) {
    %c0_i32 = arith.constant 0 : i32
    %c0_i32_0 = arith.constant 0 : i32
    %c0_i32_1 = arith.constant 0 : i32
    return %arg1, %c0_i32, %c0_i32_0 : i32, i32, i32
  }
  func.func @transform_2(%arg0: i32, %arg1: i32) -> (i32, i32) {
    %c0_i32 = arith.constant 0 : i32
    %c0_i32_0 = arith.constant 0 : i32
    %c0_i32_1 = arith.constant 0 : i32
    return %c0_i32, %c0_i32_0 : i32, i32
  }
  func.func @transform_3(%arg0: i32, %arg1: i32) -> (i32, i32) {
    %c0_i32 = arith.constant 0 : i32
    %c0_i32_0 = arith.constant 0 : i32
    %c0_i32_1 = arith.constant 0 : i32
    return %c0_i32, %c0_i32_0 : i32, i32
  }
  func.func @transform_4(%arg0: i32, %arg1: i32) -> (i32, i32, i32) {
    %c0_i32 = arith.constant 0 : i32
    %c0_i32_0 = arith.constant 0 : i32
    %c0_i32_1 = arith.constant 0 : i32
    %c0_i32_2 = arith.constant 0 : i32
    return %c0_i32, %c0_i32_0, %c0_i32_1 : i32, i32, i32
  }
  func.func @transform_5(%arg0: i32, %arg1: i32) -> (i32, i32) {
    %c0_i32 = arith.constant 0 : i32
    %c0_i32_0 = arith.constant 0 : i32
    %c0_i32_1 = arith.constant 0 : i32
    return %c0_i32, %c0_i32_0 : i32, i32
  }
  func.func @transform_6(%arg0: i32, %arg1: i32) -> (i32, i32, i32) {
    %c0_i32 = arith.constant 0 : i32
    %c0_i32_0 = arith.constant 0 : i32
    return %arg0, %arg1, %c0_i32 : i32, i32, i32
  }
}

</mosaic_0001>

<llo_original>
// kernel: tile.9
$region0: #{tile.9}
  %s0 = inlined_call_operand.vmem [shape: f32[16,8], index: 0, kind: input, shape index: {}]
  %s1 = inlined_call_operand.vmem [shape: f32[1,128], index: 1, kind: output, shape index: {}]
  $region1: #{tile.9} parent=0
    #allocation0 [shape = 'u8[4096]{0}', space=vmem, size = 0x1000, scoped, tag = 'scoped mem for output reshape']
    %v2 = vld [vmem:[%s0] sm:$0x1]
    %vm3 = vcmask 64512
    %4 = vst.msk [vmem:[#allocation0] sm:$0x1] %vm3, %v2
    %s5 = scalar_lea.vmem %s0, 15
    %v6 = vld [vmem:[%s5] sm:$0x1]
    %7 = vrot.lane.b32.xlu0 %v6, 120
    %v8 = vpop.permute.xlu0 %7
    %vm9 = vcmask 1048512
    %10 = vst.msk [vmem:[#allocation0] sm:$0x1] %vm9, %v8
    %s11 = scalar_lea.vmem %s0, 14
    %v12 = vld [vmem:[%s11] sm:$0x1]
    %13 = vrot.lane.b32.xlu0 %v12, 112
    %v14 = vpop.permute.xlu0 %13
    %vm15 = vcmask 982912
    %16 = vst.msk [vmem:[#allocation0] sm:$0x1] %vm15, %v14
    %s17 = scalar_lea.vmem %s0, 13
    %v18 = vld [vmem:[%s17] sm:$0x1]
    %19 = vrot.lane.b32.xlu0 %v18, 104
    %v20 = vpop.permute.xlu0 %19
    %vm21 = vcmask 917312
    %22 = vst.msk [vmem:[#allocation0] sm:$0x1] %vm21, %v20
    %s23 = scalar_lea.vmem %s0, 12
    %v24 = vld [vmem:[%s23] sm:$0x1]
    %25 = vrot.lane.b32.xlu0 %v24, 96
    %v26 = vpop.permute.xlu0 %25
    %vm27 = vcmask 851712
    %28 = vst.msk [vmem:[#allocation0] sm:$0x1] %vm27, %v26
    %s29 = scalar_lea.vmem %s0, 11
    %v30 = vld [vmem:[%s29] sm:$0x1]
    %31 = vrot.lane.b32.xlu0 %v30, 88
    %v32 = vpop.permute.xlu0 %31
    %vm33 = vcmask 786112
    %34 = vst.msk [vmem:[#allocation0] sm:$0x1] %vm33, %v32
    %s35 = scalar_lea.vmem %s0, 10
    %v36 = vld [vmem:[%s35] sm:$0x1]
    %37 = vrot.lane.b32.xlu0 %v36, 80
    %v38 = vpop.permute.xlu0 %37
    %vm39 = vcmask 720512
    %40 = vst.msk [vmem:[#allocation0] sm:$0x1] %vm39, %v38
    %s41 = scalar_lea.vmem %s0, 9
    %v42 = vld [vmem:[%s41] sm:$0x1]
    %43 = vrot.lane.b32.xlu0 %v42, 72
    %v44 = vpop.permute.xlu0 %43
    %vm45 = vcmask 654912
    %46 = vst.msk [vmem:[#allocation0] sm:$0x1] %vm45, %v44
    %s47 = scalar_lea.vmem %s0, 8
    %v48 = vld [vmem:[%s47] sm:$0x1]
    %49 = vrot.lane.b32.xlu0 %v48, 64
    %v50 = vpop.permute.xlu0 %49
    %vm51 = vcmask 589312
    %52 = vst.msk [vmem:[#allocation0] sm:$0x1] %vm51, %v50
    %s53 = scalar_lea.vmem %s0, 7
    %v54 = vld [vmem:[%s53] sm:$0x1]
    %55 = vrot.lane.b32.xlu0 %v54, 56
    %v56 = vpop.permute.xlu0 %55
    %vm57 = vcmask 523712
    %58 = vst.msk [vmem:[#allocation0] sm:$0x1] %vm57, %v56
    %s59 = scalar_lea.vmem %s0, 6
    %v60 = vld [vmem:[%s59] sm:$0x1]
    %61 = vrot.lane.b32.xlu0 %v60, 48
    %v62 = vpop.permute.xlu0 %61
    %vm63 = vcmask 458112
    %64 = vst.msk [vmem:[#allocation0] sm:$0x1] %vm63, %v62
    %s65 = scalar_lea.vmem %s0, 5
    %v66 = vld [vmem:[%s65] sm:$0x1]
    %67 = vrot.lane.b32.xlu0 %v66, 40
    %v68 = vpop.permute.xlu0 %67
    %vm69 = vcmask 392512
    %70 = vst.msk [vmem:[#allocation0] sm:$0x1] %vm69, %v68
    %s71 = scalar_lea.vmem %s0, 4
    %v72 = vld [vmem:[%s71] sm:$0x1]
    %73 = vrot.lane.b32.xlu0 %v72, 32
    %v74 = vpop.permute.xlu0 %73
    %vm75 = vcmask 326912
    %76 = vst.msk [vmem:[#allocation0] sm:$0x1] %vm75, %v74
    %s77 = scalar_lea.vmem %s0, 3
    %v78 = vld [vmem:[%s77] sm:$0x1]
    %79 = vrot.lane.b32.xlu0 %v78, 24
    %v80 = vpop.permute.xlu0 %79
    %vm81 = vcmask 261312
    %82 = vst.msk [vmem:[#allocation0] sm:$0x1] %vm81, %v80
    %s83 = scalar_lea.vmem %s0, 2
    %v84 = vld [vmem:[%s83] sm:$0x1]
    %85 = vrot.lane.b32.xlu0 %v84, 16
    %v86 = vpop.permute.xlu0 %85
    %vm87 = vcmask 195712
    %88 = vst.msk [vmem:[#allocation0] sm:$0x1] %vm87, %v86
    %s89 = scalar_lea.vmem %s0, 1
    %v90 = vld [vmem:[%s89] sm:$0x1]
    %91 = vrot.lane.b32.xlu0 %v90, 8
    %v92 = vpop.permute.xlu0 %91
    %vm93 = vcmask 130112
    %94 = vst.msk [vmem:[#allocation0] sm:$0x1] %vm93, %v92
    %s96 = sshllo.u32 0, 1
    %v98 = vld [vmem:[#allocation0] sm:%s96]
    %s99 = sshllo.u32 0, 1
    %100 = vst [vmem:[%s1] sm:%s99] %v98

// kernel: tile.8
$region0: #{tile.8}
  #allocation2 [shape = 's32[1]{0}', space=sflag, size = 0x4, scoped, tag = 'scoped memory for tile.8']
  %s0 = inlined_call_operand.hbm [shape: f32[8], index: 0, kind: input, shape index: {}]
  %s1 = inlined_call_operand.vmem [shape: f32[16,8], index: 1, kind: output, shape index: {}]
  $region1: #{tile.8} parent=0
    #allocation0 [shape = 'u8[512]{0}', space=vmem, size = 0x400, scoped, tag = 'operand span for operand 0']
    #allocation1 [shape = 's32[1]{0}', space=sflag, size = 0x4, scoped, tag = 'scoped memory for tile.8']
    %2 = vsyncpa [#allocation1], 0
    // Predicated region
    $region2: #{tile.8} parent=1 // pred_check
      _
    $region3: #{tile.8} parent=1 // pred_check_branch
      %4 = sbr.rel (0) target = $region5
    $region4: #{tile.8} parent=1 // pred_region
      %s6 = ssub.s32 16, 16
      %7 = vsyncadd [#allocation1], %s6
      %s9 = sshll.u32 [#allocation0], 4
      %s10 = int_to_ptr.vmem [resolvable:$true] %s9
      %12 = dma.hbm_to_vmem [thread:$0]  %s0, 16, %s10, [#allocation1]
    $region5: #{tile.8} parent=1 // pred_fallthru
      _
    // Predicated region
    $region6: #{tile.8} parent=1 // pred_check
      _
    $region7: #{tile.8} parent=1 // pred_check_branch
      %14 = sbr.rel (0) target = $region9
    $region8: #{tile.8} parent=1 // pred_region
      %15 = dma.done [#allocation1], 16
    $region9: #{tile.8} parent=1 // pred_fallthru
      _
    %v16 = vld [vmem:[#allocation0] ss:$0 sm:$0xff]
    %17 = vst [vmem:[%s1] sm:$0xff] %v16
    %s18 = scalar_lea.vmem %s1, 8
    %19 = vst [vmem:[%s18] sm:$0xff] %v16
    %20 = vsyncpa [#allocation1], 1

// kernel: upsampling_forward.1
$region0: #{upsampling_forward.1}
  #allocation0 [shape = 'u32[]', space=smem, size = 0x4, offset = 0x4, fixed_abs, tag = 'smem constant byte address 0x4 - core index']
  #allocation1 [shape = 'u32[144,128]{1,0:T(1,128)}', space=vmem, size = 0x12000, scoped, tag = 'internal scratch']
  %s0 = inlined_call_operand.vmem [shape: f32[2,64,32], index: 0, kind: input, shape index: {}]
  %s1 = inlined_call_operand.vmem [shape: f32[1,144,64], index: 1, kind: input, shape index: {}]
  %s2 = inlined_call_operand.vmem [shape: f32[864,144], index: 2, kind: input, shape index: {}]
  %s3 = inlined_call_operand.vmem [shape: f32[32,64], index: 3, kind: input, shape index: {}]
  %s4 = inlined_call_operand.vmem [shape: f32[9,64,128], index: 4, kind: input, shape index: {}]
  %s5 = inlined_call_operand.vmem [shape: f32[1,128], index: 5, kind: input, shape index: {}]
  %s6 = inlined_call_operand.vmem [shape: f32[2,256,128], index: 6, kind: output, shape index: {}]
  %s7 = sld [smem:[#allocation0]]
  $region57: #{upsampling_forward.1} parent=0
    _
  %s9 = ssub.s32 1, %s7
  %s10 = scalar_select 0, %s9, %s7
  loop: start=0, step=1, limit=4
  $region2: #{upsampling_forward.1} parent=0 // loop_pre_header
    _
  $region3: #{upsampling_forward.1} parent=0 // loop_header
    %s12 = sphi 0, %s16
    %p13 = scmp.ge.s32.totalorder %s12, 4
    %s19 = sphi 0, %s31
    %s20 = sphi 0, %s27
    %s21 = sphi 0, %s19
    %s22 = sphi 0, %s20
    %s23 = sphi 0, %s21
    %s24 = sphi 0, %s22
    %s34 = sphi 0, %s36
    %s37 = sphi 0, %s34
    %s38 = sphi 0, %s37
    %s54 = sphi 0, %s38
    %s60 = sphi 0, %s62
    %s63 = sphi 0, %s60
    %s64 = sphi 0, %s63
    %s80 = sphi 0, %s64
    %s84 = sphi 0, %s84
    %s86 = sphi 0, %s84
    %s87 = sphi 0, %s86
    %s101 = sphi 0, %s87
    %s105 = sphi 0, %s105
    %s107 = sphi 0, %s105
    %s108 = sphi 0, %s107
    %s122 = sphi 0, %s108
    %s126 = sphi 0, %s126
    %s128 = sphi 0, %s126
    %s129 = sphi 0, %s128
    %s143 = sphi 0, %s129
    %s147 = sphi 0, %s147
    %s149 = sphi 0, %s147
    %s150 = sphi 0, %s149
    %s164 = sphi 0, %s150
    %s172 = sphi 0, %s174
    %s175 = sphi 0, %s172
    %s176 = sphi 0, %s175
    %s192 = sphi 0, %s176
  $region4: #{upsampling_forward.1} parent=0 // loop_header_branch
    %15 = sbr.rel (%p13) target = $region8
  $region5: #{upsampling_forward.1} parent=0 // loop_body
    %s17 = ssub.s32 %s12, 1
    %s18 = ssub.s32 %s12, 2
    %s25 = sadd.s32 1, %s20
    %p26 = scmp.ge.s32.totalorder %s25, 1
    %s27 = scalar_select %p26, 0, %s25
    %s28 = sadd.s32 1, %s19
    %s29 = scalar_select %p26, %s28, %s19
    %p30 = scmp.ge.s32.totalorder %s29, 2
    %s31 = scalar_select %p30, 0, %s29
    %s32 = ssub.s32 %s19, %s31
    %p33 = scmp.eq.s32.totalorder %s32, 0
    %s35 = sadd.s32 %s34, 1
    %s36 = scalar_select %p33, %s34, %s35
    %p39 = pneg %p33
    %p40 = scmp.eq.s32.totalorder %s12, 1
    %p41 = por %p39, %p40
    %p42 = scmp.ne.s32.totalorder %s34, %s37
    %p43 = scmp.eq.s32.totalorder %s12, 0
    %p44 = por %p42, %p43
    %p45 = scmp.ne.s32.totalorder %s34, %s37
    %p46 = scmp.eq.s32.totalorder %s17, 1
    %p47 = por %p45, %p46
    %p48 = scmp.ne.s32.totalorder %s37, %s38
    %p49 = scmp.eq.s32.totalorder %s17, 0
    %p50 = por %p48, %p49
    %p51 = scmp.ne.s32.totalorder %s37, %s38
    %p52 = scmp.eq.s32.totalorder %s18, 1
    %p53 = por %p51, %p52
    %p55 = scmp.ne.s32.totalorder %s38, %s54
    %p56 = scmp.eq.s32.totalorder %s18, 0
    %p57 = por %p55, %p56
    %s58 = ssub.s32 %s20, %s27
    %p59 = scmp.eq.s32.totalorder %s58, 0
    %s61 = sadd.s32 %s60, 1
    %s62 = scalar_select %p59, %s60, %s61
    %p65 = pneg %p59
    %p66 = scmp.eq.s32.totalorder %s12, 1
    %p67 = por %p65, %p66
    %p68 = scmp.ne.s32.totalorder %s60, %s63
    %p69 = scmp.eq.s32.totalorder %s12, 0
    %p70 = por %p68, %p69
    %p71 = scmp.ne.s32.totalorder %s60, %s63
    %p72 = scmp.eq.s32.totalorder %s17, 1
    %p73 = por %p71, %p72
    %p74 = scmp.ne.s32.totalorder %s63, %s64
    %p75 = scmp.eq.s32.totalorder %s17, 0
    %p76 = por %p74, %p75
    %p77 = scmp.ne.s32.totalorder %s63, %s64
    %p78 = scmp.eq.s32.totalorder %s18, 1
    %p79 = por %p77, %p78
    %p81 = scmp.ne.s32.totalorder %s64, %s80
    %p82 = scmp.eq.s32.totalorder %s18, 0
    %p83 = por %p81, %p82
    %s85 = sadd.s32 %s84, 1
    %p88 = scmp.eq.s32.totalorder %s12, 1
    %p89 = scmp.ne.s32.totalorder %s84, %s86
    %p90 = scmp.eq.s32.totalorder %s12, 0
    %p91 = por %p89, %p90
    %p92 = scmp.ne.s32.totalorder %s84, %s86
    %p93 = scmp.eq.s32.totalorder %s17, 1
    %p94 = por %p92, %p93
    %p95 = scmp.ne.s32.totalorder %s86, %s87
    %p96 = scmp.eq.s32.totalorder %s17, 0
    %p97 = por %p95, %p96
    %p98 = scmp.ne.s32.totalorder %s86, %s87
    %p99 = scmp.eq.s32.totalorder %s18, 1
    %p100 = por %p98, %p99
    %p102 = scmp.ne.s32.totalorder %s87, %s101
    %p103 = scmp.eq.s32.totalorder %s18, 0
    %p104 = por %p102, %p103
    %s106 = sadd.s32 %s105, 1
    %p109 = scmp.eq.s32.totalorder %s12, 1
    %p110 = scmp.ne.s32.totalorder %s105, %s107
    %p111 = scmp.eq.s32.totalorder %s12, 0
    %p112 = por %p110, %p111
    %p113 = scmp.ne.s32.totalorder %s105, %s107
    %p114 = scmp.eq.s32.totalorder %s17, 1
    %p115 = por %p113, %p114
    %p116 = scmp.ne.s32.totalorder %s107, %s108
    %p117 = scmp.eq.s32.totalorder %s17, 0
    %p118 = por %p116, %p117
    %p119 = scmp.ne.s32.totalorder %s107, %s108
    %p120 = scmp.eq.s32.totalorder %s18, 1
    %p121 = por %p119, %p120
    %p123 = scmp.ne.s32.totalorder %s108, %s122
    %p124 = scmp.eq.s32.totalorder %s18, 0
    %p125 = por %p123, %p124
    %s127 = sadd.s32 %s126, 1
    %p130 = scmp.eq.s32.totalorder %s12, 1
    %p131 = scmp.ne.s32.totalorder %s126, %s128
    %p132 = scmp.eq.s32.totalorder %s12, 0
    %p133 = por %p131, %p132
    %p134 = scmp.ne.s32.totalorder %s126, %s128
    %p135 = scmp.eq.s32.totalorder %s17, 1
    %p136 = por %p134, %p135
    %p137 = scmp.ne.s32.totalorder %s128, %s129
    %p138 = scmp.eq.s32.totalorder %s17, 0
    %p139 = por %p137, %p138
    %p140 = scmp.ne.s32.totalorder %s128, %s129
    %p141 = scmp.eq.s32.totalorder %s18, 1
    %p142 = por %p140, %p141
    %p144 = scmp.ne.s32.totalorder %s129, %s143
    %p145 = scmp.eq.s32.totalorder %s18, 0
    %p146 = por %p144, %p145
    %s148 = sadd.s32 %s147, 1
    %p151 = scmp.eq.s32.totalorder %s12, 1
    %p152 = scmp.ne.s32.totalorder %s147, %s149
    %p153 = scmp.eq.s32.totalorder %s12, 0
    %p154 = por %p152, %p153
    %p155 = scmp.ne.s32.totalorder %s147, %s149
    %p156 = scmp.eq.s32.totalorder %s17, 1
    %p157 = por %p155, %p156
    %p158 = scmp.ne.s32.totalorder %s149, %s150
    %p159 = scmp.eq.s32.totalorder %s17, 0
    %p160 = por %p158, %p159
    %p161 = scmp.ne.s32.totalorder %s149, %s150
    %p162 = scmp.eq.s32.totalorder %s18, 1
    %p163 = por %p161, %p162
    %p165 = scmp.ne.s32.totalorder %s150, %s164
    %p166 = scmp.eq.s32.totalorder %s18, 0
    %p167 = por %p165, %p166
    %s168 = ssub.s32 %s19, %s31
    %s169 = ssub.s32 %s20, %s27
    %s170 = sor.u32 %s168, %s169
    %p171 = scmp.eq.s32.totalorder %s170, 0
    %s173 = sadd.s32 %s172, 1
    %s174 = scalar_select %p171, %s172, %s173
    %p177 = pneg %p171
    %p178 = scmp.eq.s32.totalorder %s12, 1
    %p179 = por %p177, %p178
    %p180 = scmp.ne.s32.totalorder %s172, %s175
    %p181 = scmp.eq.s32.totalorder %s12, 0
    %p182 = por %p180, %p181
    %p183 = scmp.ne.s32.totalorder %s172, %s175
    %p184 = scmp.eq.s32.totalorder %s17, 1
    %p185 = por %p183, %p184
    %p186 = scmp.ne.s32.totalorder %s175, %s176
    %p187 = scmp.eq.s32.totalorder %s17, 0
    %p188 = por %p186, %p187
    %p189 = scmp.ne.s32.totalorder %s175, %s176
    %p190 = scmp.eq.s32.totalorder %s18, 1
    %p191 = por %p189, %p190
    %p193 = scmp.ne.s32.totalorder %s176, %s192
    %p194 = scmp.eq.s32.totalorder %s18, 0
    %p195 = por %p193, %p194
    %p196 = scmp.le.s32.totalorder 1, %s12
    %p197 = scmp.lt.s32.totalorder %s12, 3
    %p198 = pnand %p196, %p197
    %p199 = pneg %p198
    // Predicated region
    $region9: #{upsampling_forward.1} parent=5 // pred_check
      _
    $region10: #{upsampling_forward.1} parent=5 // pred_check_branch
      %201 = sbr.rel (%p198) target = $region12
    $region11: #{upsampling_forward.1} parent=5 // pred_region
      %s202 = ssub.s32 %s12, 1
      // Predicated region
      $region13: #{upsampling_forward.1} parent=11 // pred_check
        %p203 = pneg %p76
      $region14: #{upsampling_forward.1} parent=11 // pred_check_branch
        %205 = sbr.rel (%p203) target = $region16
      $region15: #{upsampling_forward.1} parent=11 // pred_region
        %p206 = scmp.lt.s32.totalorder %s22, 0
        %s207 = scalar_select %p206, %s22, 0
        %s208 = smul.addr %s207, 18
        %s209 = smul.addr %s208, 8
        %s210 = scalar_lea.vmem %s1, %s209
      $region16: #{upsampling_forward.1} parent=11 // pred_fallthru
        _
      // Predicated region
      $region17: #{upsampling_forward.1} parent=11 // pred_check
        %p211 = pneg %p97
      $region18: #{upsampling_forward.1} parent=11 // pred_check_branch
        %213 = sbr.rel (%p211) target = $region20
      $region19: #{upsampling_forward.1} parent=11 // pred_region
        _
      $region20: #{upsampling_forward.1} parent=11 // pred_fallthru
        _
      // Predicated region
      $region21: #{upsampling_forward.1} parent=11 // pred_check
        %p214 = pneg %p118
      $region22: #{upsampling_forward.1} parent=11 // pred_check_branch
        %216 = sbr.rel (%p214) target = $region24
      $region23: #{upsampling_forward.1} parent=11 // pred_region
        _
      $region24: #{upsampling_forward.1} parent=11 // pred_fallthru
        _
      // Predicated region
      $region25: #{upsampling_forward.1} parent=11 // pred_check
        %p217 = pneg %p139
      $region26: #{upsampling_forward.1} parent=11 // pred_check_branch
        %219 = sbr.rel (%p217) target = $region28
      $region27: #{upsampling_forward.1} parent=11 // pred_region
        _
      $region28: #{upsampling_forward.1} parent=11 // pred_fallthru
        _
      // Predicated region
      $region29: #{upsampling_forward.1} parent=11 // pred_check
        %p220 = pneg %p160
      $region30: #{upsampling_forward.1} parent=11 // pred_check_branch
        %222 = sbr.rel (%p220) target = $region32
      $region31: #{upsampling_forward.1} parent=11 // pred_region
        _
      $region32: #{upsampling_forward.1} parent=11 // pred_fallthru
        _
    $region12: #{upsampling_forward.1} parent=5 // pred_fallthru
      _
    %p223 = scmp.lt.s32.totalorder %s12, 2
    // Predicated region
    $region33: #{upsampling_forward.1} parent=5 // pred_check
      %p224 = pneg %p223
    $region34: #{upsampling_forward.1} parent=5 // pred_check_branch
      %226 = sbr.rel (%p224) target = $region36
    $region35: #{upsampling_forward.1} parent=5 // pred_region
      // Predicated region
      $region37: #{upsampling_forward.1} parent=35 // pred_check
        %p227 = pneg %p44
      $region38: #{upsampling_forward.1} parent=35 // pred_check_branch
        %229 = sbr.rel (%p227) target = $region40
      $region39: #{upsampling_forward.1} parent=35 // pred_region
        %p230 = scmp.lt.s32.totalorder %s19, 1
        %s231 = scalar_select %p230, %s19, 1
        %s232 = smul.addr %s231, 8
        %s233 = smul.addr %s232, 8
        %s234 = scalar_lea.vmem %s0, %s233
      $region40: #{upsampling_forward.1} parent=35 // pred_fallthru
        _
    $region36: #{upsampling_forward.1} parent=5 // pred_fallthru
      _
    %p235 = scmp.le.s32.totalorder 1, %s12
    %p236 = scmp.lt.s32.totalorder %s12, 3
    %p237 = pnand %p235, %p236
    %p238 = pneg %p237
    // Predicated region
    $region41: #{upsampling_forward.1} parent=5 // pred_check
      _
    $region42: #{upsampling_forward.1} parent=5 // pred_check_branch
      %240 = sbr.rel (%p237) target = $region44
    $region43: #{upsampling_forward.1} parent=5 // pred_region
      %s241 = ssub.s32 %s12, 1
      %p242 = scmp.lt.s32.totalorder %s21, 1
      %s243 = scalar_select %p242, %s21, 1
      %s244 = smul.addr %s243, 8
      %s245 = smul.addr %s244, 8
      %s246 = scalar_lea.vmem %s0, %s245
      %p247 = pneg %p50
      %p248 = pneg %p47
      %p249 = scmp.lt.s32.totalorder %s22, 0
      %s250 = scalar_select %p249, %s22, 0
      %s251 = smul.addr %s250, 18
      %s252 = smul.addr %s251, 8
      %s253 = scalar_lea.vmem %s1, %s252
      %p254 = pneg %p76
      %p255 = pneg %p73
      %p256 = pneg %p97
      %p257 = pneg %p94
      %p258 = pneg %p118
      %p259 = pneg %p115
      %p260 = pneg %p139
      %p261 = pneg %p136
      %p262 = pneg %p160
      %p263 = pneg %p157
      %p264 = pneg %p188
      %p265 = pneg %p185
      %s266 = smul.u32 32, %s22
      %p267 = scmp.lt.s32.totalorder %s21, 1
      %s268 = scalar_select %p267, %s21, 1
      %p269 = scmp.lt.s32.totalorder %s266, 31
      %s270 = scalar_select %p269, %s266, 31
      %s271 = smul.addr %s268, 32
      %s272 = sadd.s32 %s270, %s271
      %s273 = smul.addr %s272, 8
      %s274 = scalar_lea.vmem %s6, %s273
      %p275 = scmp.lt.s32.totalorder %s21, 1
      %s276 = scalar_select %p275, %s21, 1
      %s277 = smul.addr %s276, 8
      %s278 = smul.addr %s277, 8
      %s279 = scalar_lea.vmem %s0, %s278
      %p280 = scmp.lt.s32.totalorder %s22, 0
      %s281 = scalar_select %p280, %s22, 0
      %s282 = smul.addr %s281, 18
      %s283 = smul.addr %s282, 8
      %s284 = scalar_lea.vmem %s1, %s283
      %s285 = smul.u32 32, %s22
      %p286 = scmp.lt.s32.totalorder %s21, 1
      %s287 = scalar_select %p286, %s21, 1
      %p288 = scmp.lt.s32.totalorder %s285, 31
      %s289 = scalar_select %p288, %s285, 31
      %s290 = smul.addr %s287, 32
      %s291 = sadd.s32 %s289, %s290
      %s292 = smul.addr %s291, 8
      %s293 = scalar_lea.vmem %s6, %s292
      %s294 = smul.u32 32, %s22
      %v295 = vld [vmem:[%s279] sm:$0xff]
      %v296 = vld [vmem:[%s279 + $0x8] sm:$0xff]
      %v297 = vld [vmem:[%s279 + $0x10] sm:$0xff]
      %v298 = vld [vmem:[%s279 + $0x18] sm:$0xff]
      %v299 = vld [vmem:[%s279 + $0x20] sm:$0xff]
      %v300 = vld [vmem:[%s279 + $0x28] sm:$0xff]
      %v301 = vld [vmem:[%s279 + $0x30] sm:$0xff]
      %v302 = vld [vmem:[%s279 + $0x38] sm:$0xff]
      %v303 = vld [vmem:[%s3] sm:$0xff]
      %v304 = vld [vmem:[%s3 + $0x8] sm:$0xff]
      %v305 = vld [vmem:[%s3 + $0x10] sm:$0xff]
      %v306 = vld [vmem:[%s3 + $0x18] sm:$0xff]
      %vm307 = vcmask 261120
      %v309 = vsel %vm307, %v295, 0
      %v312 = vsel %vm307, %v296, 0
      %v315 = vsel %vm307, %v297, 0
      %v318 = vsel %vm307, %v298, 0
      %v321 = vsel %vm307, %v299, 0
      %v324 = vsel %vm307, %v300, 0
      %v327 = vsel %vm307, %v301, 0
      %v330 = vsel %vm307, %v302, 0
      %332 = vmatprep.subr.mxu0 0.0
      %333 = vmatpush1.msra.mxu0 %v303
      %334 = vmatprep.subr.mxu0 0.0
      %335 = vmatpush1.msra.mxu0 %v304
      %336 = vmatprep.subr.mxu0 0.0
      %337 = vmatpush1.msra.mxu0 %v305
      %338 = vmatprep.subr.mxu0 0.0
      %339 = vmatpush1.msra.mxu0 %v306
      %340 = vmatprep.subr.mxu0 0.0
      %341 = vmatpush1.msra.mxu0 0.0
      %342 = vmatprep.subr.mxu0 0.0
      %343 = vmatpush1.msra.mxu0 0.0
      %344 = vmatprep.subr.mxu0 0.0
      %345 = vmatpush1.msra.mxu0 0.0
      %346 = vmatprep.subr.mxu0 0.0
      %347 = vmatpush1.msra.mxu0 0.0
      %348 = vmatprep.subr.mxu0 0.0
      %349 = vmatpush1.msra.mxu0 0.0
      %350 = vmatprep.subr.mxu0 0.0
      %351 = vmatpush1.msra.mxu0 0.0
      %352 = vmatprep.subr.mxu0 0.0
      %353 = vmatpush1.msra.mxu0 0.0
      %354 = vmatprep.subr.mxu0 0.0
      %355 = vmatpush1.msra.mxu0 0.0
      %356 = vmatprep.subr.mxu0 0.0
      %357 = vmatpush1.msra.mxu0 0.0
      %358 = vmatprep.subr.mxu0 0.0
      %359 = vmatpush1.msra.mxu0 0.0
      %360 = vmatprep.subr.mxu0 0.0
      %361 = vmatpush1.msra.mxu0 0.0
      %362 = vmatprep.subr.mxu0 0.0
      %363 = vmatpush1.msra.mxu0 0.0
      %364 = vmatprep.subr.mxu0 0.0
      %365 = vmatpush1.msra.mxu0 0.0
      %366 = vmatprep.subr.mxu0 0.0
      %367 = vmatpush1.msra.mxu0 0.0
      %368 = vmatprep.subr.mxu0 0.0
      %369 = vmatpush1.msra.mxu0 0.0
      %370 = vmatprep.subr.mxu0 0.0
      %371 = vmatpush1.msra.mxu0 0.0
      %372 = vmatprep.subr.mxu0 0.0
      %373 = vmatpush1.msra.mxu0 0.0
      %374 = vmatprep.subr.mxu0 0.0
      %375 = vmatpush1.msra.mxu0 0.0
      %376 = vmatprep.subr.mxu0 0.0
      %377 = vmatpush1.msra.mxu0 0.0
      %378 = vmatprep.subr.mxu0 0.0
      %379 = vmatpush1.msra.mxu0 0.0
      %380 = vmatprep.subr.mxu0 0.0
      %381 = vmatpush1.msra.mxu0 0.0
      %382 = vmatprep.subr.mxu0 0.0
      %383 = vmatpush1.msra.mxu0 0.0
      %384 = vmatprep.subr.mxu0 0.0
      %385 = vmatpush1.msra.mxu0 0.0
      %386 = vmatprep.subr.mxu0 0.0
      %387 = vmatpush1.msra.mxu0 0.0
      %388 = vmatprep.subr.mxu0 0.0
      %389 = vmatpush1.msra.mxu0 0.0
      %390 = vmatprep.subr.mxu0 0.0
      %391 = vmatpush1.msra.mxu0 0.0
      %392 = vmatprep.subr.mxu0 0.0
      %393 = vmatpush1.msra.mxu0 0.0
      %394 = vmatprep.subr.mxu0 0.0
      %395 = vmatpush1.msra.mxu0 0.0
      %396 = vmatprep.mubr.f32.mxu0 0.0
      %397 = vmatmul.mubr.f32.gmra.mrb[0].mxu0 %v309
      %v398 = vpop.f32.mrb[0].mxu0
      %v399 = vadd.f32 0.0, %v398
      %v400 = vpop.f32.mrb[0].mxu0
      %401 = vmatprep.mubr.f32.mxu0 0.0
      %402 = vmatmul.mubr.f32.gmra.mrb[0].mxu0 %v312
      %v403 = vpop.f32.mrb[0].mxu0
      %v404 = vadd.f32 0.0, %v403
      %v405 = vpop.f32.mrb[0].mxu0
      %406 = vmatprep.mubr.f32.mxu0 0.0
      %407 = vmatmul.mubr.f32.gmra.mrb[0].mxu0 %v315
      %v408 = vpop.f32.mrb[0].mxu0
      %v409 = vadd.f32 0.0, %v408
      %v410 = vpop.f32.mrb[0].mxu0
      %411 = vmatprep.mubr.f32.mxu0 0.0
      %412 = vmatmul.mubr.f32.gmra.mrb[0].mxu0 %v318
      %v413 = vpop.f32.mrb[0].mxu0
      %v414 = vadd.f32 0.0, %v413
      %v415 = vpop.f32.mrb[0].mxu0
      %416 = vmatprep.mubr.f32.mxu0 0.0
      %417 = vmatmul.mubr.f32.gmra.mrb[0].mxu0 %v321
      %v418 = vpop.f32.mrb[0].mxu0
      %v419 = vadd.f32 0.0, %v418
      %v420 = vpop.f32.mrb[0].mxu0
      %421 = vmatprep.mubr.f32.mxu0 0.0
      %422 = vmatmul.mubr.f32.gmra.mrb[0].mxu0 %v324
      %v423 = vpop.f32.mrb[0].mxu0
      %v424 = vadd.f32 0.0, %v423
      %v425 = vpop.f32.mrb[0].mxu0
      %426 = vmatprep.mubr.f32.mxu0 0.0
      %427 = vmatmul.mubr.f32.gmra.mrb[0].mxu0 %v327
      %v428 = vpop.f32.mrb[0].mxu0
      %v429 = vadd.f32 0.0, %v428
      %v430 = vpop.f32.mrb[0].mxu0
      %431 = vmatprep.mubr.f32.mxu0 0.0
      %432 = vmatmul.mubr.f32.gmra.mrb[0].mxu0 %v330
      %v433 = vpop.f32.mrb[0].mxu0
      %v434 = vadd.f32 0.0, %v433
      %v435 = vpop.f32.mrb[0].mxu0
      %436 = vdwg.mxu0
      %v437 = vld [vmem:[%s284] sm:$0xff]
      %v438 = vld [vmem:[%s284 + $0x8] sm:$0xff]
      %v439 = vld [vmem:[%s284 + $0x10] sm:$0xff]
      %v440 = vld [vmem:[%s284 + $0x18] sm:$0xff]
      %v441 = vld [vmem:[%s284 + $0x20] sm:$0xff]
      %v442 = vld [vmem:[%s284 + $0x28] sm:$0xff]
      %v443 = vld [vmem:[%s284 + $0x30] sm:$0xff]
      %v444 = vld [vmem:[%s284 + $0x38] sm:$0xff]
      %v445 = vld [vmem:[%s284 + $0x40] sm:$0xff]
      %v446 = vld [vmem:[%s284 + $0x48] sm:$0xff]
      %v447 = vld [vmem:[%s284 + $0x50] sm:$0xff]
      %v448 = vld [vmem:[%s284 + $0x58] sm:$0xff]
      %v449 = vld [vmem:[%s284 + $0x60] sm:$0xff]
      %v450 = vld [vmem:[%s284 + $0x68] sm:$0xff]
      %v451 = vld [vmem:[%s284 + $0x70] sm:$0xff]
      %v452 = vld [vmem:[%s284 + $0x78] sm:$0xff]
      %v453 = vld [vmem:[%s284 + $0x80] sm:$0xff]
      %v454 = vld [vmem:[%s284 + $0x88] sm:$0xff]
      %vm455 = vcmask 523264
      %v457 = vsel %vm455, %v437, 0
      %v460 = vsel %vm455, %v438, 0
      %v463 = vsel %vm455, %v439, 0
      %v466 = vsel %vm455, %v440, 0
      %v469 = vsel %vm455, %v441, 0
      %v472 = vsel %vm455, %v442, 0
      %v475 = vsel %vm455, %v443, 0
      %v478 = vsel %vm455, %v444, 0
      %v481 = vsel %vm455, %v445, 0
      %v484 = vsel %vm455, %v446, 0
      %v487 = vsel %vm455, %v447, 0
      %v490 = vsel %vm455, %v448, 0
      %v493 = vsel %vm455, %v449, 0
      %v496 = vsel %vm455, %v450, 0
      %v499 = vsel %vm455, %v451, 0
      %v502 = vsel %vm455, %v452, 0
      %v505 = vsel %vm455, %v453, 0
      %v508 = vsel %vm455, %v454, 0
      %510 = vmatprep.subr.mxu0 0.0
      %511 = vmatpush1.msra.mxu0 %v399
      %512 = vmatprep.subr.mxu0 0.0
      %513 = vmatpush1.msra.mxu0 %v404
      %514 = vmatprep.subr.mxu0 0.0
      %515 = vmatpush1.msra.mxu0 %v409
      %516 = vmatprep.subr.mxu0 0.0
      %517 = vmatpush1.msra.mxu0 %v414
      %518 = vmatprep.subr.mxu0 0.0
      %519 = vmatpush1.msra.mxu0 %v419
      %520 = vmatprep.subr.mxu0 0.0
      %521 = vmatpush1.msra.mxu0 %v424
      %522 = vmatprep.subr.mxu0 0.0
      %523 = vmatpush1.msra.mxu0 %v429
      %524 = vmatprep.subr.mxu0 0.0
      %525 = vmatpush1.msra.mxu0 %v434
      %526 = vmatprep.subr.mxu0 0.0
      %527 = vmatpush1.msra.mxu0 0.0
      %528 = vmatprep.subr.mxu0 0.0
      %529 = vmatpush1.msra.mxu0 0.0
      %530 = vmatprep.subr.mxu0 0.0
      %531 = vmatpush1.msra.mxu0 0.0
      %532 = vmatprep.subr.mxu0 0.0
      %533 = vmatpush1.msra.mxu0 0.0
      %534 = vmatprep.subr.mxu0 0.0
      %535 = vmatpush1.msra.mxu0 0.0
      %536 = vmatprep.subr.mxu0 0.0
      %537 = vmatpush1.msra.mxu0 0.0
      %538 = vmatprep.subr.mxu0 0.0
      %539 = vmatpush1.msra.mxu0 0.0
      %540 = vmatprep.subr.mxu0 0.0
      %541 = vmatpush1.msra.mxu0 0.0
      %542 = vmatprep.subr.mxu0 0.0
      %543 = vmatpush1.msra.mxu0 0.0
      %544 = vmatprep.subr.mxu0 0.0
      %545 = vmatpush1.msra.mxu0 0.0
      %546 = vmatprep.subr.mxu0 0.0
      %547 = vmatpush1.msra.mxu0 0.0
      %548 = vmatprep.subr.mxu0 0.0
      %549 = vmatpush1.msra.mxu0 0.0
      %550 = vmatprep.subr.mxu0 0.0
      %551 = vmatpush1.msra.mxu0 0.0
      %552 = vmatprep.subr.mxu0 0.0
      %553 = vmatpush1.msra.mxu0 0.0
      %554 = vmatprep.subr.mxu0 0.0
      %555 = vmatpush1.msra.mxu0 0.0
      %556 = vmatprep.subr.mxu0 0.0
      %557 = vmatpush1.msra.mxu0 0.0
      %558 = vmatprep.subr.mxu0 0.0
      %559 = vmatpush1.msra.mxu0 0.0
      %560 = vmatprep.subr.mxu0 0.0
      %561 = vmatpush1.msra.mxu0 0.0
      %562 = vmatprep.subr.mxu0 0.0
      %563 = vmatpush1.msra.mxu0 0.0
      %564 = vmatprep.subr.mxu0 0.0
      %565 = vmatpush1.msra.mxu0 0.0
      %566 = vmatprep.subr.mxu0 0.0
      %567 = vmatpush1.msra.mxu0 0.0
      %568 = vmatprep.subr.mxu0 0.0
      %569 = vmatpush1.msra.mxu0 0.0
      %570 = vmatprep.subr.mxu0 0.0
      %571 = vmatpush1.msra.mxu0 0.0
      %572 = vmatprep.subr.mxu0 0.0
      %573 = vmatpush1.msra.mxu0 0.0
      %574 = vmatprep.mubr.f32.mxu0 0.0
      %575 = vmatmul.mubr.f32.gmra.mrb[0].mxu0 %v457
      %v576 = vpop.f32.mrb[0].mxu0
      %v577 = vadd.f32 0.0, %v576
      %v578 = vpop.f32.mrb[0].mxu0
      %579 = vmatprep.mubr.f32.mxu0 0.0
      %580 = vmatmul.mubr.f32.gmra.mrb[0].mxu0 %v460
      %v581 = vpop.f32.mrb[0].mxu0
      %v582 = vadd.f32 0.0, %v581
      %v583 = vpop.f32.mrb[0].mxu0
      %584 = vmatprep.mubr.f32.mxu0 0.0
      %585 = vmatmul.mubr.f32.gmra.mrb[0].mxu0 %v463
      %v586 = vpop.f32.mrb[0].mxu0
      %v587 = vadd.f32 0.0, %v586
      %v588 = vpop.f32.mrb[0].mxu0
      %589 = vmatprep.mubr.f32.mxu0 0.0
      %590 = vmatmul.mubr.f32.gmra.mrb[0].mxu0 %v466
      %v591 = vpop.f32.mrb[0].mxu0
      %v592 = vadd.f32 0.0, %v591
      %v593 = vpop.f32.mrb[0].mxu0
      %594 = vmatprep.mubr.f32.mxu0 0.0
      %595 = vmatmul.mubr.f32.gmra.mrb[0].mxu0 %v469
      %v596 = vpop.f32.mrb[0].mxu0
      %v597 = vadd.f32 0.0, %v596
      %v598 = vpop.f32.mrb[0].mxu0
      %599 = vmatprep.mubr.f32.mxu0 0.0
      %600 = vmatmul.mubr.f32.gmra.mrb[0].mxu0 %v472
      %v601 = vpop.f32.mrb[0].mxu0
      %v602 = vadd.f32 0.0, %v601
      %v603 = vpop.f32.mrb[0].mxu0
      %604 = vmatprep.mubr.f32.mxu0 0.0
      %605 = vmatmul.mubr.f32.gmra.mrb[0].mxu0 %v475
      %v606 = vpop.f32.mrb[0].mxu0
      %v607 = vadd.f32 0.0, %v606
      %v608 = vpop.f32.mrb[0].mxu0
      %609 = vmatprep.mubr.f32.mxu0 0.0
      %610 = vmatmul.mubr.f32.gmra.mrb[0].mxu0 %v478
      %v611 = vpop.f32.mrb[0].mxu0
      %v612 = vadd.f32 0.0, %v611
      %v613 = vpop.f32.mrb[0].mxu0
      %614 = vmatprep.mubr.f32.mxu0 0.0
      %615 = vmatmul.mubr.f32.gmra.mrb[0].mxu0 %v481
      %v616 = vpop.f32.mrb[0].mxu0
      %v617 = vadd.f32 0.0, %v616
      %v618 = vpop.f32.mrb[0].mxu0
      %619 = vmatprep.mubr.f32.mxu0 0.0
      %620 = vmatmul.mubr.f32.gmra.mrb[0].mxu0 %v484
      %v621 = vpop.f32.mrb[0].mxu0
      %v622 = vadd.f32 0.0, %v621
      %v623 = vpop.f32.mrb[0].mxu0
      %624 = vmatprep.mubr.f32.mxu0 0.0
      %625 = vmatmul.mubr.f32.gmra.mrb[0].mxu0 %v487
      %v626 = vpop.f32.mrb[0].mxu0
      %v627 = vadd.f32 0.0, %v626
      %v628 = vpop.f32.mrb[0].mxu0
      %629 = vmatprep.mubr.f32.mxu0 0.0
      %630 = vmatmul.mubr.f32.gmra.mrb[0].mxu0 %v490
      %v631 = vpop.f32.mrb[0].mxu0
      %v632 = vadd.f32 0.0, %v631
      %v633 = vpop.f32.mrb[0].mxu0
      %634 = vmatprep.mubr.f32.mxu0 0.0
      %635 = vmatmul.mubr.f32.gmra.mrb[0].mxu0 %v493
      %v636 = vpop.f32.mrb[0].mxu0
      %v637 = vadd.f32 0.0, %v636
      %v638 = vpop.f32.mrb[0].mxu0
      %639 = vmatprep.mubr.f32.mxu0 0.0
      %640 = vmatmul.mubr.f32.gmra.mrb[0].mxu0 %v496
      %v641 = vpop.f32.mrb[0].mxu0
      %v642 = vadd.f32 0.0, %v641
      %v643 = vpop.f32.mrb[0].mxu0
      %644 = vmatprep.mubr.f32.mxu0 0.0
      %645 = vmatmul.mubr.f32.gmra.mrb[0].mxu0 %v499
      %v646 = vpop.f32.mrb[0].mxu0
      %v647 = vadd.f32 0.0, %v646
      %v648 = vpop.f32.mrb[0].mxu0
      %649 = vmatprep.mubr.f32.mxu0 0.0
      %650 = vmatmul.mubr.f32.gmra.mrb[0].mxu0 %v502
      %v651 = vpop.f32.mrb[0].mxu0
      %v652 = vadd.f32 0.0, %v651
      %v653 = vpop.f32.mrb[0].mxu0
      %654 = vmatprep.mubr.f32.mxu0 0.0
      %655 = vmatmul.mubr.f32.gmra.mrb[0].mxu0 %v505
      %v656 = vpop.f32.mrb[0].mxu0
      %v657 = vadd.f32 0.0, %v656
      %v658 = vpop.f32.mrb[0].mxu0
      %659 = vmatprep.mubr.f32.mxu0 0.0
      %660 = vmatmul.mubr.f32.gmra.mrb[0].mxu0 %v508
      %v661 = vpop.f32.mrb[0].mxu0
      %v662 = vadd.f32 0.0, %v661
      %v663 = vpop.f32.mrb[0].mxu0
      %664 = vdwg.mxu0
      %v665 = vld [vmem:[%s2] sm:$0xff]
      %v666 = vld [vmem:[%s2 + $0x8] sm:$0xff]
      %v667 = vld [vmem:[%s2 + $0x10] sm:$0xff]
      %v668 = vld [vmem:[%s2 + $0x18] sm:$0xff]
      %v669 = vld [vmem:[%s2 + $0x20] sm:$0xff]
      %v670 = vld [vmem:[%s2 + $0x28] sm:$0xff]
      %v671 = vld [vmem:[%s2 + $0x30] sm:$0xff]
      %v672 = vld [vmem:[%s2 + $0x38] sm:$0xff]
      %v673 = vld [vmem:[%s2 + $0x40] sm:$0xff]
      %v674 = vld [vmem:[%s2 + $0x48] sm:$0xff]
      %v675 = vld [vmem:[%s2 + $0x50] sm:$0xff]
      %v676 = vld [vmem:[%s2 + $0x58] sm:$0xff]
      %v677 = vld [vmem:[%s2 + $0x60] sm:$0xff]
      %v678 = vld [vmem:[%s2 + $0x68] sm:$0xff]
      %v679 = vld [vmem:[%s2 + $0x70] sm:$0xff]
      %v680 = vld [vmem:[%s2 + $0x78] sm:$0xff]
      %v681 = vld [vmem:[%s2 + $0x80] sm:$0xff]
      %v682 = vld [vmem:[%s2 + $0x88] sm:$0xff]
      %v683 = vld [vmem:[%s2 + $0x90] sm:$0xff]
      %v684 = vld [vmem:[%s2 + $0x98] sm:$0xff]
      %v685 = vld [vmem:[%s2 + $0xa0] sm:$0xff]
      %v686 = vld [vmem:[%s2 + $0xa8] sm:$0xff]
      %v687 = vld [vmem:[%s2 + $0xb0] sm:$0xff]
      %v688 = vld [vmem:[%s2 + $0xb8] sm:$0xff]
      %v689 = vld [vmem:[%s2 + $0xc0] sm:$0xff]
      %v690 = vld [vmem:[%s2 + $0xc8] sm:$0xff]
      %v691 = vld [vmem:[%s2 + $0xd0] sm:$0xff]
      %v692 = vld [vmem:[%s2 + $0xd8] sm:$0xff]
      %v693 = vld [vmem:[%s2 + $0xe0] sm:$0xff]
      %v694 = vld [vmem:[%s2 + $0xe8] sm:$0xff]
      %v695 = vld [vmem:[%s2 + $0xf0] sm:$0xff]
      %v696 = vld [vmem:[%s2 + $0xf8] sm:$0xff]
      %v697 = vld [vmem:[%s2 + $0x100] sm:$0xff]
      %v698 = vld [vmem:[%s2 + $0x108] sm:$0xff]
      %v699 = vld [vmem:[%s2 + $0x110] sm:$0xff]
      %v700 = vld [vmem:[%s2 + $0x118] sm:$0xff]
      %v701 = vld [vmem:[%s2 + $0x120] sm:$0xff]
      %v702 = vld [vmem:[%s2 + $0x128] sm:$0xff]
      %v703 = vld [vmem:[%s2 + $0x130] sm:$0xff]
      %v704 = vld [vmem:[%s2 + $0x138] sm:$0xff]
      %v705 = vld [vmem:[%s2 + $0x140] sm:$0xff]
      %v706 = vld [vmem:[%s2 + $0x148] sm:$0xff]
      %v707 = vld [vmem:[%s2 + $0x150] sm:$0xff]
      %v708 = vld [vmem:[%s2 + $0x158] sm:$0xff]
      %v709 = vld [vmem:[%s2 + $0x160] sm:$0xff]
      %v710 = vld [vmem:[%s2 + $0x168] sm:$0xff]
      %v711 = vld [vmem:[%s2 + $0x170] sm:$0xff]
      %v712 = vld [vmem:[%s2 + $0x178] sm:$0xff]
      %v713 = vld [vmem:[%s2 + $0x180] sm:$0xff]
      %v714 = vld [vmem:[%s2 + $0x188] sm:$0xff]
      %v715 = vld [vmem:[%s2 + $0x190] sm:$0xff]
      %v716 = vld [vmem:[%s2 + $0x198] sm:$0xff]
      %v717 = vld [vmem:[%s2 + $0x1a0] sm:$0xff]
      %v718 = vld [vmem:[%s2 + $0x1a8] sm:$0xff]
      %v719 = vld [vmem:[%s2 + $0x1b0] sm:$0xff]
      %v720 = vld [vmem:[%s2 + $0x1b8] sm:$0xff]
      %v721 = vld [vmem:[%s2 + $0x1c0] sm:$0xff]
      %v722 = vld [vmem:[%s2 + $0x1c8] sm:$0xff]
      %v723 = vld [vmem:[%s2 + $0x1d0] sm:$0xff]
      %v724 = vld [vmem:[%s2 + $0x1d8] sm:$0xff]
      %v725 = vld [vmem:[%s2 + $0x1e0] sm:$0xff]
      %v726 = vld [vmem:[%s2 + $0x1e8] sm:$0xff]
      %v727 = vld [vmem:[%s2 + $0x1f0] sm:$0xff]
      %v728 = vld [vmem:[%s2 + $0x1f8] sm:$0xff]
      %v729 = vld [vmem:[%s2 + $0x200] sm:$0xff]
      %v730 = vld [vmem:[%s2 + $0x208] sm:$0xff]
      %v731 = vld [vmem:[%s2 + $0x210] sm:$0xff]
      %v732 = vld [vmem:[%s2 + $0x218] sm:$0xff]
      %v733 = vld [vmem:[%s2 + $0x220] sm:$0xff]
      %v734 = vld [vmem:[%s2 + $0x228] sm:$0xff]
      %v735 = vld [vmem:[%s2 + $0x230] sm:$0xff]
      %v736 = vld [vmem:[%s2 + $0x238] sm:$0xff]
      %v737 = vld [vmem:[%s2 + $0x240] sm:$0xff]
      %v738 = vld [vmem:[%s2 + $0x248] sm:$0xff]
      %v739 = vld [vmem:[%s2 + $0x250] sm:$0xff]
      %v740 = vld [vmem:[%s2 + $0x258] sm:$0xff]
      %v741 = vld [vmem:[%s2 + $0x260] sm:$0xff]
      %v742 = vld [vmem:[%s2 + $0x268] sm:$0xff]
      %v743 = vld [vmem:[%s2 + $0x270] sm:$0xff]
      %v744 = vld [vmem:[%s2 + $0x278] sm:$0xff]
      %v745 = vld [vmem:[%s2 + $0x280] sm:$0xff]
      %v746 = vld [vmem:[%s2 + $0x288] sm:$0xff]
      %v747 = vld [vmem:[%s2 + $0x290] sm:$0xff]
      %v748 = vld [vmem:[%s2 + $0x298] sm:$0xff]
      %v749 = vld [vmem:[%s2 + $0x2a0] sm:$0xff]
      %v750 = vld [vmem:[%s2 + $0x2a8] sm:$0xff]
      %v751 = vld [vmem:[%s2 + $0x2b0] sm:$0xff]
      %v752 = vld [vmem:[%s2 + $0x2b8] sm:$0xff]
      %v753 = vld [vmem:[%s2 + $0x2c0] sm:$0xff]
      %v754 = vld [vmem:[%s2 + $0x2c8] sm:$0xff]
      %v755 = vld [vmem:[%s2 + $0x2d0] sm:$0xff]
      %v756 = vld [vmem:[%s2 + $0x2d8] sm:$0xff]
      %v757 = vld [vmem:[%s2 + $0x2e0] sm:$0xff]
      %v758 = vld [vmem:[%s2 + $0x2e8] sm:$0xff]
      %v759 = vld [vmem:[%s2 + $0x2f0] sm:$0xff]
      %v760 = vld [vmem:[%s2 + $0x2f8] sm:$0xff]
      %v761 = vld [vmem:[%s2 + $0x300] sm:$0xff]
      %v762 = vld [vmem:[%s2 + $0x308] sm:$0xff]
      %v763 = vld [vmem:[%s2 + $0x310] sm:$0xff]
      %v764 = vld [vmem:[%s2 + $0x318] sm:$0xff]
      %v765 = vld [vmem:[%s2 + $0x320] sm:$0xff]
      %v766 = vld [vmem:[%s2 + $0x328] sm:$0xff]
      %v767 = vld [vmem:[%s2 + $0x330] sm:$0xff]
      %v768 = vld [vmem:[%s2 + $0x338] sm:$0xff]
      %v769 = vld [vmem:[%s2 + $0x340] sm:$0xff]
      %v770 = vld [vmem:[%s2 + $0x348] sm:$0xff]
      %v771 = vld [vmem:[%s2 + $0x350] sm:$0xff]
      %v772 = vld [vmem:[%s2 + $0x358] sm:$0xff]
      %v773 = vld [vmem:[%s2 + $0x360] sm:$0xff]
      %v774 = vld [vmem:[%s2 + $0x368] sm:$0xff]
      %v775 = vld [vmem:[%s2 + $0x370] sm:$0xff]
      %v776 = vld [vmem:[%s2 + $0x378] sm:$0xff]
      %v777 = vld [vmem:[%s2 + $0x380] sm:$0xff]
      %v778 = vld [vmem:[%s2 + $0x388] sm:$0xff]
      %v779 = vld [vmem:[%s2 + $0x390] sm:$0xff]
      %v780 = vld [vmem:[%s2 + $0x398] sm:$0xff]
      %v781 = vld [vmem:[%s2 + $0x3a0] sm:$0xff]
      %v782 = vld [vmem:[%s2 + $0x3a8] sm:$0xff]
      %v783 = vld [vmem:[%s2 + $0x3b0] sm:$0xff]
      %v784 = vld [vmem:[%s2 + $0x3b8] sm:$0xff]
      %v785 = vld [vmem:[%s2 + $0x3c0] sm:$0xff]
      %v786 = vld [vmem:[%s2 + $0x3c8] sm:$0xff]
      %v787 = vld [vmem:[%s2 + $0x3d0] sm:$0xff]
      %v788 = vld [vmem:[%s2 + $0x3d8] sm:$0xff]
      %v789 = vld [vmem:[%s2 + $0x3e0] sm:$0xff]
      %v790 = vld [vmem:[%s2 + $0x3e8] sm:$0xff]
      %v791 = vld [vmem:[%s2 + $0x3f0] sm:$0xff]
      %v792 = vld [vmem:[%s2 + $0x3f8] sm:$0xff]
      %v793 = vld [vmem:[%s2 + $0x400] sm:$0xff]
      %v794 = vld [vmem:[%s2 + $0x408] sm:$0xff]
      %v795 = vld [vmem:[%s2 + $0x410] sm:$0xff]
      %v796 = vld [vmem:[%s2 + $0x418] sm:$0xff]
      %v797 = vld [vmem:[%s2 + $0x420] sm:$0xff]
      %v798 = vld [vmem:[%s2 + $0x428] sm:$0xff]
      %v799 = vld [vmem:[%s2 + $0x430] sm:$0xff]
      %v800 = vld [vmem:[%s2 + $0x438] sm:$0xff]
      %v801 = vld [vmem:[%s2 + $0x440] sm:$0xff]
      %v802 = vld [vmem:[%s2 + $0x448] sm:$0xff]
      %v803 = vld [vmem:[%s2 + $0x450] sm:$0xff]
      %v804 = vld [vmem:[%s2 + $0x458] sm:$0xff]
      %v805 = vld [vmem:[%s2 + $0x460] sm:$0xff]
      %v806 = vld [vmem:[%s2 + $0x468] sm:$0xff]
      %v807 = vld [vmem:[%s2 + $0x470] sm:$0xff]
      %v808 = vld [vmem:[%s2 + $0x478] sm:$0xff]
      %v809 = vld [vmem:[%s2 + $0x480] sm:$0xff]
      %v810 = vld [vmem:[%s2 + $0x488] sm:$0xff]
      %v811 = vld [vmem:[%s2 + $0x490] sm:$0xff]
      %v812 = vld [vmem:[%s2 + $0x498] sm:$0xff]
      %v813 = vld [vmem:[%s2 + $0x4a0] sm:$0xff]
      %v814 = vld [vmem:[%s2 + $0x4a8] sm:$0xff]
      %v815 = vld [vmem:[%s2 + $0x4b0] sm:$0xff]
      %v816 = vld [vmem:[%s2 + $0x4b8] sm:$0xff]
      %v817 = vld [vmem:[%s2 + $0x4c0] sm:$0xff]
      %v818 = vld [vmem:[%s2 + $0x4c8] sm:$0xff]
      %v819 = vld [vmem:[%s2 + $0x4d0] sm:$0xff]
      %v820 = vld [vmem:[%s2 + $0x4d8] sm:$0xff]
      %v821 = vld [vmem:[%s2 + $0x4e0] sm:$0xff]
      %v822 = vld [vmem:[%s2 + $0x4e8] sm:$0xff]
      %v823 = vld [vmem:[%s2 + $0x4f0] sm:$0xff]
      %v824 = vld [vmem:[%s2 + $0x4f8] sm:$0xff]
      %v825 = vld [vmem:[%s2 + $0x500] sm:$0xff]
      %v826 = vld [vmem:[%s2 + $0x508] sm:$0xff]
      %v827 = vld [vmem:[%s2 + $0x510] sm:$0xff]
      %v828 = vld [vmem:[%s2 + $0x518] sm:$0xff]
      %v829 = vld [vmem:[%s2 + $0x520] sm:$0xff]
      %v830 = vld [vmem:[%s2 + $0x528] sm:$0xff]
      %v831 = vld [vmem:[%s2 + $0x530] sm:$0xff]
      %v832 = vld [vmem:[%s2 + $0x538] sm:$0xff]
      %v833 = vld [vmem:[%s2 + $0x540] sm:$0xff]
      %v834 = vld [vmem:[%s2 + $0x548] sm:$0xff]
      %v835 = vld [vmem:[%s2 + $0x550] sm:$0xff]
      %v836 = vld [vmem:[%s2 + $0x558] sm:$0xff]
      %v837 = vld [vmem:[%s2 + $0x560] sm:$0xff]
      %v838 = vld [vmem:[%s2 + $0x568] sm:$0xff]
      %v839 = vld [vmem:[%s2 + $0x570] sm:$0xff]
      %v840 = vld [vmem:[%s2 + $0x578] sm:$0xff]
      %v841 = vld [vmem:[%s2 + $0x580] sm:$0xff]
      %v842 = vld [vmem:[%s2 + $0x588] sm:$0xff]
      %v843 = vld [vmem:[%s2 + $0x590] sm:$0xff]
      %v844 = vld [vmem:[%s2 + $0x598] sm:$0xff]
      %v845 = vld [vmem:[%s2 + $0x5a0] sm:$0xff]
      %v846 = vld [vmem:[%s2 + $0x5a8] sm:$0xff]
      %v847 = vld [vmem:[%s2 + $0x5b0] sm:$0xff]
      %v848 = vld [vmem:[%s2 + $0x5b8] sm:$0xff]
      %v849 = vld [vmem:[%s2 + $0x5c0] sm:$0xff]
      %v850 = vld [vmem:[%s2 + $0x5c8] sm:$0xff]
      %v851 = vld [vmem:[%s2 + $0x5d0] sm:$0xff]
      %v852 = vld [vmem:[%s2 + $0x5d8] sm:$0xff]
      %v853 = vld [vmem:[%s2 + $0x5e0] sm:$0xff]
      %v854 = vld [vmem:[%s2 + $0x5e8] sm:$0xff]
      %v855 = vld [vmem:[%s2 + $0x5f0] sm:$0xff]
      %v856 = vld [vmem:[%s2 + $0x5f8] sm:$0xff]
      %v857 = vld [vmem:[%s2 + $0x600] sm:$0xff]
      %v858 = vld [vmem:[%s2 + $0x608] sm:$0xff]
      %v859 = vld [vmem:[%s2 + $0x610] sm:$0xff]
      %v860 = vld [vmem:[%s2 + $0x618] sm:$0xff]
      %v861 = vld [vmem:[%s2 + $0x620] sm:$0xff]
      %v862 = vld [vmem:[%s2 + $0x628] sm:$0xff]
      %v863 = vld [vmem:[%s2 + $0x630] sm:$0xff]
      %v864 = vld [vmem:[%s2 + $0x638] sm:$0xff]
      %v865 = vld [vmem:[%s2 + $0x640] sm:$0xff]
      %v866 = vld [vmem:[%s2 + $0x648] sm:$0xff]
      %v867 = vld [vmem:[%s2 + $0x650] sm:$0xff]
      %v868 = vld [vmem:[%s2 + $0x658] sm:$0xff]
      %v869 = vld [vmem:[%s2 + $0x660] sm:$0xff]
      %v870 = vld [vmem:[%s2 + $0x668] sm:$0xff]
      %v871 = vld [vmem:[%s2 + $0x670] sm:$0xff]
      %v872 = vld [vmem:[%s2 + $0x678] sm:$0xff]
      %v873 = vld [vmem:[%s2 + $0x680] sm:$0xff]
      %v874 = vld [vmem:[%s2 + $0x688] sm:$0xff]
      %v875 = vld [vmem:[%s2 + $0x690] sm:$0xff]
      %v876 = vld [vmem:[%s2 + $0x698] sm:$0xff]
      %v877 = vld [vmem:[%s2 + $0x6a0] sm:$0xff]
      %v878 = vld [vmem:[%s2 + $0x6a8] sm:$0xff]
      %v879 = vld [vmem:[%s2 + $0x6b0] sm:$0xff]
      %v880 = vld [vmem:[%s2 + $0x6b8] sm:$0xff]
      %vm881 = vcmask 130048
      %v883 = vsel %vm881, %v666, 0
      %v886 = vsel %vm881, %v668, 0
      %v889 = vsel %vm881, %v670, 0
      %v892 = vsel %vm881, %v672, 0
      %v895 = vsel %vm881, %v674, 0
      %v898 = vsel %vm881, %v676, 0
      %v901 = vsel %vm881, %v678, 0
      %v904 = vsel %vm881, %v680, 0
      %v907 = vsel %vm881, %v682, 0
      %v910 = vsel %vm881, %v684, 0
      %v913 = vsel %vm881, %v686, 0
      %v916 = vsel %vm881, %v688, 0
      %v919 = vsel %vm881, %v690, 0
      %v922 = vsel %vm881, %v692, 0
      %v925 = vsel %vm881, %v694, 0
      %v928 = vsel %vm881, %v696, 0
      %v931 = vsel %vm881, %v698, 0
      %v934 = vsel %vm881, %v700, 0
      %v937 = vsel %vm881, %v702, 0
      %v940 = vsel %vm881, %v704, 0
      %v943 = vsel %vm881, %v706, 0
      %v946 = vsel %vm881, %v708, 0
      %v949 = vsel %vm881, %v710, 0
      %v952 = vsel %vm881, %v712, 0
      %v955 = vsel %vm881, %v714, 0
      %v958 = vsel %vm881, %v716, 0
      %v961 = vsel %vm881, %v718, 0
      %v964 = vsel %vm881, %v720, 0
      %v967 = vsel %vm881, %v722, 0
      %v970 = vsel %vm881, %v724, 0
      %v973 = vsel %vm881, %v726, 0
      %v976 = vsel %vm881, %v728, 0
      %v979 = vsel %vm881, %v730, 0
      %v982 = vsel %vm881, %v732, 0
      %v985 = vsel %vm881, %v734, 0
      %v988 = vsel %vm881, %v736, 0
      %v991 = vsel %vm881, %v738, 0
      %v994 = vsel %vm881, %v740, 0
      %v997 = vsel %vm881, %v742, 0
      %v1000 = vsel %vm881, %v744, 0
      %v1003 = vsel %vm881, %v746, 0
      %v1006 = vsel %vm881, %v748, 0
      %v1009 = vsel %vm881, %v750, 0
      %v1012 = vsel %vm881, %v752, 0
      %v1015 = vsel %vm881, %v754, 0
      %v1018 = vsel %vm881, %v756, 0
      %v1021 = vsel %vm881, %v758, 0
      %v1024 = vsel %vm881, %v760, 0
      %v1027 = vsel %vm881, %v762, 0
      %v1030 = vsel %vm881, %v764, 0
      %v1033 = vsel %vm881, %v766, 0
      %v1036 = vsel %vm881, %v768, 0
      %v1039 = vsel %vm881, %v770, 0
      %v1042 = vsel %vm881, %v772, 0
      %v1045 = vsel %vm881, %v774, 0
      %v1048 = vsel %vm881, %v776, 0
      %v1051 = vsel %vm881, %v778, 0
      %v1054 = vsel %vm881, %v780, 0
      %v1057 = vsel %vm881, %v782, 0
      %v1060 = vsel %vm881, %v784, 0
      %v1063 = vsel %vm881, %v786, 0
      %v1066 = vsel %vm881, %v788, 0
      %v1069 = vsel %vm881, %v790, 0
      %v1072 = vsel %vm881, %v792, 0
      %v1075 = vsel %vm881, %v794, 0
      %v1078 = vsel %vm881, %v796, 0
      %v1081 = vsel %vm881, %v798, 0
      %v1084 = vsel %vm881, %v800, 0
      %v1087 = vsel %vm881, %v802, 0
      %v1090 = vsel %vm881, %v804, 0
      %v1093 = vsel %vm881, %v806, 0
      %v1096 = vsel %vm881, %v808, 0
      %v1099 = vsel %vm881, %v810, 0
      %v1102 = vsel %vm881, %v812, 0
      %v1105 = vsel %vm881, %v814, 0
      %v1108 = vsel %vm881, %v816, 0
      %v1111 = vsel %vm881, %v818, 0
      %v1114 = vsel %vm881, %v820, 0
      %v1117 = vsel %vm881, %v822, 0
      %v1120 = vsel %vm881, %v824, 0
      %v1123 = vsel %vm881, %v826, 0
      %v1126 = vsel %vm881, %v828, 0
      %v1129 = vsel %vm881, %v830, 0
      %v1132 = vsel %vm881, %v832, 0
      %v1135 = vsel %vm881, %v834, 0
      %v1138 = vsel %vm881, %v836, 0
      %v1141 = vsel %vm881, %v838, 0
      %v1144 = vsel %vm881, %v840, 0
      %v1147 = vsel %vm881, %v842, 0
      %v1150 = vsel %vm881, %v844, 0
      %v1153 = vsel %vm881, %v846, 0
      %v1156 = vsel %vm881, %v848, 0
      %v1159 = vsel %vm881, %v850, 0
      %v1162 = vsel %vm881, %v852, 0
      %v1165 = vsel %vm881, %v854, 0
      %v1168 = vsel %vm881, %v856, 0
      %v1171 = vsel %vm881, %v858, 0
      %v1174 = vsel %vm881, %v860, 0
      %v1177 = vsel %vm881, %v862, 0
      %v1180 = vsel %vm881, %v864, 0
      %v1183 = vsel %vm881, %v866, 0
      %v1186 = vsel %vm881, %v868, 0
      %v1189 = vsel %vm881, %v870, 0
      %v1192 = vsel %vm881, %v872, 0
      %v1195 = vsel %vm881, %v874, 0
      %v1198 = vsel %vm881, %v876, 0
      %v1201 = vsel %vm881, %v878, 0
      %v1204 = vsel %vm881, %v880, 0
      %1206 = vmatprep.subr.mxu0 0.0
      %1207 = vmatpush1.msra.mxu0 %v577
      %1208 = vmatprep.subr.mxu0 0.0
      %1209 = vmatpush1.msra.mxu0 %v582
      %1210 = vmatprep.subr.mxu0 0.0
      %1211 = vmatpush1.msra.mxu0 %v587
      %1212 = vmatprep.subr.mxu0 0.0
      %1213 = vmatpush1.msra.mxu0 %v592
      %1214 = vmatprep.subr.mxu0 0.0
      %1215 = vmatpush1.msra.mxu0 %v597
      %1216 = vmatprep.subr.mxu0 0.0
      %1217 = vmatpush1.msra.mxu0 %v602
      %1218 = vmatprep.subr.mxu0 0.0
      %1219 = vmatpush1.msra.mxu0 %v607
      %1220 = vmatprep.subr.mxu0 0.0
      %1221 = vmatpush1.msra.mxu0 %v612
      %1222 = vmatprep.subr.mxu0 0.0
      %1223 = vmatpush1.msra.mxu0 %v617
      %1224 = vmatprep.subr.mxu0 0.0
      %1225 = vmatpush1.msra.mxu0 %v622
      %1226 = vmatprep.subr.mxu0 0.0
      %1227 = vmatpush1.msra.mxu0 %v627
      %1228 = vmatprep.subr.mxu0 0.0
      %1229 = vmatpush1.msra.mxu0 %v632
      %1230 = vmatprep.subr.mxu0 0.0
      %1231 = vmatpush1.msra.mxu0 %v637
      %1232 = vmatprep.subr.mxu0 0.0
      %1233 = vmatpush1.msra.mxu0 %v642
      %1234 = vmatprep.subr.mxu0 0.0
      %1235 = vmatpush1.msra.mxu0 %v647
      %1236 = vmatprep.subr.mxu0 0.0
      %1237 = vmatpush1.msra.mxu0 %v652
      %1238 = vmatprep.subr.mxu0 0.0
      %1239 = vmatpush1.msra.mxu0 %v657
      %1240 = vmatprep.subr.mxu0 0.0
      %1241 = vmatpush1.msra.mxu0 %v662
      %1242 = vmatprep.subr.mxu0 0.0
      %1243 = vmatpush1.msra.mxu0 0.0
      %1244 = vmatprep.subr.mxu0 0.0
      %1245 = vmatpush1.msra.mxu0 0.0
      %1246 = vmatprep.subr.mxu0 0.0
      %1247 = vmatpush1.msra.mxu0 0.0
      %1248 = vmatprep.subr.mxu0 0.0
      %1249 = vmatpush1.msra.mxu0 0.0
      %1250 = vmatprep.subr.mxu0 0.0
      %1251 = vmatpush1.msra.mxu0 0.0
      %1252 = vmatprep.subr.mxu0 0.0
      %1253 = vmatpush1.msra.mxu0 0.0
      %1254 = vmatprep.subr.mxu0 0.0
      %1255 = vmatpush1.msra.mxu0 0.0
      %1256 = vmatprep.subr.mxu0 0.0
      %1257 = vmatpush1.msra.mxu0 0.0
      %1258 = vmatprep.subr.mxu0 0.0
      %1259 = vmatpush1.msra.mxu0 0.0
      %1260 = vmatprep.subr.mxu0 0.0
      %1261 = vmatpush1.msra.mxu0 0.0
      %1262 = vmatprep.subr.mxu0 0.0
      %1263 = vmatpush1.msra.mxu0 0.0
      %1264 = vmatprep.subr.mxu0 0.0
      %1265 = vmatpush1.msra.mxu0 0.0
      %1266 = vmatprep.subr.mxu0 0.0
      %1267 = vmatpush1.msra.mxu0 0.0
      %1268 = vmatprep.subr.mxu0 0.0
      %1269 = vmatpush1.msra.mxu0 0.0
      %1270 = vmatprep.mubr.f32.mxu0 %v883
      %1271 = vmatmul.mubr.f32.gmra.mrb[0].mxu0 %v665
      %v1272 = vpop.f32.mrb[0].mxu0
      %v1273 = vadd.f32 0.0, %v1272
      %v1274 = vpop.f32.mrb[0].mxu0
      %1275 = vmatprep.mubr.f32.mxu0 %v886
      %1276 = vmatmul.mubr.f32.gmra.mrb[0].mxu0 %v667
      %v1277 = vpop.f32.mrb[0].mxu0
      %v1278 = vadd.f32 0.0, %v1277
      %v1279 = vpop.f32.mrb[0].mxu0
      %1280 = vmatprep.mubr.f32.mxu0 %v889
      %1281 = vmatmul.mubr.f32.gmra.mrb[0].mxu0 %v669
      %v1282 = vpop.f32.mrb[0].mxu0
      %v1283 = vadd.f32 0.0, %v1282
      %v1284 = vpop.f32.mrb[0].mxu0
      %1285 = vmatprep.mubr.f32.mxu0 %v892
      %1286 = vmatmul.mubr.f32.gmra.mrb[0].mxu0 %v671
      %v1287 = vpop.f32.mrb[0].mxu0
      %v1288 = vadd.f32 0.0, %v1287
      %v1289 = vpop.f32.mrb[0].mxu0
      %1290 = vmatprep.mubr.f32.mxu0 %v895
      %1291 = vmatmul.mubr.f32.gmra.mrb[0].mxu0 %v673
      %v1292 = vpop.f32.mrb[0].mxu0
      %v1293 = vadd.f32 0.0, %v1292
      %v1294 = vpop.f32.mrb[0].mxu0
      %1295 = vmatprep.mubr.f32.mxu0 %v898
      %1296 = vmatmul.mubr.f32.gmra.mrb[0].mxu0 %v675
      %v1297 = vpop.f32.mrb[0].mxu0
      %v1298 = vadd.f32 0.0, %v1297
      %v1299 = vpop.f32.mrb[0].mxu0
      %1300 = vmatprep.mubr.f32.mxu0 %v901
      %1301 = vmatmul.mubr.f32.gmra.mrb[0].mxu0 %v677
      %v1302 = vpop.f32.mrb[0].mxu0
      %v1303 = vadd.f32 0.0, %v1302
      %v1304 = vpop.f32.mrb[0].mxu0
      %1305 = vmatprep.mubr.f32.mxu0 %v904
      %1306 = vmatmul.mubr.f32.gmra.mrb[0].mxu0 %v679
      %v1307 = vpop.f32.mrb[0].mxu0
      %v1308 = vadd.f32 0.0, %v1307
      %v1309 = vpop.f32.mrb[0].mxu0
      %1310 = vmatprep.mubr.f32.mxu0 %v907
      %1311 = vmatmul.mubr.f32.gmra.mrb[0].mxu0 %v681
      %v1312 = vpop.f32.mrb[0].mxu0
      %v1313 = vadd.f32 0.0, %v1312
      %v1314 = vpop.f32.mrb[0].mxu0
      %1315 = vmatprep.mubr.f32.mxu0 %v910
      %1316 = vmatmul.mubr.f32.gmra.mrb[0].mxu0 %v683
      %v1317 = vpop.f32.mrb[0].mxu0
      %v1318 = vadd.f32 0.0, %v1317
      %v1319 = vpop.f32.mrb[0].mxu0
      %1320 = vmatprep.mubr.f32.mxu0 %v913
      %1321 = vmatmul.mubr.f32.gmra.mrb[0].mxu0 %v685
      %v1322 = vpop.f32.mrb[0].mxu0
      %v1323 = vadd.f32 0.0, %v1322
      %v1324 = vpop.f32.mrb[0].mxu0
      %1325 = vmatprep.mubr.f32.mxu0 %v916
      %1326 = vmatmul.mubr.f32.gmra.mrb[0].mxu0 %v687
      %v1327 = vpop.f32.mrb[0].mxu0
      %v1328 = vadd.f32 0.0, %v1327
      %v1329 = vpop.f32.mrb[0].mxu0
      %1330 = vmatprep.mubr.f32.mxu0 %v919
      %1331 = vmatmul.mubr.f32.gmra.mrb[0].mxu0 %v689
      %v1332 = vpop.f32.mrb[0].mxu0
      %v1333 = vadd.f32 0.0, %v1332
      %v1334 = vpop.f32.mrb[0].mxu0
      %1335 = vmatprep.mubr.f32.mxu0 %v922
      %1336 = vmatmul.mubr.f32.gmra.mrb[0].mxu0 %v691
      %v1337 = vpop.f32.mrb[0].mxu0
      %v1338 = vadd.f32 0.0, %v1337
      %v1339 = vpop.f32.mrb[0].mxu0
      %1340 = vmatprep.mubr.f32.mxu0 %v925
      %1341 = vmatmul.mubr.f32.gmra.mrb[0].mxu0 %v693
      %v1342 = vpop.f32.mrb[0].mxu0
      %v1343 = vadd.f32 0.0, %v1342
      %v1344 = vpop.f32.mrb[0].mxu0
      %1345 = vmatprep.mubr.f32.mxu0 %v928
      %1346 = vmatmul.mubr.f32.gmra.mrb[0].mxu0 %v695
      %v1347 = vpop.f32.mrb[0].mxu0
      %v1348 = vadd.f32 0.0, %v1347
      %v1349 = vpop.f32.mrb[0].mxu0
      %1350 = vmatprep.mubr.f32.mxu0 %v931
      %1351 = vmatmul.mubr.f32.gmra.mrb[0].mxu0 %v697
      %v1352 = vpop.f32.mrb[0].mxu0
      %v1353 = vadd.f32 0.0, %v1352
      %v1354 = vpop.f32.mrb[0].mxu0
      %1355 = vmatprep.mubr.f32.mxu0 %v934
      %1356 = vmatmul.mubr.f32.gmra.mrb[0].mxu0 %v699
      %v1357 = vpop.f32.mrb[0].mxu0
      %v1358 = vadd.f32 0.0, %v1357
      %v1359 = vpop.f32.mrb[0].mxu0
      %1360 = vmatprep.mubr.f32.mxu0 %v937
      %1361 = vmatmul.mubr.f32.gmra.mrb[0].mxu0 %v701
      %v1362 = vpop.f32.mrb[0].mxu0
      %v1363 = vadd.f32 0.0, %v1362
      %v1364 = vpop.f32.mrb[0].mxu0
      %1365 = vmatprep.mubr.f32.mxu0 %v940
      %1366 = vmatmul.mubr.f32.gmra.mrb[0].mxu0 %v703
      %v1367 = vpop.f32.mrb[0].mxu0
      %v1368 = vadd.f32 0.0, %v1367
      %v1369 = vpop.f32.mrb[0].mxu0
      %1370 = vmatprep.mubr.f32.mxu0 %v943
      %1371 = vmatmul.mubr.f32.gmra.mrb[0].mxu0 %v705
      %v1372 = vpop.f32.mrb[0].mxu0
      %v1373 = vadd.f32 0.0, %v1372
      %v1374 = vpop.f32.mrb[0].mxu0
      %1375 = vmatprep.mubr.f32.mxu0 %v946
      %1376 = vmatmul.mubr.f32.gmra.mrb[0].mxu0 %v707
      %v1377 = vpop.f32.mrb[0].mxu0
      %v1378 = vadd.f32 0.0, %v1377
      %v1379 = vpop.f32.mrb[0].mxu0
      %1380 = vmatprep.mubr.f32.mxu0 %v949
      %1381 = vmatmul.mubr.f32.gmra.mrb[0].mxu0 %v709
      %v1382 = vpop.f32.mrb[0].mxu0
      %v1383 = vadd.f32 0.0, %v1382
      %v1384 = vpop.f32.mrb[0].mxu0
      %1385 = vmatprep.mubr.f32.mxu0 %v952
      %1386 = vmatmul.mubr.f32.gmra.mrb[0].mxu0 %v711
      %v1387 = vpop.f32.mrb[0].mxu0
      %v1388 = vadd.f32 0.0, %v1387
      %v1389 = vpop.f32.mrb[0].mxu0
      %1390 = vmatprep.mubr.f32.mxu0 %v955
      %1391 = vmatmul.mubr.f32.gmra.mrb[0].mxu0 %v713
      %v1392 = vpop.f32.mrb[0].mxu0
      %v1393 = vadd.f32 0.0, %v1392
      %v1394 = vpop.f32.mrb[0].mxu0
      %1395 = vmatprep.mubr.f32.mxu0 %v958
      %1396 = vmatmul.mubr.f32.gmra.mrb[0].mxu0 %v715
      %v1397 = vpop.f32.mrb[0].mxu0
      %v1398 = vadd.f32 0.0, %v1397
      %v1399 = vpop.f32.mrb[0].mxu0
      %1400 = vmatprep.mubr.f32.mxu0 %v961
      %1401 = vmatmul.mubr.f32.gmra.mrb[0].mxu0 %v717
      %v1402 = vpop.f32.mrb[0].mxu0
      %v1403 = vadd.f32 0.0, %v1402
      %v1404 = vpop.f32.mrb[0].mxu0
      %1405 = vmatprep.mubr.f32.mxu0 %v964
      %1406 = vmatmul.mubr.f32.gmra.mrb[0].mxu0 %v719
      %v1407 = vpop.f32.mrb[0].mxu0
      %v1408 = vadd.f32 0.0, %v1407
      %v1409 = vpop.f32.mrb[0].mxu0
      %1410 = vmatprep.mubr.f32.mxu0 %v967
      %1411 = vmatmul.mubr.f32.gmra.mrb[0].mxu0 %v721
      %v1412 = vpop.f32.mrb[0].mxu0
      %v1413 = vadd.f32 0.0, %v1412
      %v1414 = vpop.f32.mrb[0].mxu0
      %1415 = vmatprep.mubr.f32.mxu0 %v970
      %1416 = vmatmul.mubr.f32.gmra.mrb[0].mxu0 %v723
      %v1417 = vpop.f32.mrb[0].mxu0
      %v1418 = vadd.f32 0.0, %v1417
      %v1419 = vpop.f32.mrb[0].mxu0
      %1420 = vmatprep.mubr.f32.mxu0 %v973
      %1421 = vmatmul.mubr.f32.gmra.mrb[0].mxu0 %v725
      %v1422 = vpop.f32.mrb[0].mxu0
      %v1423 = vadd.f32 0.0, %v1422
      %v1424 = vpop.f32.mrb[0].mxu0
      %1425 = vmatprep.mubr.f32.mxu0 %v976
      %1426 = vmatmul.mubr.f32.gmra.mrb[0].mxu0 %v727
      %v1427 = vpop.f32.mrb[0].mxu0
      %v1428 = vadd.f32 0.0, %v1427
      %v1429 = vpop.f32.mrb[0].mxu0
      %1430 = vmatprep.mubr.f32.mxu0 %v979
      %1431 = vmatmul.mubr.f32.gmra.mrb[0].mxu0 %v729
      %v1432 = vpop.f32.mrb[0].mxu0
      %v1433 = vadd.f32 0.0, %v1432
      %v1434 = vpop.f32.mrb[0].mxu0
      %1435 = vmatprep.mubr.f32.mxu0 %v982
      %1436 = vmatmul.mubr.f32.gmra.mrb[0].mxu0 %v731
      %v1437 = vpop.f32.mrb[0].mxu0
      %v1438 = vadd.f32 0.0, %v1437
      %v1439 = vpop.f32.mrb[0].mxu0
      %1440 = vmatprep.mubr.f32.mxu0 %v985
      %1441 = vmatmul.mubr.f32.gmra.mrb[0].mxu0 %v733
      %v1442 = vpop.f32.mrb[0].mxu0
      %v1443 = vadd.f32 0.0, %v1442
      %v1444 = vpop.f32.mrb[0].mxu0
      %1445 = vmatprep.mubr.f32.mxu0 %v988
      %1446 = vmatmul.mubr.f32.gmra.mrb[0].mxu0 %v735
      %v1447 = vpop.f32.mrb[0].mxu0
      %v1448 = vadd.f32 0.0, %v1447
      %v1449 = vpop.f32.mrb[0].mxu0
      %1450 = vmatprep.mubr.f32.mxu0 %v991
      %1451 = vmatmul.mubr.f32.gmra.mrb[0].mxu0 %v737
      %v1452 = vpop.f32.mrb[0].mxu0
      %v1453 = vadd.f32 0.0, %v1452
      %v1454 = vpop.f32.mrb[0].mxu0
      %1455 = vmatprep.mubr.f32.mxu0 %v994
      %1456 = vmatmul.mubr.f32.gmra.mrb[0].mxu0 %v739
      %v1457 = vpop.f32.mrb[0].mxu0
      %v1458 = vadd.f32 0.0, %v1457
      %v1459 = vpop.f32.mrb[0].mxu0
      %1460 = vmatprep.mubr.f32.mxu0 %v997
      %1461 = vmatmul.mubr.f32.gmra.mrb[0].mxu0 %v741
      %v1462 = vpop.f32.mrb[0].mxu0
      %v1463 = vadd.f32 0.0, %v1462
      %v1464 = vpop.f32.mrb[0].mxu0
      %1465 = vmatprep.mubr.f32.mxu0 %v1000
      %1466 = vmatmul.mubr.f32.gmra.mrb[0].mxu0 %v743
      %v1467 = vpop.f32.mrb[0].mxu0
      %v1468 = vadd.f32 0.0, %v1467
      %v1469 = vpop.f32.mrb[0].mxu0
      %1470 = vmatprep.mubr.f32.mxu0 %v1003
      %1471 = vmatmul.mubr.f32.gmra.mrb[0].mxu0 %v745
      %v1472 = vpop.f32.mrb[0].mxu0
      %v1473 = vadd.f32 0.0, %v1472
      %v1474 = vpop.f32.mrb[0].mxu0
      %1475 = vmatprep.mubr.f32.mxu0 %v1006
      %1476 = vmatmul.mubr.f32.gmra.mrb[0].mxu0 %v747
      %v1477 = vpop.f32.mrb[0].mxu0
      %v1478 = vadd.f32 0.0, %v1477
      %v1479 = vpop.f32.mrb[0].mxu0
      %1480 = vmatprep.mubr.f32.mxu0 %v1009
      %1481 = vmatmul.mubr.f32.gmra.mrb[0].mxu0 %v749
      %v1482 = vpop.f32.mrb[0].mxu0
      %v1483 = vadd.f32 0.0, %v1482
      %v1484 = vpop.f32.mrb[0].mxu0
      %1485 = vmatprep.mubr.f32.mxu0 %v1012
      %1486 = vmatmul.mubr.f32.gmra.mrb[0].mxu0 %v751
      %v1487 = vpop.f32.mrb[0].mxu0
      %v1488 = vadd.f32 0.0, %v1487
      %v1489 = vpop.f32.mrb[0].mxu0
      %1490 = vmatprep.mubr.f32.mxu0 %v1015
      %1491 = vmatmul.mubr.f32.gmra.mrb[0].mxu0 %v753
      %v1492 = vpop.f32.mrb[0].mxu0
      %v1493 = vadd.f32 0.0, %v1492
      %v1494 = vpop.f32.mrb[0].mxu0
      %1495 = vmatprep.mubr.f32.mxu0 %v1018
      %1496 = vmatmul.mubr.f32.gmra.mrb[0].mxu0 %v755
      %v1497 = vpop.f32.mrb[0].mxu0
      %v1498 = vadd.f32 0.0, %v1497
      %v1499 = vpop.f32.mrb[0].mxu0
      %1500 = vmatprep.mubr.f32.mxu0 %v1021
      %1501 = vmatmul.mubr.f32.gmra.mrb[0].mxu0 %v757
      %v1502 = vpop.f32.mrb[0].mxu0
      %v1503 = vadd.f32 0.0, %v1502
      %v1504 = vpop.f32.mrb[0].mxu0
      %1505 = vmatprep.mubr.f32.mxu0 %v1024
      %1506 = vmatmul.mubr.f32.gmra.mrb[0].mxu0 %v759
      %v1507 = vpop.f32.mrb[0].mxu0
      %v1508 = vadd.f32 0.0, %v1507
      %v1509 = vpop.f32.mrb[0].mxu0
      %1510 = vmatprep.mubr.f32.mxu0 %v1027
      %1511 = vmatmul.mubr.f32.gmra.mrb[0].mxu0 %v761
      %v1512 = vpop.f32.mrb[0].mxu0
      %v1513 = vadd.f32 0.0, %v1512
      %v1514 = vpop.f32.mrb[0].mxu0
      %1515 = vmatprep.mubr.f32.mxu0 %v1030
      %1516 = vmatmul.mubr.f32.gmra.mrb[0].mxu0 %v763
      %v1517 = vpop.f32.mrb[0].mxu0
      %v1518 = vadd.f32 0.0, %v1517
      %v1519 = vpop.f32.mrb[0].mxu0
      %1520 = vmatprep.mubr.f32.mxu0 %v1033
      %1521 = vmatmul.mubr.f32.gmra.mrb[0].mxu0 %v765
      %v1522 = vpop.f32.mrb[0].mxu0
      %v1523 = vadd.f32 0.0, %v1522
      %v1524 = vpop.f32.mrb[0].mxu0
      %1525 = vmatprep.mubr.f32.mxu0 %v1036
      %1526 = vmatmul.mubr.f32.gmra.mrb[0].mxu0 %v767
      %v1527 = vpop.f32.mrb[0].mxu0
      %v1528 = vadd.f32 0.0, %v1527
      %v1529 = vpop.f32.mrb[0].mxu0
      %1530 = vmatprep.mubr.f32.mxu0 %v1039
      %1531 = vmatmul.mubr.f32.gmra.mrb[0].mxu0 %v769
      %v1532 = vpop.f32.mrb[0].mxu0
      %v1533 = vadd.f32 0.0, %v1532
      %v1534 = vpop.f32.mrb[0].mxu0
      %1535 = vmatprep.mubr.f32.mxu0 %v1042
      %1536 = vmatmul.mubr.f32.gmra.mrb[0].mxu0 %v771
      %v1537 = vpop.f32.mrb[0].mxu0
      %v1538 = vadd.f32 0.0, %v1537
      %v1539 = vpop.f32.mrb[0].mxu0
      %1540 = vmatprep.mubr.f32.mxu0 %v1045
      %1541 = vmatmul.mubr.f32.gmra.mrb[0].mxu0 %v773
      %v1542 = vpop.f32.mrb[0].mxu0
      %v1543 = vadd.f32 0.0, %v1542
      %v1544 = vpop.f32.mrb[0].mxu0
      %1545 = vmatprep.mubr.f32.mxu0 %v1048
      %1546 = vmatmul.mubr.f32.gmra.mrb[0].mxu0 %v775
      %v1547 = vpop.f32.mrb[0].mxu0
      %v1548 = vadd.f32 0.0, %v1547
      %v1549 = vpop.f32.mrb[0].mxu0
      %1550 = vmatprep.mubr.f32.mxu0 %v1051
      %1551 = vmatmul.mubr.f32.gmra.mrb[0].mxu0 %v777
      %v1552 = vpop.f32.mrb[0].mxu0
      %v1553 = vadd.f32 0.0, %v1552
      %v1554 = vpop.f32.mrb[0].mxu0
      %1555 = vmatprep.mubr.f32.mxu0 %v1054
      %1556 = vmatmul.mubr.f32.gmra.mrb[0].mxu0 %v779
      %v1557 = vpop.f32.mrb[0].mxu0
      %v1558 = vadd.f32 0.0, %v1557
      %v1559 = vpop.f32.mrb[0].mxu0
      %1560 = vmatprep.mubr.f32.mxu0 %v1057
      %1561 = vmatmul.mubr.f32.gmra.mrb[0].mxu0 %v781
      %v1562 = vpop.f32.mrb[0].mxu0
      %v1563 = vadd.f32 0.0, %v1562
      %v1564 = vpop.f32.mrb[0].mxu0
      %1565 = vmatprep.mubr.f32.mxu0 %v1060
      %1566 = vmatmul.mubr.f32.gmra.mrb[0].mxu0 %v783
      %v1567 = vpop.f32.mrb[0].mxu0
      %v1568 = vadd.f32 0.0, %v1567
      %v1569 = vpop.f32.mrb[0].mxu0
      %1570 = vmatprep.mubr.f32.mxu0 %v1063
      %1571 = vmatmul.mubr.f32.gmra.mrb[0].mxu0 %v785
      %v1572 = vpop.f32.mrb[0].mxu0
      %v1573 = vadd.f32 0.0, %v1572
      %v1574 = vpop.f32.mrb[0].mxu0
      %1575 = vmatprep.mubr.f32.mxu0 %v1066
      %1576 = vmatmul.mubr.f32.gmra.mrb[0].mxu0 %v787
      %v1577 = vpop.f32.mrb[0].mxu0
      %v1578 = vadd.f32 0.0, %v1577
      %v1579 = vpop.f32.mrb[0].mxu0
      %1580 = vmatprep.mubr.f32.mxu0 %v1069
      %1581 = vmatmul.mubr.f32.gmra.mrb[0].mxu0 %v789
      %v1582 = vpop.f32.mrb[0].mxu0
      %v1583 = vadd.f32 0.0, %v1582
      %v1584 = vpop.f32.mrb[0].mxu0
      %1585 = vmatprep.mubr.f32.mxu0 %v1072
      %1586 = vmatmul.mubr.f32.gmra.mrb[0].mxu0 %v791
      %v1587 = vpop.f32.mrb[0].mxu0
      %v1588 = vadd.f32 0.0, %v1587
      %v1589 = vpop.f32.mrb[0].mxu0
      %1590 = vmatprep.mubr.f32.mxu0 %v1075
      %1591 = vmatmul.mubr.f32.gmra.mrb[0].mxu0 %v793
      %v1592 = vpop.f32.mrb[0].mxu0
      %v1593 = vadd.f32 0.0, %v1592
      %v1594 = vpop.f32.mrb[0].mxu0
      %1595 = vmatprep.mubr.f32.mxu0 %v1078
      %1596 = vmatmul.mubr.f32.gmra.mrb[0].mxu0 %v795
      %v1597 = vpop.f32.mrb[0].mxu0
      %v1598 = vadd.f32 0.0, %v1597
      %v1599 = vpop.f32.mrb[0].mxu0
      %1600 = vmatprep.mubr.f32.mxu0 %v1081
      %1601 = vmatmul.mubr.f32.gmra.mrb[0].mxu0 %v797
      %v1602 = vpop.f32.mrb[0].mxu0
      %v1603 = vadd.f32 0.0, %v1602
      %v1604 = vpop.f32.mrb[0].mxu0
      %1605 = vmatprep.mubr.f32.mxu0 %v1084
      %1606 = vmatmul.mubr.f32.gmra.mrb[0].mxu0 %v799
      %v1607 = vpop.f32.mrb[0].mxu0
      %v1608 = vadd.f32 0.0, %v1607
      %v1609 = vpop.f32.mrb[0].mxu0
      %1610 = vmatprep.mubr.f32.mxu0 %v1087
      %1611 = vmatmul.mubr.f32.gmra.mrb[0].mxu0 %v801
      %v1612 = vpop.f32.mrb[0].mxu0
      %v1613 = vadd.f32 0.0, %v1612
      %v1614 = vpop.f32.mrb[0].mxu0
      %1615 = vmatprep.mubr.f32.mxu0 %v1090
      %1616 = vmatmul.mubr.f32.gmra.mrb[0].mxu0 %v803
      %v1617 = vpop.f32.mrb[0].mxu0
      %v1618 = vadd.f32 0.0, %v1617
      %v1619 = vpop.f32.mrb[0].mxu0
      %1620 = vmatprep.mubr.f32.mxu0 %v1093
      %1621 = vmatmul.mubr.f32.gmra.mrb[0].mxu0 %v805
      %v1622 = vpop.f32.mrb[0].mxu0
      %v1623 = vadd.f32 0.0, %v1622
      %v1624 = vpop.f32.mrb[0].mxu0
      %1625 = vmatprep.mubr.f32.mxu0 %v1096
      %1626 = vmatmul.mubr.f32.gmra.mrb[0].mxu0 %v807
      %v1627 = vpop.f32.mrb[0].mxu0
      %v1628 = vadd.f32 0.0, %v1627
      %v1629 = vpop.f32.mrb[0].mxu0
      %1630 = vmatprep.mubr.f32.mxu0 %v1099
      %1631 = vmatmul.mubr.f32.gmra.mrb[0].mxu0 %v809
      %v1632 = vpop.f32.mrb[0].mxu0
      %v1633 = vadd.f32 0.0, %v1632
      %v1634 = vpop.f32.mrb[0].mxu0
      %1635 = vmatprep.mubr.f32.mxu0 %v1102
      %1636 = vmatmul.mubr.f32.gmra.mrb[0].mxu0 %v811
      %v1637 = vpop.f32.mrb[0].mxu0
      %v1638 = vadd.f32 0.0, %v1637
      %v1639 = vpop.f32.mrb[0].mxu0
      %1640 = vmatprep.mubr.f32.mxu0 %v1105
      %1641 = vmatmul.mubr.f32.gmra.mrb[0].mxu0 %v813
      %v1642 = vpop.f32.mrb[0].mxu0
      %v1643 = vadd.f32 0.0, %v1642
      %v1644 = vpop.f32.mrb[0].mxu0
      %1645 = vmatprep.mubr.f32.mxu0 %v1108
      %1646 = vmatmul.mubr.f32.gmra.mrb[0].mxu0 %v815
      %v1647 = vpop.f32.mrb[0].mxu0
      %v1648 = vadd.f32 0.0, %v1647
      %v1649 = vpop.f32.mrb[0].mxu0
      %1650 = vmatprep.mubr.f32.mxu0 %v1111
      %1651 = vmatmul.mubr.f32.gmra.mrb[0].mxu0 %v817
      %v1652 = vpop.f32.mrb[0].mxu0
      %v1653 = vadd.f32 0.0, %v1652
      %v1654 = vpop.f32.mrb[0].mxu0
      %1655 = vmatprep.mubr.f32.mxu0 %v1114
      %1656 = vmatmul.mubr.f32.gmra.mrb[0].mxu0 %v819
      %v1657 = vpop.f32.mrb[0].mxu0
      %v1658 = vadd.f32 0.0, %v1657
      %v1659 = vpop.f32.mrb[0].mxu0
      %1660 = vmatprep.mubr.f32.mxu0 %v1117
      %1661 = vmatmul.mubr.f32.gmra.mrb[0].mxu0 %v821
      %v1662 = vpop.f32.mrb[0].mxu0
      %v1663 = vadd.f32 0.0, %v1662
      %v1664 = vpop.f32.mrb[0].mxu0
      %1665 = vmatprep.mubr.f32.mxu0 %v1120
      %1666 = vmatmul.mubr.f32.gmra.mrb[0].mxu0 %v823
      %v1667 = vpop.f32.mrb[0].mxu0
      %v1668 = vadd.f32 0.0, %v1667
      %v1669 = vpop.f32.mrb[0].mxu0
      %1670 = vmatprep.mubr.f32.mxu0 %v1123
      %1671 = vmatmul.mubr.f32.gmra.mrb[0].mxu0 %v825
      %v1672 = vpop.f32.mrb[0].mxu0
      %v1673 = vadd.f32 0.0, %v1672
      %v1674 = vpop.f32.mrb[0].mxu0
      %1675 = vmatprep.mubr.f32.mxu0 %v1126
      %1676 = vmatmul.mubr.f32.gmra.mrb[0].mxu0 %v827
      %v1677 = vpop.f32.mrb[0].mxu0
      %v1678 = vadd.f32 0.0, %v1677
      %v1679 = vpop.f32.mrb[0].mxu0
      %1680 = vmatprep.mubr.f32.mxu0 %v1129
      %1681 = vmatmul.mubr.f32.gmra.mrb[0].mxu0 %v829
      %v1682 = vpop.f32.mrb[0].mxu0
      %v1683 = vadd.f32 0.0, %v1682
      %v1684 = vpop.f32.mrb[0].mxu0
      %1685 = vmatprep.mubr.f32.mxu0 %v1132
      %1686 = vmatmul.mubr.f32.gmra.mrb[0].mxu0 %v831
      %v1687 = vpop.f32.mrb[0].mxu0
      %v1688 = vadd.f32 0.0, %v1687
      %v1689 = vpop.f32.mrb[0].mxu0
      %1690 = vmatprep.mubr.f32.mxu0 %v1135
      %1691 = vmatmul.mubr.f32.gmra.mrb[0].mxu0 %v833
      %v1692 = vpop.f32.mrb[0].mxu0
      %v1693 = vadd.f32 0.0, %v1692
      %v1694 = vpop.f32.mrb[0].mxu0
      %1695 = vmatprep.mubr.f32.mxu0 %v1138
      %1696 = vmatmul.mubr.f32.gmra.mrb[0].mxu0 %v835
      %v1697 = vpop.f32.mrb[0].mxu0
      %v1698 = vadd.f32 0.0, %v1697
      %v1699 = vpop.f32.mrb[0].mxu0
      %1700 = vmatprep.mubr.f32.mxu0 %v1141
      %1701 = vmatmul.mubr.f32.gmra.mrb[0].mxu0 %v837
      %v1702 = vpop.f32.mrb[0].mxu0
      %v1703 = vadd.f32 0.0, %v1702
      %v1704 = vpop.f32.mrb[0].mxu0
      %1705 = vmatprep.mubr.f32.mxu0 %v1144
      %1706 = vmatmul.mubr.f32.gmra.mrb[0].mxu0 %v839
      %v1707 = vpop.f32.mrb[0].mxu0
      %v1708 = vadd.f32 0.0, %v1707
      %v1709 = vpop.f32.mrb[0].mxu0
      %1710 = vmatprep.mubr.f32.mxu0 %v1147
      %1711 = vmatmul.mubr.f32.gmra.mrb[0].mxu0 %v841
      %v1712 = vpop.f32.mrb[0].mxu0
      %v1713 = vadd.f32 0.0, %v1712
      %v1714 = vpop.f32.mrb[0].mxu0
      %1715 = vmatprep.mubr.f32.mxu0 %v1150
      %1716 = vmatmul.mubr.f32.gmra.mrb[0].mxu0 %v843
      %v1717 = vpop.f32.mrb[0].mxu0
      %v1718 = vadd.f32 0.0, %v1717
      %v1719 = vpop.f32.mrb[0].mxu0
      %1720 = vmatprep.mubr.f32.mxu0 %v1153
      %1721 = vmatmul.mubr.f32.gmra.mrb[0].mxu0 %v845
      %v1722 = vpop.f32.mrb[0].mxu0
      %v1723 = vadd.f32 0.0, %v1722
      %v1724 = vpop.f32.mrb[0].mxu0
      %1725 = vmatprep.mubr.f32.mxu0 %v1156
      %1726 = vmatmul.mubr.f32.gmra.mrb[0].mxu0 %v847
      %v1727 = vpop.f32.mrb[0].mxu0
      %v1728 = vadd.f32 0.0, %v1727
      %v1729 = vpop.f32.mrb[0].mxu0
      %1730 = vmatprep.mubr.f32.mxu0 %v1159
      %1731 = vmatmul.mubr.f32.gmra.mrb[0].mxu0 %v849
      %v1732 = vpop.f32.mrb[0].mxu0
      %v1733 = vadd.f32 0.0, %v1732
      %v1734 = vpop.f32.mrb[0].mxu0
      %1735 = vmatprep.mubr.f32.mxu0 %v1162
      %1736 = vmatmul.mubr.f32.gmra.mrb[0].mxu0 %v851
      %v1737 = vpop.f32.mrb[0].mxu0
      %v1738 = vadd.f32 0.0, %v1737
      %v1739 = vpop.f32.mrb[0].mxu0
      %1740 = vmatprep.mubr.f32.mxu0 %v1165
      %1741 = vmatmul.mubr.f32.gmra.mrb[0].mxu0 %v853
      %v1742 = vpop.f32.mrb[0].mxu0
      %v1743 = vadd.f32 0.0, %v1742
      %v1744 = vpop.f32.mrb[0].mxu0
      %1745 = vmatprep.mubr.f32.mxu0 %v1168
      %1746 = vmatmul.mubr.f32.gmra.mrb[0].mxu0 %v855
      %v1747 = vpop.f32.mrb[0].mxu0
      %v1748 = vadd.f32 0.0, %v1747
      %v1749 = vpop.f32.mrb[0].mxu0
      %1750 = vmatprep.mubr.f32.mxu0 %v1171
      %1751 = vmatmul.mubr.f32.gmra.mrb[0].mxu0 %v857
      %v1752 = vpop.f32.mrb[0].mxu0
      %v1753 = vadd.f32 0.0, %v1752
      %v1754 = vpop.f32.mrb[0].mxu0
      %1755 = vmatprep.mubr.f32.mxu0 %v1174
      %1756 = vmatmul.mubr.f32.gmra.mrb[0].mxu0 %v859
      %v1757 = vpop.f32.mrb[0].mxu0
      %v1758 = vadd.f32 0.0, %v1757
      %v1759 = vpop.f32.mrb[0].mxu0
      %1760 = vmatprep.mubr.f32.mxu0 %v1177
      %1761 = vmatmul.mubr.f32.gmra.mrb[0].mxu0 %v861
      %v1762 = vpop.f32.mrb[0].mxu0
      %v1763 = vadd.f32 0.0, %v1762
      %v1764 = vpop.f32.mrb[0].mxu0
      %1765 = vmatprep.mubr.f32.mxu0 %v1180
      %1766 = vmatmul.mubr.f32.gmra.mrb[0].mxu0 %v863
      %v1767 = vpop.f32.mrb[0].mxu0
      %v1768 = vadd.f32 0.0, %v1767
      %v1769 = vpop.f32.mrb[0].mxu0
      %1770 = vmatprep.mubr.f32.mxu0 %v1183
      %1771 = vmatmul.mubr.f32.gmra.mrb[0].mxu0 %v865
      %v1772 = vpop.f32.mrb[0].mxu0
      %v1773 = vadd.f32 0.0, %v1772
      %v1774 = vpop.f32.mrb[0].mxu0
      %1775 = vmatprep.mubr.f32.mxu0 %v1186
      %1776 = vmatmul.mubr.f32.gmra.mrb[0].mxu0 %v867
      %v1777 = vpop.f32.mrb[0].mxu0
      %v1778 = vadd.f32 0.0, %v1777
      %v1779 = vpop.f32.mrb[0].mxu0
      %1780 = vmatprep.mubr.f32.mxu0 %v1189
      %1781 = vmatmul.mubr.f32.gmra.mrb[0].mxu0 %v869
      %v1782 = vpop.f32.mrb[0].mxu0
      %v1783 = vadd.f32 0.0, %v1782
      %v1784 = vpop.f32.mrb[0].mxu0
      %1785 = vmatprep.mubr.f32.mxu0 %v1192
      %1786 = vmatmul.mubr.f32.gmra.mrb[0].mxu0 %v871
      %v1787 = vpop.f32.mrb[0].mxu0
      %v1788 = vadd.f32 0.0, %v1787
      %v1789 = vpop.f32.mrb[0].mxu0
      %1790 = vmatprep.mubr.f32.mxu0 %v1195
      %1791 = vmatmul.mubr.f32.gmra.mrb[0].mxu0 %v873
      %v1792 = vpop.f32.mrb[0].mxu0
      %v1793 = vadd.f32 0.0, %v1792
      %v1794 = vpop.f32.mrb[0].mxu0
      %1795 = vmatprep.mubr.f32.mxu0 %v1198
      %1796 = vmatmul.mubr.f32.gmra.mrb[0].mxu0 %v875
      %v1797 = vpop.f32.mrb[0].mxu0
      %v1798 = vadd.f32 0.0, %v1797
      %v1799 = vpop.f32.mrb[0].mxu0
      %1800 = vmatprep.mubr.f32.mxu0 %v1201
      %1801 = vmatmul.mubr.f32.gmra.mrb[0].mxu0 %v877
      %v1802 = vpop.f32.mrb[0].mxu0
      %v1803 = vadd.f32 0.0, %v1802
      %v1804 = vpop.f32.mrb[0].mxu0
      %1805 = vmatprep.mubr.f32.mxu0 %v1204
      %1806 = vmatmul.mubr.f32.gmra.mrb[0].mxu0 %v879
      %v1807 = vpop.f32.mrb[0].mxu0
      %v1808 = vadd.f32 0.0, %v1807
      %v1809 = vpop.f32.mrb[0].mxu0
      %1810 = vdwg.mxu0
      %v1811 = vld [vmem:[%s4] sm:$0xff]
      %v1812 = vld [vmem:[%s4 + $0x8] sm:$0xff]
      %v1813 = vld [vmem:[%s4 + $0x10] sm:$0xff]
      %v1814 = vld [vmem:[%s4 + $0x18] sm:$0xff]
      %v1815 = vld [vmem:[%s4 + $0x20] sm:$0xff]
      %v1816 = vld [vmem:[%s4 + $0x28] sm:$0xff]
      %v1817 = vld [vmem:[%s4 + $0x30] sm:$0xff]
      %v1818 = vld [vmem:[%s4 + $0x38] sm:$0xff]
      %s1819 = scalar_lea.vmem %s4, 64
      %v1820 = vld [vmem:[%s1819] sm:$0xff]
      %v1821 = vld [vmem:[%s1819 + $0x8] sm:$0xff]
      %v1822 = vld [vmem:[%s1819 + $0x10] sm:$0xff]
      %v1823 = vld [vmem:[%s1819 + $0x18] sm:$0xff]
      %v1824 = vld [vmem:[%s1819 + $0x20] sm:$0xff]
      %v1825 = vld [vmem:[%s1819 + $0x28] sm:$0xff]
      %v1826 = vld [vmem:[%s1819 + $0x30] sm:$0xff]
      %v1827 = vld [vmem:[%s1819 + $0x38] sm:$0xff]
      %v1829 = vsel %vm455, %v1453, 0
      %v1832 = vsel %vm455, %v1458, 0
      %v1835 = vsel %vm455, %v1463, 0
      %v1838 = vsel %vm455, %v1468, 0
      %v1841 = vsel %vm455, %v1473, 0
      %v1844 = vsel %vm455, %v1478, 0
      %v1847 = vsel %vm455, %v1483, 0
      %v1850 = vsel %vm455, %v1488, 0
      %v1853 = vsel %vm455, %v1493, 0
      %v1856 = vsel %vm455, %v1498, 0
      %v1859 = vsel %vm455, %v1503, 0
      %v1862 = vsel %vm455, %v1508, 0
      %v1865 = vsel %vm455, %v1513, 0
      %v1868 = vsel %vm455, %v1518, 0
      %v1871 = vsel %vm455, %v1523, 0
      %v1874 = vsel %vm455, %v1528, 0
      %v1877 = vsel %vm455, %v1533, 0
      %v1880 = vsel %vm455, %v1538, 0
      %v1883 = vsel %vm455, %v1543, 0
      %v1886 = vsel %vm455, %v1548, 0
      %v1889 = vsel %vm455, %v1553, 0
      %v1892 = vsel %vm455, %v1558, 0
      %v1895 = vsel %vm455, %v1563, 0
      %v1898 = vsel %vm455, %v1568, 0
      %v1901 = vsel %vm455, %v1573, 0
      %v1904 = vsel %vm455, %v1578, 0
      %v1907 = vsel %vm455, %v1583, 0
      %v1910 = vsel %vm455, %v1588, 0
      %v1913 = vsel %vm455, %v1593, 0
      %v1916 = vsel %vm455, %v1598, 0
      %v1919 = vsel %vm455, %v1603, 0
      %v1922 = vsel %vm455, %v1608, 0
      %1924 = vmatprep.subr.mxu0 0.0
      %1925 = vmatpush1.msra.mxu0 %v1820
      %1926 = vmatprep.subr.mxu0 0.0
      %1927 = vmatpush1.msra.mxu0 %v1821
      %1928 = vmatprep.subr.mxu0 0.0
      %1929 = vmatpush1.msra.mxu0 %v1822
      %1930 = vmatprep.subr.mxu0 0.0
      %1931 = vmatpush1.msra.mxu0 %v1823
      %1932 = vmatprep.subr.mxu0 0.0
      %1933 = vmatpush1.msra.mxu0 %v1824
      %1934 = vmatprep.subr.mxu0 0.0
      %1935 = vmatpush1.msra.mxu0 %v1825
      %1936 = vmatprep.subr.mxu0 0.0
      %1937 = vmatpush1.msra.mxu0 %v1826
      %1938 = vmatprep.subr.mxu0 0.0
      %1939 = vmatpush1.msra.mxu0 %v1827
      %1940 = vmatprep.subr.mxu0 0.0
      %1941 = vmatpush1.msra.mxu0 0.0
      %1942 = vmatprep.subr.mxu0 0.0
      %1943 = vmatpush1.msra.mxu0 0.0
      %1944 = vmatprep.subr.mxu0 0.0
      %1945 = vmatpush1.msra.mxu0 0.0
      %1946 = vmatprep.subr.mxu0 0.0
      %1947 = vmatpush1.msra.mxu0 0.0
      %1948 = vmatprep.subr.mxu0 0.0
      %1949 = vmatpush1.msra.mxu0 0.0
      %1950 = vmatprep.subr.mxu0 0.0
      %1951 = vmatpush1.msra.mxu0 0.0
      %1952 = vmatprep.subr.mxu0 0.0
      %1953 = vmatpush1.msra.mxu0 0.0
      %1954 = vmatprep.subr.mxu0 0.0
      %1955 = vmatpush1.msra.mxu0 0.0
      %1956 = vmatprep.subr.mxu0 0.0
      %1957 = vmatpush1.msra.mxu0 0.0
      %1958 = vmatprep.subr.mxu0 0.0
      %1959 = vmatpush1.msra.mxu0 0.0
      %1960 = vmatprep.subr.mxu0 0.0
      %1961 = vmatpush1.msra.mxu0 0.0
      %1962 = vmatprep.subr.mxu0 0.0
      %1963 = vmatpush1.msra.mxu0 0.0
      %1964 = vmatprep.subr.mxu0 0.0
      %1965 = vmatpush1.msra.mxu0 0.0
      %1966 = vmatprep.subr.mxu0 0.0
      %1967 = vmatpush1.msra.mxu0 0.0
      %1968 = vmatprep.subr.mxu0 0.0
      %1969 = vmatpush1.msra.mxu0 0.0
      %1970 = vmatprep.subr.mxu0 0.0
      %1971 = vmatpush1.msra.mxu0 0.0
      %1972 = vmatprep.subr.mxu0 0.0
      %1973 = vmatpush1.msra.mxu0 0.0
      %1974 = vmatprep.subr.mxu0 0.0
      %1975 = vmatpush1.msra.mxu0 0.0
      %1976 = vmatprep.subr.mxu0 0.0
      %1977 = vmatpush1.msra.mxu0 0.0
      %1978 = vmatprep.subr.mxu0 0.0
      %1979 = vmatpush1.msra.mxu0 0.0
      %1980 = vmatprep.subr.mxu0 0.0
      %1981 = vmatpush1.msra.mxu0 0.0
      %1982 = vmatprep.subr.mxu0 0.0
      %1983 = vmatpush1.msra.mxu0 0.0
      %1984 = vmatprep.subr.mxu0 0.0
      %1985 = vmatpush1.msra.mxu0 0.0
      %1986 = vmatprep.subr.mxu0 0.0
      %1987 = vmatpush1.msra.mxu0 0.0
      %1988 = vmatprep.mubr.f32.mxu0 0.0
      %1989 = vmatmul.mubr.f32.gmra.mrb[0].mxu0 %v1829
      %v1990 = vpop.f32.mrb[0].mxu0
      %v1991 = vadd.f32 0.0, %v1990
      %v1992 = vpop.f32.mrb[0].mxu0
      %1993 = vmatprep.mubr.f32.mxu0 0.0
      %1994 = vmatmul.mubr.f32.gmra.mrb[0].mxu0 %v1832
      %v1995 = vpop.f32.mrb[0].mxu0
      %v1996 = vadd.f32 0.0, %v1995
      %v1997 = vpop.f32.mrb[0].mxu0
      %1998 = vmatprep.mubr.f32.mxu0 0.0
      %1999 = vmatmul.mubr.f32.gmra.mrb[0].mxu0 %v1835
      %v2000 = vpop.f32.mrb[0].mxu0
      %v2001 = vadd.f32 0.0, %v2000
      %v2002 = vpop.f32.mrb[0].mxu0
      %2003 = vmatprep.mubr.f32.mxu0 0.0
      %2004 = vmatmul.mubr.f32.gmra.mrb[0].mxu0 %v1838
      %v2005 = vpop.f32.mrb[0].mxu0
      %v2006 = vadd.f32 0.0, %v2005
      %v2007 = vpop.f32.mrb[0].mxu0
      %2008 = vmatprep.mubr.f32.mxu0 0.0
      %2009 = vmatmul.mubr.f32.gmra.mrb[0].mxu0 %v1841
      %v2010 = vpop.f32.mrb[0].mxu0
      %v2011 = vadd.f32 0.0, %v2010
      %v2012 = vpop.f32.mrb[0].mxu0
      %2013 = vmatprep.mubr.f32.mxu0 0.0
      %2014 = vmatmul.mubr.f32.gmra.mrb[0].mxu0 %v1844
      %v2015 = vpop.f32.mrb[0].mxu0
      %v2016 = vadd.f32 0.0, %v2015
      %v2017 = vpop.f32.mrb[0].mxu0
      %2018 = vmatprep.mubr.f32.mxu0 0.0
      %2019 = vmatmul.mubr.f32.gmra.mrb[0].mxu0 %v1847
      %v2020 = vpop.f32.mrb[0].mxu0
      %v2021 = vadd.f32 0.0, %v2020
      %v2022 = vpop.f32.mrb[0].mxu0
      %2023 = vmatprep.mubr.f32.mxu0 0.0
      %2024 = vmatmul.mubr.f32.gmra.mrb[0].mxu0 %v1850
      %v2025 = vpop.f32.mrb[0].mxu0
      %v2026 = vadd.f32 0.0, %v2025
      %v2027 = vpop.f32.mrb[0].mxu0
      %2028 = vmatprep.mubr.f32.mxu0 0.0
      %2029 = vmatmul.mubr.f32.gmra.mrb[0].mxu0 %v1853
      %v2030 = vpop.f32.mrb[0].mxu0
      %v2031 = vadd.f32 0.0, %v2030
      %v2032 = vpop.f32.mrb[0].mxu0
      %2033 = vmatprep.mubr.f32.mxu0 0.0
      %2034 = vmatmul.mubr.f32.gmra.mrb[0].mxu0 %v1856
      %v2035 = vpop.f32.mrb[0].mxu0
      %v2036 = vadd.f32 0.0, %v2035
      %v2037 = vpop.f32.mrb[0].mxu0
      %2038 = vmatprep.mubr.f32.mxu0 0.0
      %2039 = vmatmul.mubr.f32.gmra.mrb[0].mxu0 %v1859
      %v2040 = vpop.f32.mrb[0].mxu0
      %v2041 = vadd.f32 0.0, %v2040
      %v2042 = vpop.f32.mrb[0].mxu0
      %2043 = vmatprep.mubr.f32.mxu0 0.0
      %2044 = vmatmul.mubr.f32.gmra.mrb[0].mxu0 %v1862
      %v2045 = vpop.f32.mrb[0].mxu0
      %v2046 = vadd.f32 0.0, %v2045
      %v2047 = vpop.f32.mrb[0].mxu0
      %2048 = vmatprep.mubr.f32.mxu0 0.0
      %2049 = vmatmul.mubr.f32.gmra.mrb[0].mxu0 %v1865
      %v2050 = vpop.f32.mrb[0].mxu0
      %v2051 = vadd.f32 0.0, %v2050
      %v2052 = vpop.f32.mrb[0].mxu0
      %2053 = vmatprep.mubr.f32.mxu0 0.0
      %2054 = vmatmul.mubr.f32.gmra.mrb[0].mxu0 %v1868
      %v2055 = vpop.f32.mrb[0].mxu0
      %v2056 = vadd.f32 0.0, %v2055
      %v2057 = vpop.f32.mrb[0].mxu0
      %2058 = vmatprep.mubr.f32.mxu0 0.0
      %2059 = vmatmul.mubr.f32.gmra.mrb[0].mxu0 %v1871
      %v2060 = vpop.f32.mrb[0].mxu0
      %v2061 = vadd.f32 0.0, %v2060
      %v2062 = vpop.f32.mrb[0].mxu0
      %2063 = vmatprep.mubr.f32.mxu0 0.0
      %2064 = vmatmul.mubr.f32.gmra.mrb[0].mxu0 %v1874
      %v2065 = vpop.f32.mrb[0].mxu0
      %v2066 = vadd.f32 0.0, %v2065
      %v2067 = vpop.f32.mrb[0].mxu0
      %2068 = vmatprep.mubr.f32.mxu0 0.0
      %2069 = vmatmul.mubr.f32.gmra.mrb[0].mxu0 %v1877
      %v2070 = vpop.f32.mrb[0].mxu0
      %v2071 = vadd.f32 0.0, %v2070
      %v2072 = vpop.f32.mrb[0].mxu0
      %2073 = vmatprep.mubr.f32.mxu0 0.0
      %2074 = vmatmul.mubr.f32.gmra.mrb[0].mxu0 %v1880
      %v2075 = vpop.f32.mrb[0].mxu0
      %v2076 = vadd.f32 0.0, %v2075
      %v2077 = vpop.f32.mrb[0].mxu0
      %2078 = vmatprep.mubr.f32.mxu0 0.0
      %2079 = vmatmul.mubr.f32.gmra.mrb[0].mxu0 %v1883
      %v2080 = vpop.f32.mrb[0].mxu0
      %v2081 = vadd.f32 0.0, %v2080
      %v2082 = vpop.f32.mrb[0].mxu0
      %2083 = vmatprep.mubr.f32.mxu0 0.0
      %2084 = vmatmul.mubr.f32.gmra.mrb[0].mxu0 %v1886
      %v2085 = vpop.f32.mrb[0].mxu0
      %v2086 = vadd.f32 0.0, %v2085
      %v2087 = vpop.f32.mrb[0].mxu0
      %2088 = vmatprep.mubr.f32.mxu0 0.0
      %2089 = vmatmul.mubr.f32.gmra.mrb[0].mxu0 %v1889
      %v2090 = vpop.f32.mrb[0].mxu0
      %v2091 = vadd.f32 0.0, %v2090
      %v2092 = vpop.f32.mrb[0].mxu0
      %2093 = vmatprep.mubr.f32.mxu0 0.0
      %2094 = vmatmul.mubr.f32.gmra.mrb[0].mxu0 %v1892
      %v2095 = vpop.f32.mrb[0].mxu0
      %v2096 = vadd.f32 0.0, %v2095
      %v2097 = vpop.f32.mrb[0].mxu0
      %2098 = vmatprep.mubr.f32.mxu0 0.0
      %2099 = vmatmul.mubr.f32.gmra.mrb[0].mxu0 %v1895
      %v2100 = vpop.f32.mrb[0].mxu0
      %v2101 = vadd.f32 0.0, %v2100
      %v2102 = vpop.f32.mrb[0].mxu0
      %2103 = vmatprep.mubr.f32.mxu0 0.0
      %2104 = vmatmul.mubr.f32.gmra.mrb[0].mxu0 %v1898
      %v2105 = vpop.f32.mrb[0].mxu0
      %v2106 = vadd.f32 0.0, %v2105
      %v2107 = vpop.f32.mrb[0].mxu0
      %2108 = vmatprep.mubr.f32.mxu0 0.0
      %2109 = vmatmul.mubr.f32.gmra.mrb[0].mxu0 %v1901
      %v2110 = vpop.f32.mrb[0].mxu0
      %v2111 = vadd.f32 0.0, %v2110
      %v2112 = vpop.f32.mrb[0].mxu0
      %2113 = vmatprep.mubr.f32.mxu0 0.0
      %2114 = vmatmul.mubr.f32.gmra.mrb[0].mxu0 %v1904
      %v2115 = vpop.f32.mrb[0].mxu0
      %v2116 = vadd.f32 0.0, %v2115
      %v2117 = vpop.f32.mrb[0].mxu0
      %2118 = vmatprep.mubr.f32.mxu0 0.0
      %2119 = vmatmul.mubr.f32.gmra.mrb[0].mxu0 %v1907
      %v2120 = vpop.f32.mrb[0].mxu0
      %v2121 = vadd.f32 0.0, %v2120
      %v2122 = vpop.f32.mrb[0].mxu0
      %2123 = vmatprep.mubr.f32.mxu0 0.0
      %2124 = vmatmul.mubr.f32.gmra.mrb[0].mxu0 %v1910
      %v2125 = vpop.f32.mrb[0].mxu0
      %v2126 = vadd.f32 0.0, %v2125
      %v2127 = vpop.f32.mrb[0].mxu0
      %2128 = vmatprep.mubr.f32.mxu0 0.0
      %2129 = vmatmul.mubr.f32.gmra.mrb[0].mxu0 %v1913
      %v2130 = vpop.f32.mrb[0].mxu0
      %v2131 = vadd.f32 0.0, %v2130
      %v2132 = vpop.f32.mrb[0].mxu0
      %2133 = vmatprep.mubr.f32.mxu0 0.0
      %2134 = vmatmul.mubr.f32.gmra.mrb[0].mxu0 %v1916
      %v2135 = vpop.f32.mrb[0].mxu0
      %v2136 = vadd.f32 0.0, %v2135
      %v2137 = vpop.f32.mrb[0].mxu0
      %2138 = vmatprep.mubr.f32.mxu0 0.0
      %2139 = vmatmul.mubr.f32.gmra.mrb[0].mxu0 %v1919
      %v2140 = vpop.f32.mrb[0].mxu0
      %v2141 = vadd.f32 0.0, %v2140
      %v2142 = vpop.f32.mrb[0].mxu0
      %2143 = vmatprep.mubr.f32.mxu0 0.0
      %2144 = vmatmul.mubr.f32.gmra.mrb[0].mxu0 %v1922
      %v2145 = vpop.f32.mrb[0].mxu0
      %v2146 = vadd.f32 0.0, %v2145
      %v2147 = vpop.f32.mrb[0].mxu0
      %2148 = vdwg.mxu0
      %v2150 = vsel %vm455, %v1273, 0
      %v2153 = vsel %vm455, %v1278, 0
      %v2156 = vsel %vm455, %v1283, 0
      %v2159 = vsel %vm455, %v1288, 0
      %v2162 = vsel %vm455, %v1293, 0
      %v2165 = vsel %vm455, %v1298, 0
      %v2168 = vsel %vm455, %v1303, 0
      %v2171 = vsel %vm455, %v1308, 0
      %v2174 = vsel %vm455, %v1313, 0
      %v2177 = vsel %vm455, %v1318, 0
      %v2180 = vsel %vm455, %v1323, 0
      %v2183 = vsel %vm455, %v1328, 0
      %v2186 = vsel %vm455, %v1333, 0
      %v2189 = vsel %vm455, %v1338, 0
      %v2192 = vsel %vm455, %v1343, 0
      %v2195 = vsel %vm455, %v1348, 0
      %v2198 = vsel %vm455, %v1353, 0
      %v2201 = vsel %vm455, %v1358, 0
      %v2204 = vsel %vm455, %v1363, 0
      %v2207 = vsel %vm455, %v1368, 0
      %v2210 = vsel %vm455, %v1373, 0
      %v2213 = vsel %vm455, %v1378, 0
      %v2216 = vsel %vm455, %v1383, 0
      %v2219 = vsel %vm455, %v1388, 0
      %v2222 = vsel %vm455, %v1393, 0
      %v2225 = vsel %vm455, %v1398, 0
      %v2228 = vsel %vm455, %v1403, 0
      %v2231 = vsel %vm455, %v1408, 0
      %v2234 = vsel %vm455, %v1413, 0
      %v2237 = vsel %vm455, %v1418, 0
      %v2240 = vsel %vm455, %v1423, 0
      %v2243 = vsel %vm455, %v1428, 0
      %2245 = vmatprep.subr.mxu0 0.0
      %2246 = vmatpush1.msra.mxu0 %v1811
      %2247 = vmatprep.subr.mxu0 0.0
      %2248 = vmatpush1.msra.mxu0 %v1812
      %2249 = vmatprep.subr.mxu0 0.0
      %2250 = vmatpush1.msra.mxu0 %v1813
      %2251 = vmatprep.subr.mxu0 0.0
      %2252 = vmatpush1.msra.mxu0 %v1814
      %2253 = vmatprep.subr.mxu0 0.0
      %2254 = vmatpush1.msra.mxu0 %v1815
      %2255 = vmatprep.subr.mxu0 0.0
      %2256 = vmatpush1.msra.mxu0 %v1816
      %2257 = vmatprep.subr.mxu0 0.0
      %2258 = vmatpush1.msra.mxu0 %v1817
      %2259 = vmatprep.subr.mxu0 0.0
      %2260 = vmatpush1.msra.mxu0 %v1818
      %2261 = vmatprep.subr.mxu0 0.0
      %2262 = vmatpush1.msra.mxu0 0.0
      %2263 = vmatprep.subr.mxu0 0.0
      %2264 = vmatpush1.msra.mxu0 0.0
      %2265 = vmatprep.subr.mxu0 0.0
      %2266 = vmatpush1.msra.mxu0 0.0
      %2267 = vmatprep.subr.mxu0 0.0
      %2268 = vmatpush1.msra.mxu0 0.0
      %2269 = vmatprep.subr.mxu0 0.0
      %2270 = vmatpush1.msra.mxu0 0.0
      %2271 = vmatprep.subr.mxu0 0.0
      %2272 = vmatpush1.msra.mxu0 0.0
      %2273 = vmatprep.subr.mxu0 0.0
      %2274 = vmatpush1.msra.mxu0 0.0
      %2275 = vmatprep.subr.mxu0 0.0
      %2276 = vmatpush1.msra.mxu0 0.0
      %2277 = vmatprep.subr.mxu0 0.0
      %2278 = vmatpush1.msra.mxu0 0.0
      %2279 = vmatprep.subr.mxu0 0.0
      %2280 = vmatpush1.msra.mxu0 0.0
      %2281 = vmatprep.subr.mxu0 0.0
      %2282 = vmatpush1.msra.mxu0 0.0
      %2283 = vmatprep.subr.mxu0 0.0
      %2284 = vmatpush1.msra.mxu0 0.0
      %2285 = vmatprep.subr.mxu0 0.0
      %2286 = vmatpush1.msra.mxu0 0.0
      %2287 = vmatprep.subr.mxu0 0.0
      %2288 = vmatpush1.msra.mxu0 0.0
      %2289 = vmatprep.subr.mxu0 0.0
      %2290 = vmatpush1.msra.mxu0 0.0
      %2291 = vmatprep.subr.mxu0 0.0
      %2292 = vmatpush1.msra.mxu0 0.0
      %2293 = vmatprep.subr.mxu0 0.0
      %2294 = vmatpush1.msra.mxu0 0.0
      %2295 = vmatprep.subr.mxu0 0.0
      %2296 = vmatpush1.msra.mxu0 0.0
      %2297 = vmatprep.subr.mxu0 0.0
      %2298 = vmatpush1.msra.mxu0 0.0
      %2299 = vmatprep.subr.mxu0 0.0
      %2300 = vmatpush1.msra.mxu0 0.0
      %2301 = vmatprep.subr.mxu0 0.0
      %2302 = vmatpush1.msra.mxu0 0.0
      %2303 = vmatprep.subr.mxu0 0.0
      %2304 = vmatpush1.msra.mxu0 0.0
      %2305 = vmatprep.subr.mxu0 0.0
      %2306 = vmatpush1.msra.mxu0 0.0
      %2307 = vmatprep.subr.mxu0 0.0
      %2308 = vmatpush1.msra.mxu0 0.0
      %2309 = vmatprep.mubr.f32.mxu0 0.0
      %2310 = vmatmul.mubr.f32.gmra.mrb[0].mxu0 %v2150
      %v2311 = vpop.f32.mrb[0].mxu0
      %v2312 = vadd.f32 %v1991, %v2311
      %v2313 = vpop.f32.mrb[0].mxu0
      %2314 = vmatprep.mubr.f32.mxu0 0.0
      %2315 = vmatmul.mubr.f32.gmra.mrb[0].mxu0 %v2153
      %v2316 = vpop.f32.mrb[0].mxu0
      %v2317 = vadd.f32 %v1996, %v2316
      %v2318 = vpop.f32.mrb[0].mxu0
      %2319 = vmatprep.mubr.f32.mxu0 0.0
      %2320 = vmatmul.mubr.f32.gmra.mrb[0].mxu0 %v2156
      %v2321 = vpop.f32.mrb[0].mxu0
      %v2322 = vadd.f32 %v2001, %v2321
      %v2323 = vpop.f32.mrb[0].mxu0
      %2324 = vmatprep.mubr.f32.mxu0 0.0
      %2325 = vmatmul.mubr.f32.gmra.mrb[0].mxu0 %v2159
      %v2326 = vpop.f32.mrb[0].mxu0
      %v2327 = vadd.f32 %v2006, %v2326
      %v2328 = vpop.f32.mrb[0].mxu0
      %2329 = vmatprep.mubr.f32.mxu0 0.0
      %2330 = vmatmul.mubr.f32.gmra.mrb[0].mxu0 %v2162
      %v2331 = vpop.f32.mrb[0].mxu0
      %v2332 = vadd.f32 %v2011, %v2331
      %v2333 = vpop.f32.mrb[0].mxu0
      %2334 = vmatprep.mubr.f32.mxu0 0.0
      %2335 = vmatmul.mubr.f32.gmra.mrb[0].mxu0 %v2165
      %v2336 = vpop.f32.mrb[0].mxu0
      %v2337 = vadd.f32 %v2016, %v2336
      %v2338 = vpop.f32.mrb[0].mxu0
      %2339 = vmatprep.mubr.f32.mxu0 0.0
      %2340 = vmatmul.mubr.f32.gmra.mrb[0].mxu0 %v2168
      %v2341 = vpop.f32.mrb[0].mxu0
      %v2342 = vadd.f32 %v2021, %v2341
      %v2343 = vpop.f32.mrb[0].mxu0
      %2344 = vmatprep.mubr.f32.mxu0 0.0
      %2345 = vmatmul.mubr.f32.gmra.mrb[0].mxu0 %v2171
      %v2346 = vpop.f32.mrb[0].mxu0
      %v2347 = vadd.f32 %v2026, %v2346
      %v2348 = vpop.f32.mrb[0].mxu0
      %2349 = vmatprep.mubr.f32.mxu0 0.0
      %2350 = vmatmul.mubr.f32.gmra.mrb[0].mxu0 %v2174
      %v2351 = vpop.f32.mrb[0].mxu0
      %v2352 = vadd.f32 %v2031, %v2351
      %v2353 = vpop.f32.mrb[0].mxu0
      %2354 = vmatprep.mubr.f32.mxu0 0.0
      %2355 = vmatmul.mubr.f32.gmra.mrb[0].mxu0 %v2177
      %v2356 = vpop.f32.mrb[0].mxu0
      %v2357 = vadd.f32 %v2036, %v2356
      %v2358 = vpop.f32.mrb[0].mxu0
      %2359 = vmatprep.mubr.f32.mxu0 0.0
      %2360 = vmatmul.mubr.f32.gmra.mrb[0].mxu0 %v2180
      %v2361 = vpop.f32.mrb[0].mxu0
      %v2362 = vadd.f32 %v2041, %v2361
      %v2363 = vpop.f32.mrb[0].mxu0
      %2364 = vmatprep.mubr.f32.mxu0 0.0
      %2365 = vmatmul.mubr.f32.gmra.mrb[0].mxu0 %v2183
      %v2366 = vpop.f32.mrb[0].mxu0
      %v2367 = vadd.f32 %v2046, %v2366
      %v2368 = vpop.f32.mrb[0].mxu0
      %2369 = vmatprep.mubr.f32.mxu0 0.0
      %2370 = vmatmul.mubr.f32.gmra.mrb[0].mxu0 %v2186
      %v2371 = vpop.f32.mrb[0].mxu0
      %v2372 = vadd.f32 %v2051, %v2371
      %v2373 = vpop.f32.mrb[0].mxu0
      %2374 = vmatprep.mubr.f32.mxu0 0.0
      %2375 = vmatmul.mubr.f32.gmra.mrb[0].mxu0 %v2189
      %v2376 = vpop.f32.mrb[0].mxu0
      %v2377 = vadd.f32 %v2056, %v2376
      %v2378 = vpop.f32.mrb[0].mxu0
      %2379 = vmatprep.mubr.f32.mxu0 0.0
      %2380 = vmatmul.mubr.f32.gmra.mrb[0].mxu0 %v2192
      %v2381 = vpop.f32.mrb[0].mxu0
      %v2382 = vadd.f32 %v2061, %v2381
      %v2383 = vpop.f32.mrb[0].mxu0
      %2384 = vmatprep.mubr.f32.mxu0 0.0
      %2385 = vmatmul.mubr.f32.gmra.mrb[0].mxu0 %v2195
      %v2386 = vpop.f32.mrb[0].mxu0
      %v2387 = vadd.f32 %v2066, %v2386
      %v2388 = vpop.f32.mrb[0].mxu0
      %2389 = vmatprep.mubr.f32.mxu0 0.0
      %2390 = vmatmul.mubr.f32.gmra.mrb[0].mxu0 %v2198
      %v2391 = vpop.f32.mrb[0].mxu0
      %v2392 = vadd.f32 %v2071, %v2391
      %v2393 = vpop.f32.mrb[0].mxu0
      %2394 = vmatprep.mubr.f32.mxu0 0.0
      %2395 = vmatmul.mubr.f32.gmra.mrb[0].mxu0 %v2201
      %v2396 = vpop.f32.mrb[0].mxu0
      %v2397 = vadd.f32 %v2076, %v2396
      %v2398 = vpop.f32.mrb[0].mxu0
      %2399 = vmatprep.mubr.f32.mxu0 0.0
      %2400 = vmatmul.mubr.f32.gmra.mrb[0].mxu0 %v2204
      %v2401 = vpop.f32.mrb[0].mxu0
      %v2402 = vadd.f32 %v2081, %v2401
      %v2403 = vpop.f32.mrb[0].mxu0
      %2404 = vmatprep.mubr.f32.mxu0 0.0
      %2405 = vmatmul.mubr.f32.gmra.mrb[0].mxu0 %v2207
      %v2406 = vpop.f32.mrb[0].mxu0
      %v2407 = vadd.f32 %v2086, %v2406
      %v2408 = vpop.f32.mrb[0].mxu0
      %2409 = vmatprep.mubr.f32.mxu0 0.0
      %2410 = vmatmul.mubr.f32.gmra.mrb[0].mxu0 %v2210
      %v2411 = vpop.f32.mrb[0].mxu0
      %v2412 = vadd.f32 %v2091, %v2411
      %v2413 = vpop.f32.mrb[0].mxu0
      %2414 = vmatprep.mubr.f32.mxu0 0.0
      %2415 = vmatmul.mubr.f32.gmra.mrb[0].mxu0 %v2213
      %v2416 = vpop.f32.mrb[0].mxu0
      %v2417 = vadd.f32 %v2096, %v2416
      %v2418 = vpop.f32.mrb[0].mxu0
      %2419 = vmatprep.mubr.f32.mxu0 0.0
      %2420 = vmatmul.mubr.f32.gmra.mrb[0].mxu0 %v2216
      %v2421 = vpop.f32.mrb[0].mxu0
      %v2422 = vadd.f32 %v2101, %v2421
      %v2423 = vpop.f32.mrb[0].mxu0
      %2424 = vmatprep.mubr.f32.mxu0 0.0
      %2425 = vmatmul.mubr.f32.gmra.mrb[0].mxu0 %v2219
      %v2426 = vpop.f32.mrb[0].mxu0
      %v2427 = vadd.f32 %v2106, %v2426
      %v2428 = vpop.f32.mrb[0].mxu0
      %2429 = vmatprep.mubr.f32.mxu0 0.0
      %2430 = vmatmul.mubr.f32.gmra.mrb[0].mxu0 %v2222
      %v2431 = vpop.f32.mrb[0].mxu0
      %v2432 = vadd.f32 %v2111, %v2431
      %v2433 = vpop.f32.mrb[0].mxu0
      %2434 = vmatprep.mubr.f32.mxu0 0.0
      %2435 = vmatmul.mubr.f32.gmra.mrb[0].mxu0 %v2225
      %v2436 = vpop.f32.mrb[0].mxu0
      %v2437 = vadd.f32 %v2116, %v2436
      %v2438 = vpop.f32.mrb[0].mxu0
      %2439 = vmatprep.mubr.f32.mxu0 0.0
      %2440 = vmatmul.mubr.f32.gmra.mrb[0].mxu0 %v2228
      %v2441 = vpop.f32.mrb[0].mxu0
      %v2442 = vadd.f32 %v2121, %v2441
      %v2443 = vpop.f32.mrb[0].mxu0
      %2444 = vmatprep.mubr.f32.mxu0 0.0
      %2445 = vmatmul.mubr.f32.gmra.mrb[0].mxu0 %v2231
      %v2446 = vpop.f32.mrb[0].mxu0
      %v2447 = vadd.f32 %v2126, %v2446
      %v2448 = vpop.f32.mrb[0].mxu0
      %2449 = vmatprep.mubr.f32.mxu0 0.0
      %2450 = vmatmul.mubr.f32.gmra.mrb[0].mxu0 %v2234
      %v2451 = vpop.f32.mrb[0].mxu0
      %v2452 = vadd.f32 %v2131, %v2451
      %v2453 = vpop.f32.mrb[0].mxu0
      %2454 = vmatprep.mubr.f32.mxu0 0.0
      %2455 = vmatmul.mubr.f32.gmra.mrb[0].mxu0 %v2237
      %v2456 = vpop.f32.mrb[0].mxu0
      %v2457 = vadd.f32 %v2136, %v2456
      %v2458 = vpop.f32.mrb[0].mxu0
      %2459 = vmatprep.mubr.f32.mxu0 0.0
      %2460 = vmatmul.mubr.f32.gmra.mrb[0].mxu0 %v2240
      %v2461 = vpop.f32.mrb[0].mxu0
      %v2462 = vadd.f32 %v2141, %v2461
      %v2463 = vpop.f32.mrb[0].mxu0
      %2464 = vmatprep.mubr.f32.mxu0 0.0
      %2465 = vmatmul.mubr.f32.gmra.mrb[0].mxu0 %v2243
      %v2466 = vpop.f32.mrb[0].mxu0
      %v2467 = vadd.f32 %v2146, %v2466
      %v2468 = vpop.f32.mrb[0].mxu0
      %2469 = vdwg.mxu0
      %s2470 = scalar_lea.vmem %s4, 128
      %v2471 = vld [vmem:[%s2470] sm:$0xff]
      %v2472 = vld [vmem:[%s2470 + $0x8] sm:$0xff]
      %v2473 = vld [vmem:[%s2470 + $0x10] sm:$0xff]
      %v2474 = vld [vmem:[%s2470 + $0x18] sm:$0xff]
      %v2475 = vld [vmem:[%s2470 + $0x20] sm:$0xff]
      %v2476 = vld [vmem:[%s2470 + $0x28] sm:$0xff]
      %v2477 = vld [vmem:[%s2470 + $0x30] sm:$0xff]
      %v2478 = vld [vmem:[%s2470 + $0x38] sm:$0xff]
      %v2480 = vsel %vm455, %v1633, 0
      %v2483 = vsel %vm455, %v1638, 0
      %v2486 = vsel %vm455, %v1643, 0
      %v2489 = vsel %vm455, %v1648, 0
      %v2492 = vsel %vm455, %v1653, 0
      %v2495 = vsel %vm455, %v1658, 0
      %v2498 = vsel %vm455, %v1663, 0
      %v2501 = vsel %vm455, %v1668, 0
      %v2504 = vsel %vm455, %v1673, 0
      %v2507 = vsel %vm455, %v1678, 0
      %v2510 = vsel %vm455, %v1683, 0
      %v2513 = vsel %vm455, %v1688, 0
      %v2516 = vsel %vm455, %v1693, 0
      %v2519 = vsel %vm455, %v1698, 0
      %v2522 = vsel %vm455, %v1703, 0
      %v2525 = vsel %vm455, %v1708, 0
      %v2528 = vsel %vm455, %v1713, 0
      %v2531 = vsel %vm455, %v1718, 0
      %v2534 = vsel %vm455, %v1723, 0
      %v2537 = vsel %vm455, %v1728, 0
      %v2540 = vsel %vm455, %v1733, 0
      %v2543 = vsel %vm455, %v1738, 0
      %v2546 = vsel %vm455, %v1743, 0
      %v2549 = vsel %vm455, %v1748, 0
      %v2552 = vsel %vm455, %v1753, 0
      %v2555 = vsel %vm455, %v1758, 0
      %v2558 = vsel %vm455, %v1763, 0
      %v2561 = vsel %vm455, %v1768, 0
      %v2564 = vsel %vm455, %v1773, 0
      %v2567 = vsel %vm455, %v1778, 0
      %v2570 = vsel %vm455, %v1783, 0
      %v2573 = vsel %vm455, %v1788, 0
      %2575 = vmatprep.subr.mxu0 0.0
      %2576 = vmatpush1.msra.mxu0 %v2471
      %2577 = vmatprep.subr.mxu0 0.0
      %2578 = vmatpush1.msra.mxu0 %v2472
      %2579 = vmatprep.subr.mxu0 0.0
      %2580 = vmatpush1.msra.mxu0 %v2473
      %2581 = vmatprep.subr.mxu0 0.0
      %2582 = vmatpush1.msra.mxu0 %v2474
      %2583 = vmatprep.subr.mxu0 0.0
      %2584 = vmatpush1.msra.mxu0 %v2475
      %2585 = vmatprep.subr.mxu0 0.0
      %2586 = vmatpush1.msra.mxu0 %v2476
      %2587 = vmatprep.subr.mxu0 0.0
      %2588 = vmatpush1.msra.mxu0 %v2477
      %2589 = vmatprep.subr.mxu0 0.0
      %2590 = vmatpush1.msra.mxu0 %v2478
      %2591 = vmatprep.subr.mxu0 0.0
      %2592 = vmatpush1.msra.mxu0 0.0
      %2593 = vmatprep.subr.mxu0 0.0
      %2594 = vmatpush1.msra.mxu0 0.0
      %2595 = vmatprep.subr.mxu0 0.0
      %2596 = vmatpush1.msra.mxu0 0.0
      %2597 = vmatprep.subr.mxu0 0.0
      %2598 = vmatpush1.msra.mxu0 0.0
      %2599 = vmatprep.subr.mxu0 0.0
      %2600 = vmatpush1.msra.mxu0 0.0
      %2601 = vmatprep.subr.mxu0 0.0
      %2602 = vmatpush1.msra.mxu0 0.0
      %2603 = vmatprep.subr.mxu0 0.0
      %2604 = vmatpush1.msra.mxu0 0.0
      %2605 = vmatprep.subr.mxu0 0.0
      %2606 = vmatpush1.msra.mxu0 0.0
      %2607 = vmatprep.subr.mxu0 0.0
      %2608 = vmatpush1.msra.mxu0 0.0
      %2609 = vmatprep.subr.mxu0 0.0
      %2610 = vmatpush1.msra.mxu0 0.0
      %2611 = vmatprep.subr.mxu0 0.0
      %2612 = vmatpush1.msra.mxu0 0.0
      %2613 = vmatprep.subr.mxu0 0.0
      %2614 = vmatpush1.msra.mxu0 0.0
      %2615 = vmatprep.subr.mxu0 0.0
      %2616 = vmatpush1.msra.mxu0 0.0
      %2617 = vmatprep.subr.mxu0 0.0
      %2618 = vmatpush1.msra.mxu0 0.0
      %2619 = vmatprep.subr.mxu0 0.0
      %2620 = vmatpush1.msra.mxu0 0.0
      %2621 = vmatprep.subr.mxu0 0.0
      %2622 = vmatpush1.msra.mxu0 0.0
      %2623 = vmatprep.subr.mxu0 0.0
      %2624 = vmatpush1.msra.mxu0 0.0
      %2625 = vmatprep.subr.mxu0 0.0
      %2626 = vmatpush1.msra.mxu0 0.0
      %2627 = vmatprep.subr.mxu0 0.0
      %2628 = vmatpush1.msra.mxu0 0.0
      %2629 = vmatprep.subr.mxu0 0.0
      %2630 = vmatpush1.msra.mxu0 0.0
      %2631 = vmatprep.subr.mxu0 0.0
      %2632 = vmatpush1.msra.mxu0 0.0
      %2633 = vmatprep.subr.mxu0 0.0
      %2634 = vmatpush1.msra.mxu0 0.0
      %2635 = vmatprep.subr.mxu0 0.0
      %2636 = vmatpush1.msra.mxu0 0.0
      %2637 = vmatprep.subr.mxu0 0.0
      %2638 = vmatpush1.msra.mxu0 0.0
      %2639 = vmatprep.mubr.f32.mxu0 0.0
      %2640 = vmatmul.mubr.f32.gmra.mrb[0].mxu0 %v2480
      %v2641 = vpop.f32.mrb[0].mxu0
      %v2642 = vadd.f32 0.0, %v2641
      %v2643 = vpop.f32.mrb[0].mxu0
      %2644 = vmatprep.mubr.f32.mxu0 0.0
      %2645 = vmatmul.mubr.f32.gmra.mrb[0].mxu0 %v2483
      %v2646 = vpop.f32.mrb[0].mxu0
      %v2647 = vadd.f32 0.0, %v2646
      %v2648 = vpop.f32.mrb[0].mxu0
      %2649 = vmatprep.mubr.f32.mxu0 0.0
      %2650 = vmatmul.mubr.f32.gmra.mrb[0].mxu0 %v2486
      %v2651 = vpop.f32.mrb[0].mxu0
      %v2652 = vadd.f32 0.0, %v2651
      %v2653 = vpop.f32.mrb[0].mxu0
      %2654 = vmatprep.mubr.f32.mxu0 0.0
      %2655 = vmatmul.mubr.f32.gmra.mrb[0].mxu0 %v2489
      %v2656 = vpop.f32.mrb[0].mxu0
      %v2657 = vadd.f32 0.0, %v2656
      %v2658 = vpop.f32.mrb[0].mxu0
      %2659 = vmatprep.mubr.f32.mxu0 0.0
      %2660 = vmatmul.mubr.f32.gmra.mrb[0].mxu0 %v2492
      %v2661 = vpop.f32.mrb[0].mxu0
      %v2662 = vadd.f32 0.0, %v2661
      %v2663 = vpop.f32.mrb[0].mxu0
      %2664 = vmatprep.mubr.f32.mxu0 0.0
      %2665 = vmatmul.mubr.f32.gmra.mrb[0].mxu0 %v2495
      %v2666 = vpop.f32.mrb[0].mxu0
      %v2667 = vadd.f32 0.0, %v2666
      %v2668 = vpop.f32.mrb[0].mxu0
      %2669 = vmatprep.mubr.f32.mxu0 0.0
      %2670 = vmatmul.mubr.f32.gmra.mrb[0].mxu0 %v2498
      %v2671 = vpop.f32.mrb[0].mxu0
      %v2672 = vadd.f32 0.0, %v2671
      %v2673 = vpop.f32.mrb[0].mxu0
      %2674 = vmatprep.mubr.f32.mxu0 0.0
      %2675 = vmatmul.mubr.f32.gmra.mrb[0].mxu0 %v2501
      %v2676 = vpop.f32.mrb[0].mxu0
      %v2677 = vadd.f32 0.0, %v2676
      %v2678 = vpop.f32.mrb[0].mxu0
      %2679 = vmatprep.mubr.f32.mxu0 0.0
      %2680 = vmatmul.mubr.f32.gmra.mrb[0].mxu0 %v2504
      %v2681 = vpop.f32.mrb[0].mxu0
      %v2682 = vadd.f32 0.0, %v2681
      %v2683 = vpop.f32.mrb[0].mxu0
      %2684 = vmatprep.mubr.f32.mxu0 0.0
      %2685 = vmatmul.mubr.f32.gmra.mrb[0].mxu0 %v2507
      %v2686 = vpop.f32.mrb[0].mxu0
      %v2687 = vadd.f32 0.0, %v2686
      %v2688 = vpop.f32.mrb[0].mxu0
      %2689 = vmatprep.mubr.f32.mxu0 0.0
      %2690 = vmatmul.mubr.f32.gmra.mrb[0].mxu0 %v2510
      %v2691 = vpop.f32.mrb[0].mxu0
      %v2692 = vadd.f32 0.0, %v2691
      %v2693 = vpop.f32.mrb[0].mxu0
      %2694 = vmatprep.mubr.f32.mxu0 0.0
      %2695 = vmatmul.mubr.f32.gmra.mrb[0].mxu0 %v2513
      %v2696 = vpop.f32.mrb[0].mxu0
      %v2697 = vadd.f32 0.0, %v2696
      %v2698 = vpop.f32.mrb[0].mxu0
      %2699 = vmatprep.mubr.f32.mxu0 0.0
      %2700 = vmatmul.mubr.f32.gmra.mrb[0].mxu0 %v2516
      %v2701 = vpop.f32.mrb[0].mxu0
      %v2702 = vadd.f32 0.0, %v2701
      %v2703 = vpop.f32.mrb[0].mxu0
      %2704 = vmatprep.mubr.f32.mxu0 0.0
      %2705 = vmatmul.mubr.f32.gmra.mrb[0].mxu0 %v2519
      %v2706 = vpop.f32.mrb[0].mxu0
      %v2707 = vadd.f32 0.0, %v2706
      %v2708 = vpop.f32.mrb[0].mxu0
      %2709 = vmatprep.mubr.f32.mxu0 0.0
      %2710 = vmatmul.mubr.f32.gmra.mrb[0].mxu0 %v2522
      %v2711 = vpop.f32.mrb[0].mxu0
      %v2712 = vadd.f32 0.0, %v2711
      %v2713 = vpop.f32.mrb[0].mxu0
      %2714 = vmatprep.mubr.f32.mxu0 0.0
      %2715 = vmatmul.mubr.f32.gmra.mrb[0].mxu0 %v2525
      %v2716 = vpop.f32.mrb[0].mxu0
      %v2717 = vadd.f32 0.0, %v2716
      %v2718 = vpop.f32.mrb[0].mxu0
      %2719 = vmatprep.mubr.f32.mxu0 0.0
      %2720 = vmatmul.mubr.f32.gmra.mrb[0].mxu0 %v2528
      %v2721 = vpop.f32.mrb[0].mxu0
      %v2722 = vadd.f32 0.0, %v2721
      %v2723 = vpop.f32.mrb[0].mxu0
      %2724 = vmatprep.mubr.f32.mxu0 0.0
      %2725 = vmatmul.mubr.f32.gmra.mrb[0].mxu0 %v2531
      %v2726 = vpop.f32.mrb[0].mxu0
      %v2727 = vadd.f32 0.0, %v2726
      %v2728 = vpop.f32.mrb[0].mxu0
      %2729 = vmatprep.mubr.f32.mxu0 0.0
      %2730 = vmatmul.mubr.f32.gmra.mrb[0].mxu0 %v2534
      %v2731 = vpop.f32.mrb[0].mxu0
      %v2732 = vadd.f32 0.0, %v2731
      %v2733 = vpop.f32.mrb[0].mxu0
      %2734 = vmatprep.mubr.f32.mxu0 0.0
      %2735 = vmatmul.mubr.f32.gmra.mrb[0].mxu0 %v2537
      %v2736 = vpop.f32.mrb[0].mxu0
      %v2737 = vadd.f32 0.0, %v2736
      %v2738 = vpop.f32.mrb[0].mxu0
      %2739 = vmatprep.mubr.f32.mxu0 0.0
      %2740 = vmatmul.mubr.f32.gmra.mrb[0].mxu0 %v2540
      %v2741 = vpop.f32.mrb[0].mxu0
      %v2742 = vadd.f32 0.0, %v2741
      %v2743 = vpop.f32.mrb[0].mxu0
      %2744 = vmatprep.mubr.f32.mxu0 0.0
      %2745 = vmatmul.mubr.f32.gmra.mrb[0].mxu0 %v2543
      %v2746 = vpop.f32.mrb[0].mxu0
      %v2747 = vadd.f32 0.0, %v2746
      %v2748 = vpop.f32.mrb[0].mxu0
      %2749 = vmatprep.mubr.f32.mxu0 0.0
      %2750 = vmatmul.mubr.f32.gmra.mrb[0].mxu0 %v2546
      %v2751 = vpop.f32.mrb[0].mxu0
      %v2752 = vadd.f32 0.0, %v2751
      %v2753 = vpop.f32.mrb[0].mxu0
      %2754 = vmatprep.mubr.f32.mxu0 0.0
      %2755 = vmatmul.mubr.f32.gmra.mrb[0].mxu0 %v2549
      %v2756 = vpop.f32.mrb[0].mxu0
      %v2757 = vadd.f32 0.0, %v2756
      %v2758 = vpop.f32.mrb[0].mxu0
      %2759 = vmatprep.mubr.f32.mxu0 0.0
      %2760 = vmatmul.mubr.f32.gmra.mrb[0].mxu0 %v2552
      %v2761 = vpop.f32.mrb[0].mxu0
      %v2762 = vadd.f32 0.0, %v2761
      %v2763 = vpop.f32.mrb[0].mxu0
      %2764 = vmatprep.mubr.f32.mxu0 0.0
      %2765 = vmatmul.mubr.f32.gmra.mrb[0].mxu0 %v2555
      %v2766 = vpop.f32.mrb[0].mxu0
      %v2767 = vadd.f32 0.0, %v2766
      %v2768 = vpop.f32.mrb[0].mxu0
      %2769 = vmatprep.mubr.f32.mxu0 0.0
      %2770 = vmatmul.mubr.f32.gmra.mrb[0].mxu0 %v2558
      %v2771 = vpop.f32.mrb[0].mxu0
      %v2772 = vadd.f32 0.0, %v2771
      %v2773 = vpop.f32.mrb[0].mxu0
      %2774 = vmatprep.mubr.f32.mxu0 0.0
      %2775 = vmatmul.mubr.f32.gmra.mrb[0].mxu0 %v2561
      %v2776 = vpop.f32.mrb[0].mxu0
      %v2777 = vadd.f32 0.0, %v2776
      %v2778 = vpop.f32.mrb[0].mxu0
      %2779 = vmatprep.mubr.f32.mxu0 0.0
      %2780 = vmatmul.mubr.f32.gmra.mrb[0].mxu0 %v2564
      %v2781 = vpop.f32.mrb[0].mxu0
      %v2782 = vadd.f32 0.0, %v2781
      %v2783 = vpop.f32.mrb[0].mxu0
      %2784 = vmatprep.mubr.f32.mxu0 0.0
      %2785 = vmatmul.mubr.f32.gmra.mrb[0].mxu0 %v2567
      %v2786 = vpop.f32.mrb[0].mxu0
      %v2787 = vadd.f32 0.0, %v2786
      %v2788 = vpop.f32.mrb[0].mxu0
      %2789 = vmatprep.mubr.f32.mxu0 0.0
      %2790 = vmatmul.mubr.f32.gmra.mrb[0].mxu0 %v2570
      %v2791 = vpop.f32.mrb[0].mxu0
      %v2792 = vadd.f32 0.0, %v2791
      %v2793 = vpop.f32.mrb[0].mxu0
      %2794 = vmatprep.mubr.f32.mxu0 0.0
      %2795 = vmatmul.mubr.f32.gmra.mrb[0].mxu0 %v2573
      %v2796 = vpop.f32.mrb[0].mxu0
      %v2797 = vadd.f32 0.0, %v2796
      %v2798 = vpop.f32.mrb[0].mxu0
      %2799 = vdwg.mxu0
      %v2800 = vadd.f32 %v2312, %v2642
      %v2801 = vadd.f32 %v2317, %v2647
      %v2802 = vadd.f32 %v2322, %v2652
      %v2803 = vadd.f32 %v2327, %v2657
      %v2804 = vadd.f32 %v2332, %v2662
      %v2805 = vadd.f32 %v2337, %v2667
      %v2806 = vadd.f32 %v2342, %v2672
      %v2807 = vadd.f32 %v2347, %v2677
      %v2808 = vadd.f32 %v2352, %v2682
      %v2809 = vadd.f32 %v2357, %v2687
      %v2810 = vadd.f32 %v2362, %v2692
      %v2811 = vadd.f32 %v2367, %v2697
      %v2812 = vadd.f32 %v2372, %v2702
      %v2813 = vadd.f32 %v2377, %v2707
      %v2814 = vadd.f32 %v2382, %v2712
      %v2815 = vadd.f32 %v2387, %v2717
      %v2816 = vadd.f32 %v2392, %v2722
      %v2817 = vadd.f32 %v2397, %v2727
      %v2818 = vadd.f32 %v2402, %v2732
      %v2819 = vadd.f32 %v2407, %v2737
      %v2820 = vadd.f32 %v2412, %v2742
      %v2821 = vadd.f32 %v2417, %v2747
      %v2822 = vadd.f32 %v2422, %v2752
      %v2823 = vadd.f32 %v2427, %v2757
      %v2824 = vadd.f32 %v2432, %v2762
      %v2825 = vadd.f32 %v2437, %v2767
      %v2826 = vadd.f32 %v2442, %v2772
      %v2827 = vadd.f32 %v2447, %v2777
      %v2828 = vadd.f32 %v2452, %v2782
      %v2829 = vadd.f32 %v2457, %v2787
      %v2830 = vadd.f32 %v2462, %v2792
      %v2831 = vadd.f32 %v2467, %v2797
      %s2832 = scalar_lea.vmem %s4, 192
      %v2833 = vld [vmem:[%s2832] sm:$0xff]
      %v2834 = vld [vmem:[%s2832 + $0x8] sm:$0xff]
      %v2835 = vld [vmem:[%s2832 + $0x10] sm:$0xff]
      %v2836 = vld [vmem:[%s2832 + $0x18] sm:$0xff]
      %v2837 = vld [vmem:[%s2832 + $0x20] sm:$0xff]
      %v2838 = vld [vmem:[%s2832 + $0x28] sm:$0xff]
      %v2839 = vld [vmem:[%s2832 + $0x30] sm:$0xff]
      %v2840 = vld [vmem:[%s2832 + $0x38] sm:$0xff]
      %v2842 = vsel %vm455, %v1433, 0
      %v2845 = vsel %vm455, %v1438, 0
      %2847 = vmatprep.subr.mxu0 0.0
      %2848 = vmatpush1.msra.mxu0 %v2833
      %2849 = vmatprep.subr.mxu0 0.0
      %2850 = vmatpush1.msra.mxu0 %v2834
      %2851 = vmatprep.subr.mxu0 0.0
      %2852 = vmatpush1.msra.mxu0 %v2835
      %2853 = vmatprep.subr.mxu0 0.0
      %2854 = vmatpush1.msra.mxu0 %v2836
      %2855 = vmatprep.subr.mxu0 0.0
      %2856 = vmatpush1.msra.mxu0 %v2837
      %2857 = vmatprep.subr.mxu0 0.0
      %2858 = vmatpush1.msra.mxu0 %v2838
      %2859 = vmatprep.subr.mxu0 0.0
      %2860 = vmatpush1.msra.mxu0 %v2839
      %2861 = vmatprep.subr.mxu0 0.0
      %2862 = vmatpush1.msra.mxu0 %v2840
      %2863 = vmatprep.subr.mxu0 0.0
      %2864 = vmatpush1.msra.mxu0 0.0
      %2865 = vmatprep.subr.mxu0 0.0
      %2866 = vmatpush1.msra.mxu0 0.0
      %2867 = vmatprep.subr.mxu0 0.0
      %2868 = vmatpush1.msra.mxu0 0.0
      %2869 = vmatprep.subr.mxu0 0.0
      %2870 = vmatpush1.msra.mxu0 0.0
      %2871 = vmatprep.subr.mxu0 0.0
      %2872 = vmatpush1.msra.mxu0 0.0
      %2873 = vmatprep.subr.mxu0 0.0
      %2874 = vmatpush1.msra.mxu0 0.0
      %2875 = vmatprep.subr.mxu0 0.0
      %2876 = vmatpush1.msra.mxu0 0.0
      %2877 = vmatprep.subr.mxu0 0.0
      %2878 = vmatpush1.msra.mxu0 0.0
      %2879 = vmatprep.subr.mxu0 0.0
      %2880 = vmatpush1.msra.mxu0 0.0
      %2881 = vmatprep.subr.mxu0 0.0
      %2882 = vmatpush1.msra.mxu0 0.0
      %2883 = vmatprep.subr.mxu0 0.0
      %2884 = vmatpush1.msra.mxu0 0.0
      %2885 = vmatprep.subr.mxu0 0.0
      %2886 = vmatpush1.msra.mxu0 0.0
      %2887 = vmatprep.subr.mxu0 0.0
      %2888 = vmatpush1.msra.mxu0 0.0
      %2889 = vmatprep.subr.mxu0 0.0
      %2890 = vmatpush1.msra.mxu0 0.0
      %2891 = vmatprep.subr.mxu0 0.0
      %2892 = vmatpush1.msra.mxu0 0.0
      %2893 = vmatprep.subr.mxu0 0.0
      %2894 = vmatpush1.msra.mxu0 0.0
      %2895 = vmatprep.subr.mxu0 0.0
      %2896 = vmatpush1.msra.mxu0 0.0
      %2897 = vmatprep.subr.mxu0 0.0
      %2898 = vmatpush1.msra.mxu0 0.0
      %2899 = vmatprep.subr.mxu0 0.0
      %2900 = vmatpush1.msra.mxu0 0.0
      %2901 = vmatprep.subr.mxu0 0.0
      %2902 = vmatpush1.msra.mxu0 0.0
      %2903 = vmatprep.subr.mxu0 0.0
      %2904 = vmatpush1.msra.mxu0 0.0
      %2905 = vmatprep.subr.mxu0 0.0
      %2906 = vmatpush1.msra.mxu0 0.0
      %2907 = vmatprep.subr.mxu0 0.0
      %2908 = vmatpush1.msra.mxu0 0.0
      %2909 = vmatprep.subr.mxu0 0.0
      %2910 = vmatpush1.msra.mxu0 0.0
      %2911 = vmatprep.mubr.f32.mxu0 0.0
      %2912 = vmatmul.mubr.f32.gmra.mrb[0].mxu0 %v2156
      %v2913 = vpop.f32.mrb[0].mxu0
      %v2914 = vadd.f32 0.0, %v2913
      %v2915 = vpop.f32.mrb[0].mxu0
      %2916 = vmatprep.mubr.f32.mxu0 0.0
      %2917 = vmatmul.mubr.f32.gmra.mrb[0].mxu0 %v2159
      %v2918 = vpop.f32.mrb[0].mxu0
      %v2919 = vadd.f32 0.0, %v2918
      %v2920 = vpop.f32.mrb[0].mxu0
      %2921 = vmatprep.mubr.f32.mxu0 0.0
      %2922 = vmatmul.mubr.f32.gmra.mrb[0].mxu0 %v2162
      %v2923 = vpop.f32.mrb[0].mxu0
      %v2924 = vadd.f32 0.0, %v2923
      %v2925 = vpop.f32.mrb[0].mxu0
      %2926 = vmatprep.mubr.f32.mxu0 0.0
      %2927 = vmatmul.mubr.f32.gmra.mrb[0].mxu0 %v2165
      %v2928 = vpop.f32.mrb[0].mxu0
      %v2929 = vadd.f32 0.0, %v2928
      %v2930 = vpop.f32.mrb[0].mxu0
      %2931 = vmatprep.mubr.f32.mxu0 0.0
      %2932 = vmatmul.mubr.f32.gmra.mrb[0].mxu0 %v2168
      %v2933 = vpop.f32.mrb[0].mxu0
      %v2934 = vadd.f32 0.0, %v2933
      %v2935 = vpop.f32.mrb[0].mxu0
      %2936 = vmatprep.mubr.f32.mxu0 0.0
      %2937 = vmatmul.mubr.f32.gmra.mrb[0].mxu0 %v2171
      %v2938 = vpop.f32.mrb[0].mxu0
      %v2939 = vadd.f32 0.0, %v2938
      %v2940 = vpop.f32.mrb[0].mxu0
      %2941 = vmatprep.mubr.f32.mxu0 0.0
      %2942 = vmatmul.mubr.f32.gmra.mrb[0].mxu0 %v2174
      %v2943 = vpop.f32.mrb[0].mxu0
      %v2944 = vadd.f32 0.0, %v2943
      %v2945 = vpop.f32.mrb[0].mxu0
      %2946 = vmatprep.mubr.f32.mxu0 0.0
      %2947 = vmatmul.mubr.f32.gmra.mrb[0].mxu0 %v2177
      %v2948 = vpop.f32.mrb[0].mxu0
      %v2949 = vadd.f32 0.0, %v2948
      %v2950 = vpop.f32.mrb[0].mxu0
      %2951 = vmatprep.mubr.f32.mxu0 0.0
      %2952 = vmatmul.mubr.f32.gmra.mrb[0].mxu0 %v2180
      %v2953 = vpop.f32.mrb[0].mxu0
      %v2954 = vadd.f32 0.0, %v2953
      %v2955 = vpop.f32.mrb[0].mxu0
      %2956 = vmatprep.mubr.f32.mxu0 0.0
      %2957 = vmatmul.mubr.f32.gmra.mrb[0].mxu0 %v2183
      %v2958 = vpop.f32.mrb[0].mxu0
      %v2959 = vadd.f32 0.0, %v2958
      %v2960 = vpop.f32.mrb[0].mxu0
      %2961 = vmatprep.mubr.f32.mxu0 0.0
      %2962 = vmatmul.mubr.f32.gmra.mrb[0].mxu0 %v2186
      %v2963 = vpop.f32.mrb[0].mxu0
      %v2964 = vadd.f32 0.0, %v2963
      %v2965 = vpop.f32.mrb[0].mxu0
      %2966 = vmatprep.mubr.f32.mxu0 0.0
      %2967 = vmatmul.mubr.f32.gmra.mrb[0].mxu0 %v2189
      %v2968 = vpop.f32.mrb[0].mxu0
      %v2969 = vadd.f32 0.0, %v2968
      %v2970 = vpop.f32.mrb[0].mxu0
      %2971 = vmatprep.mubr.f32.mxu0 0.0
      %2972 = vmatmul.mubr.f32.gmra.mrb[0].mxu0 %v2192
      %v2973 = vpop.f32.mrb[0].mxu0
      %v2974 = vadd.f32 0.0, %v2973
      %v2975 = vpop.f32.mrb[0].mxu0
      %2976 = vmatprep.mubr.f32.mxu0 0.0
      %2977 = vmatmul.mubr.f32.gmra.mrb[0].mxu0 %v2195
      %v2978 = vpop.f32.mrb[0].mxu0
      %v2979 = vadd.f32 0.0, %v2978
      %v2980 = vpop.f32.mrb[0].mxu0
      %2981 = vmatprep.mubr.f32.mxu0 0.0
      %2982 = vmatmul.mubr.f32.gmra.mrb[0].mxu0 %v2198
      %v2983 = vpop.f32.mrb[0].mxu0
      %v2984 = vadd.f32 0.0, %v2983
      %v2985 = vpop.f32.mrb[0].mxu0
      %2986 = vmatprep.mubr.f32.mxu0 0.0
      %2987 = vmatmul.mubr.f32.gmra.mrb[0].mxu0 %v2201
      %v2988 = vpop.f32.mrb[0].mxu0
      %v2989 = vadd.f32 0.0, %v2988
      %v2990 = vpop.f32.mrb[0].mxu0
      %2991 = vmatprep.mubr.f32.mxu0 0.0
      %2992 = vmatmul.mubr.f32.gmra.mrb[0].mxu0 %v2204
      %v2993 = vpop.f32.mrb[0].mxu0
      %v2994 = vadd.f32 0.0, %v2993
      %v2995 = vpop.f32.mrb[0].mxu0
      %2996 = vmatprep.mubr.f32.mxu0 0.0
      %2997 = vmatmul.mubr.f32.gmra.mrb[0].mxu0 %v2207
      %v2998 = vpop.f32.mrb[0].mxu0
      %v2999 = vadd.f32 0.0, %v2998
      %v3000 = vpop.f32.mrb[0].mxu0
      %3001 = vmatprep.mubr.f32.mxu0 0.0
      %3002 = vmatmul.mubr.f32.gmra.mrb[0].mxu0 %v2210
      %v3003 = vpop.f32.mrb[0].mxu0
      %v3004 = vadd.f32 0.0, %v3003
      %v3005 = vpop.f32.mrb[0].mxu0
      %3006 = vmatprep.mubr.f32.mxu0 0.0
      %3007 = vmatmul.mubr.f32.gmra.mrb[0].mxu0 %v2213
      %v3008 = vpop.f32.mrb[0].mxu0
      %v3009 = vadd.f32 0.0, %v3008
      %v3010 = vpop.f32.mrb[0].mxu0
      %3011 = vmatprep.mubr.f32.mxu0 0.0
      %3012 = vmatmul.mubr.f32.gmra.mrb[0].mxu0 %v2216
      %v3013 = vpop.f32.mrb[0].mxu0
      %v3014 = vadd.f32 0.0, %v3013
      %v3015 = vpop.f32.mrb[0].mxu0
      %3016 = vmatprep.mubr.f32.mxu0 0.0
      %3017 = vmatmul.mubr.f32.gmra.mrb[0].mxu0 %v2219
      %v3018 = vpop.f32.mrb[0].mxu0
      %v3019 = vadd.f32 0.0, %v3018
      %v3020 = vpop.f32.mrb[0].mxu0
      %3021 = vmatprep.mubr.f32.mxu0 0.0
      %3022 = vmatmul.mubr.f32.gmra.mrb[0].mxu0 %v2222
      %v3023 = vpop.f32.mrb[0].mxu0
      %v3024 = vadd.f32 0.0, %v3023
      %v3025 = vpop.f32.mrb[0].mxu0
      %3026 = vmatprep.mubr.f32.mxu0 0.0
      %3027 = vmatmul.mubr.f32.gmra.mrb[0].mxu0 %v2225
      %v3028 = vpop.f32.mrb[0].mxu0
      %v3029 = vadd.f32 0.0, %v3028
      %v3030 = vpop.f32.mrb[0].mxu0
      %3031 = vmatprep.mubr.f32.mxu0 0.0
      %3032 = vmatmul.mubr.f32.gmra.mrb[0].mxu0 %v2228
      %v3033 = vpop.f32.mrb[0].mxu0
      %v3034 = vadd.f32 0.0, %v3033
      %v3035 = vpop.f32.mrb[0].mxu0
      %3036 = vmatprep.mubr.f32.mxu0 0.0
      %3037 = vmatmul.mubr.f32.gmra.mrb[0].mxu0 %v2231
      %v3038 = vpop.f32.mrb[0].mxu0
      %v3039 = vadd.f32 0.0, %v3038
      %v3040 = vpop.f32.mrb[0].mxu0
      %3041 = vmatprep.mubr.f32.mxu0 0.0
      %3042 = vmatmul.mubr.f32.gmra.mrb[0].mxu0 %v2234
      %v3043 = vpop.f32.mrb[0].mxu0
      %v3044 = vadd.f32 0.0, %v3043
      %v3045 = vpop.f32.mrb[0].mxu0
      %3046 = vmatprep.mubr.f32.mxu0 0.0
      %3047 = vmatmul.mubr.f32.gmra.mrb[0].mxu0 %v2237
      %v3048 = vpop.f32.mrb[0].mxu0
      %v3049 = vadd.f32 0.0, %v3048
      %v3050 = vpop.f32.mrb[0].mxu0
      %3051 = vmatprep.mubr.f32.mxu0 0.0
      %3052 = vmatmul.mubr.f32.gmra.mrb[0].mxu0 %v2240
      %v3053 = vpop.f32.mrb[0].mxu0
      %v3054 = vadd.f32 0.0, %v3053
      %v3055 = vpop.f32.mrb[0].mxu0
      %3056 = vmatprep.mubr.f32.mxu0 0.0
      %3057 = vmatmul.mubr.f32.gmra.mrb[0].mxu0 %v2243
      %v3058 = vpop.f32.mrb[0].mxu0
      %v3059 = vadd.f32 0.0, %v3058
      %v3060 = vpop.f32.mrb[0].mxu0
      %3061 = vmatprep.mubr.f32.mxu0 0.0
      %3062 = vmatmul.mubr.f32.gmra.mrb[0].mxu0 %v2842
      %v3063 = vpop.f32.mrb[0].mxu0
      %v3064 = vadd.f32 0.0, %v3063
      %v3065 = vpop.f32.mrb[0].mxu0
      %3066 = vmatprep.mubr.f32.mxu0 0.0
      %3067 = vmatmul.mubr.f32.gmra.mrb[0].mxu0 %v2845
      %v3068 = vpop.f32.mrb[0].mxu0
      %v3069 = vadd.f32 0.0, %v3068
      %v3070 = vpop.f32.mrb[0].mxu0
      %3071 = vdwg.mxu0
      %v3072 = vadd.f32 %v2800, %v2914
      %v3073 = vadd.f32 %v2801, %v2919
      %v3074 = vadd.f32 %v2802, %v2924
      %v3075 = vadd.f32 %v2803, %v2929
      %v3076 = vadd.f32 %v2804, %v2934
      %v3077 = vadd.f32 %v2805, %v2939
      %v3078 = vadd.f32 %v2806, %v2944
      %v3079 = vadd.f32 %v2807, %v2949
      %v3080 = vadd.f32 %v2808, %v2954
      %v3081 = vadd.f32 %v2809, %v2959
      %v3082 = vadd.f32 %v2810, %v2964
      %v3083 = vadd.f32 %v2811, %v2969
      %v3084 = vadd.f32 %v2812, %v2974
      %v3085 = vadd.f32 %v2813, %v2979
      %v3086 = vadd.f32 %v2814, %v2984
      %v3087 = vadd.f32 %v2815, %v2989
      %v3088 = vadd.f32 %v2816, %v2994
      %v3089 = vadd.f32 %v2817, %v2999
      %v3090 = vadd.f32 %v2818, %v3004
      %v3091 = vadd.f32 %v2819, %v3009
      %v3092 = vadd.f32 %v2820, %v3014
      %v3093 = vadd.f32 %v2821, %v3019
      %v3094 = vadd.f32 %v2822, %v3024
      %v3095 = vadd.f32 %v2823, %v3029
      %v3096 = vadd.f32 %v2824, %v3034
      %v3097 = vadd.f32 %v2825, %v3039
      %v3098 = vadd.f32 %v2826, %v3044
      %v3099 = vadd.f32 %v2827, %v3049
      %v3100 = vadd.f32 %v2828, %v3054
      %v3101 = vadd.f32 %v2829, %v3059
      %v3102 = vadd.f32 %v2830, %v3064
      %v3103 = vadd.f32 %v2831, %v3069
      %s3104 = scalar_lea.vmem %s4, 256
      %v3105 = vld [vmem:[%s3104] sm:$0xff]
      %v3106 = vld [vmem:[%s3104 + $0x8] sm:$0xff]
      %v3107 = vld [vmem:[%s3104 + $0x10] sm:$0xff]
      %v3108 = vld [vmem:[%s3104 + $0x18] sm:$0xff]
      %v3109 = vld [vmem:[%s3104 + $0x20] sm:$0xff]
      %v3110 = vld [vmem:[%s3104 + $0x28] sm:$0xff]
      %v3111 = vld [vmem:[%s3104 + $0x30] sm:$0xff]
      %v3112 = vld [vmem:[%s3104 + $0x38] sm:$0xff]
      %v3114 = vsel %vm455, %v1613, 0
      %v3117 = vsel %vm455, %v1618, 0
      %3119 = vmatprep.subr.mxu0 0.0
      %3120 = vmatpush1.msra.mxu0 %v3105
      %3121 = vmatprep.subr.mxu0 0.0
      %3122 = vmatpush1.msra.mxu0 %v3106
      %3123 = vmatprep.subr.mxu0 0.0
      %3124 = vmatpush1.msra.mxu0 %v3107
      %3125 = vmatprep.subr.mxu0 0.0
      %3126 = vmatpush1.msra.mxu0 %v3108
      %3127 = vmatprep.subr.mxu0 0.0
      %3128 = vmatpush1.msra.mxu0 %v3109
      %3129 = vmatprep.subr.mxu0 0.0
      %3130 = vmatpush1.msra.mxu0 %v3110
      %3131 = vmatprep.subr.mxu0 0.0
      %3132 = vmatpush1.msra.mxu0 %v3111
      %3133 = vmatprep.subr.mxu0 0.0
      %3134 = vmatpush1.msra.mxu0 %v3112
      %3135 = vmatprep.subr.mxu0 0.0
      %3136 = vmatpush1.msra.mxu0 0.0
      %3137 = vmatprep.subr.mxu0 0.0
      %3138 = vmatpush1.msra.mxu0 0.0
      %3139 = vmatprep.subr.mxu0 0.0
      %3140 = vmatpush1.msra.mxu0 0.0
      %3141 = vmatprep.subr.mxu0 0.0
      %3142 = vmatpush1.msra.mxu0 0.0
      %3143 = vmatprep.subr.mxu0 0.0
      %3144 = vmatpush1.msra.mxu0 0.0
      %3145 = vmatprep.subr.mxu0 0.0
      %3146 = vmatpush1.msra.mxu0 0.0
      %3147 = vmatprep.subr.mxu0 0.0
      %3148 = vmatpush1.msra.mxu0 0.0
      %3149 = vmatprep.subr.mxu0 0.0
      %3150 = vmatpush1.msra.mxu0 0.0
      %3151 = vmatprep.subr.mxu0 0.0
      %3152 = vmatpush1.msra.mxu0 0.0
      %3153 = vmatprep.subr.mxu0 0.0
      %3154 = vmatpush1.msra.mxu0 0.0
      %3155 = vmatprep.subr.mxu0 0.0
      %3156 = vmatpush1.msra.mxu0 0.0
      %3157 = vmatprep.subr.mxu0 0.0
      %3158 = vmatpush1.msra.mxu0 0.0
      %3159 = vmatprep.subr.mxu0 0.0
      %3160 = vmatpush1.msra.mxu0 0.0
      %3161 = vmatprep.subr.mxu0 0.0
      %3162 = vmatpush1.msra.mxu0 0.0
      %3163 = vmatprep.subr.mxu0 0.0
      %3164 = vmatpush1.msra.mxu0 0.0
      %3165 = vmatprep.subr.mxu0 0.0
      %3166 = vmatpush1.msra.mxu0 0.0
      %3167 = vmatprep.subr.mxu0 0.0
      %3168 = vmatpush1.msra.mxu0 0.0
      %3169 = vmatprep.subr.mxu0 0.0
      %3170 = vmatpush1.msra.mxu0 0.0
      %3171 = vmatprep.subr.mxu0 0.0
      %3172 = vmatpush1.msra.mxu0 0.0
      %3173 = vmatprep.subr.mxu0 0.0
      %3174 = vmatpush1.msra.mxu0 0.0
      %3175 = vmatprep.subr.mxu0 0.0
      %3176 = vmatpush1.msra.mxu0 0.0
      %3177 = vmatprep.subr.mxu0 0.0
      %3178 = vmatpush1.msra.mxu0 0.0
      %3179 = vmatprep.subr.mxu0 0.0
      %3180 = vmatpush1.msra.mxu0 0.0
      %3181 = vmatprep.subr.mxu0 0.0
      %3182 = vmatpush1.msra.mxu0 0.0
      %3183 = vmatprep.mubr.f32.mxu0 0.0
      %3184 = vmatmul.mubr.f32.gmra.mrb[0].mxu0 %v1835
      %v3185 = vpop.f32.mrb[0].mxu0
      %v3186 = vadd.f32 0.0, %v3185
      %v3187 = vpop.f32.mrb[0].mxu0
      %3188 = vmatprep.mubr.f32.mxu0 0.0
      %3189 = vmatmul.mubr.f32.gmra.mrb[0].mxu0 %v1838
      %v3190 = vpop.f32.mrb[0].mxu0
      %v3191 = vadd.f32 0.0, %v3190
      %v3192 = vpop.f32.mrb[0].mxu0
      %3193 = vmatprep.mubr.f32.mxu0 0.0
      %3194 = vmatmul.mubr.f32.gmra.mrb[0].mxu0 %v1841
      %v3195 = vpop.f32.mrb[0].mxu0
      %v3196 = vadd.f32 0.0, %v3195
      %v3197 = vpop.f32.mrb[0].mxu0
      %3198 = vmatprep.mubr.f32.mxu0 0.0
      %3199 = vmatmul.mubr.f32.gmra.mrb[0].mxu0 %v1844
      %v3200 = vpop.f32.mrb[0].mxu0
      %v3201 = vadd.f32 0.0, %v3200
      %v3202 = vpop.f32.mrb[0].mxu0
      %3203 = vmatprep.mubr.f32.mxu0 0.0
      %3204 = vmatmul.mubr.f32.gmra.mrb[0].mxu0 %v1847
      %v3205 = vpop.f32.mrb[0].mxu0
      %v3206 = vadd.f32 0.0, %v3205
      %v3207 = vpop.f32.mrb[0].mxu0
      %3208 = vmatprep.mubr.f32.mxu0 0.0
      %3209 = vmatmul.mubr.f32.gmra.mrb[0].mxu0 %v1850
      %v3210 = vpop.f32.mrb[0].mxu0
      %v3211 = vadd.f32 0.0, %v3210
      %v3212 = vpop.f32.mrb[0].mxu0
      %3213 = vmatprep.mubr.f32.mxu0 0.0
      %3214 = vmatmul.mubr.f32.gmra.mrb[0].mxu0 %v1853
      %v3215 = vpop.f32.mrb[0].mxu0
      %v3216 = vadd.f32 0.0, %v3215
      %v3217 = vpop.f32.mrb[0].mxu0
      %3218 = vmatprep.mubr.f32.mxu0 0.0
      %3219 = vmatmul.mubr.f32.gmra.mrb[0].mxu0 %v1856
      %v3220 = vpop.f32.mrb[0].mxu0
      %v3221 = vadd.f32 0.0, %v3220
      %v3222 = vpop.f32.mrb[0].mxu0
      %3223 = vmatprep.mubr.f32.mxu0 0.0
      %3224 = vmatmul.mubr.f32.gmra.mrb[0].mxu0 %v1859
      %v3225 = vpop.f32.mrb[0].mxu0
      %v3226 = vadd.f32 0.0, %v3225
      %v3227 = vpop.f32.mrb[0].mxu0
      %3228 = vmatprep.mubr.f32.mxu0 0.0
      %3229 = vmatmul.mubr.f32.gmra.mrb[0].mxu0 %v1862
      %v3230 = vpop.f32.mrb[0].mxu0
      %v3231 = vadd.f32 0.0, %v3230
      %v3232 = vpop.f32.mrb[0].mxu0
      %3233 = vmatprep.mubr.f32.mxu0 0.0
      %3234 = vmatmul.mubr.f32.gmra.mrb[0].mxu0 %v1865
      %v3235 = vpop.f32.mrb[0].mxu0
      %v3236 = vadd.f32 0.0, %v3235
      %v3237 = vpop.f32.mrb[0].mxu0
      %3238 = vmatprep.mubr.f32.mxu0 0.0
      %3239 = vmatmul.mubr.f32.gmra.mrb[0].mxu0 %v1868
      %v3240 = vpop.f32.mrb[0].mxu0
      %v3241 = vadd.f32 0.0, %v3240
      %v3242 = vpop.f32.mrb[0].mxu0
      %3243 = vmatprep.mubr.f32.mxu0 0.0
      %3244 = vmatmul.mubr.f32.gmra.mrb[0].mxu0 %v1871
      %v3245 = vpop.f32.mrb[0].mxu0
      %v3246 = vadd.f32 0.0, %v3245
      %v3247 = vpop.f32.mrb[0].mxu0
      %3248 = vmatprep.mubr.f32.mxu0 0.0
      %3249 = vmatmul.mubr.f32.gmra.mrb[0].mxu0 %v1874
      %v3250 = vpop.f32.mrb[0].mxu0
      %v3251 = vadd.f32 0.0, %v3250
      %v3252 = vpop.f32.mrb[0].mxu0
      %3253 = vmatprep.mubr.f32.mxu0 0.0
      %3254 = vmatmul.mubr.f32.gmra.mrb[0].mxu0 %v1877
      %v3255 = vpop.f32.mrb[0].mxu0
      %v3256 = vadd.f32 0.0, %v3255
      %v3257 = vpop.f32.mrb[0].mxu0
      %3258 = vmatprep.mubr.f32.mxu0 0.0
      %3259 = vmatmul.mubr.f32.gmra.mrb[0].mxu0 %v1880
      %v3260 = vpop.f32.mrb[0].mxu0
      %v3261 = vadd.f32 0.0, %v3260
      %v3262 = vpop.f32.mrb[0].mxu0
      %3263 = vmatprep.mubr.f32.mxu0 0.0
      %3264 = vmatmul.mubr.f32.gmra.mrb[0].mxu0 %v1883
      %v3265 = vpop.f32.mrb[0].mxu0
      %v3266 = vadd.f32 0.0, %v3265
      %v3267 = vpop.f32.mrb[0].mxu0
      %3268 = vmatprep.mubr.f32.mxu0 0.0
      %3269 = vmatmul.mubr.f32.gmra.mrb[0].mxu0 %v1886
      %v3270 = vpop.f32.mrb[0].mxu0
      %v3271 = vadd.f32 0.0, %v3270
      %v3272 = vpop.f32.mrb[0].mxu0
      %3273 = vmatprep.mubr.f32.mxu0 0.0
      %3274 = vmatmul.mubr.f32.gmra.mrb[0].mxu0 %v1889
      %v3275 = vpop.f32.mrb[0].mxu0
      %v3276 = vadd.f32 0.0, %v3275
      %v3277 = vpop.f32.mrb[0].mxu0
      %3278 = vmatprep.mubr.f32.mxu0 0.0
      %3279 = vmatmul.mubr.f32.gmra.mrb[0].mxu0 %v1892
      %v3280 = vpop.f32.mrb[0].mxu0
      %v3281 = vadd.f32 0.0, %v3280
      %v3282 = vpop.f32.mrb[0].mxu0
      %3283 = vmatprep.mubr.f32.mxu0 0.0
      %3284 = vmatmul.mubr.f32.gmra.mrb[0].mxu0 %v1895
      %v3285 = vpop.f32.mrb[0].mxu0
      %v3286 = vadd.f32 0.0, %v3285
      %v3287 = vpop.f32.mrb[0].mxu0
      %3288 = vmatprep.mubr.f32.mxu0 0.0
      %3289 = vmatmul.mubr.f32.gmra.mrb[0].mxu0 %v1898
      %v3290 = vpop.f32.mrb[0].mxu0
      %v3291 = vadd.f32 0.0, %v3290
      %v3292 = vpop.f32.mrb[0].mxu0
      %3293 = vmatprep.mubr.f32.mxu0 0.0
      %3294 = vmatmul.mubr.f32.gmra.mrb[0].mxu0 %v1901
      %v3295 = vpop.f32.mrb[0].mxu0
      %v3296 = vadd.f32 0.0, %v3295
      %v3297 = vpop.f32.mrb[0].mxu0
      %3298 = vmatprep.mubr.f32.mxu0 0.0
      %3299 = vmatmul.mubr.f32.gmra.mrb[0].mxu0 %v1904
      %v3300 = vpop.f32.mrb[0].mxu0
      %v3301 = vadd.f32 0.0, %v3300
      %v3302 = vpop.f32.mrb[0].mxu0
      %3303 = vmatprep.mubr.f32.mxu0 0.0
      %3304 = vmatmul.mubr.f32.gmra.mrb[0].mxu0 %v1907
      %v3305 = vpop.f32.mrb[0].mxu0
      %v3306 = vadd.f32 0.0, %v3305
      %v3307 = vpop.f32.mrb[0].mxu0
      %3308 = vmatprep.mubr.f32.mxu0 0.0
      %3309 = vmatmul.mubr.f32.gmra.mrb[0].mxu0 %v1910
      %v3310 = vpop.f32.mrb[0].mxu0
      %v3311 = vadd.f32 0.0, %v3310
      %v3312 = vpop.f32.mrb[0].mxu0
      %3313 = vmatprep.mubr.f32.mxu0 0.0
      %3314 = vmatmul.mubr.f32.gmra.mrb[0].mxu0 %v1913
      %v3315 = vpop.f32.mrb[0].mxu0
      %v3316 = vadd.f32 0.0, %v3315
      %v3317 = vpop.f32.mrb[0].mxu0
      %3318 = vmatprep.mubr.f32.mxu0 0.0
      %3319 = vmatmul.mubr.f32.gmra.mrb[0].mxu0 %v1916
      %v3320 = vpop.f32.mrb[0].mxu0
      %v3321 = vadd.f32 0.0, %v3320
      %v3322 = vpop.f32.mrb[0].mxu0
      %3323 = vmatprep.mubr.f32.mxu0 0.0
      %3324 = vmatmul.mubr.f32.gmra.mrb[0].mxu0 %v1919
      %v3325 = vpop.f32.mrb[0].mxu0
      %v3326 = vadd.f32 0.0, %v3325
      %v3327 = vpop.f32.mrb[0].mxu0
      %3328 = vmatprep.mubr.f32.mxu0 0.0
      %3329 = vmatmul.mubr.f32.gmra.mrb[0].mxu0 %v1922
      %v3330 = vpop.f32.mrb[0].mxu0
      %v3331 = vadd.f32 0.0, %v3330
      %v3332 = vpop.f32.mrb[0].mxu0
      %3333 = vmatprep.mubr.f32.mxu0 0.0
      %3334 = vmatmul.mubr.f32.gmra.mrb[0].mxu0 %v3114
      %v3335 = vpop.f32.mrb[0].mxu0
      %v3336 = vadd.f32 0.0, %v3335
      %v3337 = vpop.f32.mrb[0].mxu0
      %3338 = vmatprep.mubr.f32.mxu0 0.0
      %3339 = vmatmul.mubr.f32.gmra.mrb[0].mxu0 %v3117
      %v3340 = vpop.f32.mrb[0].mxu0
      %v3341 = vadd.f32 0.0, %v3340
      %v3342 = vpop.f32.mrb[0].mxu0
      %3343 = vdwg.mxu0
      %v3344 = vadd.f32 %v3072, %v3186
      %v3345 = vadd.f32 %v3073, %v3191
      %v3346 = vadd.f32 %v3074, %v3196
      %v3347 = vadd.f32 %v3075, %v3201
      %v3348 = vadd.f32 %v3076, %v3206
      %v3349 = vadd.f32 %v3077, %v3211
      %v3350 = vadd.f32 %v3078, %v3216
      %v3351 = vadd.f32 %v3079, %v3221
      %v3352 = vadd.f32 %v3080, %v3226
      %v3353 = vadd.f32 %v3081, %v3231
      %v3354 = vadd.f32 %v3082, %v3236
      %v3355 = vadd.f32 %v3083, %v3241
      %v3356 = vadd.f32 %v3084, %v3246
      %v3357 = vadd.f32 %v3085, %v3251
      %v3358 = vadd.f32 %v3086, %v3256
      %v3359 = vadd.f32 %v3087, %v3261
      %v3360 = vadd.f32 %v3088, %v3266
      %v3361 = vadd.f32 %v3089, %v3271
      %v3362 = vadd.f32 %v3090, %v3276
      %v3363 = vadd.f32 %v3091, %v3281
      %v3364 = vadd.f32 %v3092, %v3286
      %v3365 = vadd.f32 %v3093, %v3291
      %v3366 = vadd.f32 %v3094, %v3296
      %v3367 = vadd.f32 %v3095, %v3301
      %v3368 = vadd.f32 %v3096, %v3306
      %v3369 = vadd.f32 %v3097, %v3311
      %v3370 = vadd.f32 %v3098, %v3316
      %v3371 = vadd.f32 %v3099, %v3321
      %v3372 = vadd.f32 %v3100, %v3326
      %v3373 = vadd.f32 %v3101, %v3331
      %v3374 = vadd.f32 %v3102, %v3336
      %v3375 = vadd.f32 %v3103, %v3341
      %s3376 = scalar_lea.vmem %s4, 320
      %v3377 = vld [vmem:[%s3376] sm:$0xff]
      %v3378 = vld [vmem:[%s3376 + $0x8] sm:$0xff]
      %v3379 = vld [vmem:[%s3376 + $0x10] sm:$0xff]
      %v3380 = vld [vmem:[%s3376 + $0x18] sm:$0xff]
      %v3381 = vld [vmem:[%s3376 + $0x20] sm:$0xff]
      %v3382 = vld [vmem:[%s3376 + $0x28] sm:$0xff]
      %v3383 = vld [vmem:[%s3376 + $0x30] sm:$0xff]
      %v3384 = vld [vmem:[%s3376 + $0x38] sm:$0xff]
      %v3386 = vsel %vm455, %v1793, 0
      %v3389 = vsel %vm455, %v1798, 0
      %3391 = vmatprep.subr.mxu0 0.0
      %3392 = vmatpush1.msra.mxu0 %v3377
      %3393 = vmatprep.subr.mxu0 0.0
      %3394 = vmatpush1.msra.mxu0 %v3378
      %3395 = vmatprep.subr.mxu0 0.0
      %3396 = vmatpush1.msra.mxu0 %v3379
      %3397 = vmatprep.subr.mxu0 0.0
      %3398 = vmatpush1.msra.mxu0 %v3380
      %3399 = vmatprep.subr.mxu0 0.0
      %3400 = vmatpush1.msra.mxu0 %v3381
      %3401 = vmatprep.subr.mxu0 0.0
      %3402 = vmatpush1.msra.mxu0 %v3382
      %3403 = vmatprep.subr.mxu0 0.0
      %3404 = vmatpush1.msra.mxu0 %v3383
      %3405 = vmatprep.subr.mxu0 0.0
      %3406 = vmatpush1.msra.mxu0 %v3384
      %3407 = vmatprep.subr.mxu0 0.0
      %3408 = vmatpush1.msra.mxu0 0.0
      %3409 = vmatprep.subr.mxu0 0.0
      %3410 = vmatpush1.msra.mxu0 0.0
      %3411 = vmatprep.subr.mxu0 0.0
      %3412 = vmatpush1.msra.mxu0 0.0
      %3413 = vmatprep.subr.mxu0 0.0
      %3414 = vmatpush1.msra.mxu0 0.0
      %3415 = vmatprep.subr.mxu0 0.0
      %3416 = vmatpush1.msra.mxu0 0.0
      %3417 = vmatprep.subr.mxu0 0.0
      %3418 = vmatpush1.msra.mxu0 0.0
      %3419 = vmatprep.subr.mxu0 0.0
      %3420 = vmatpush1.msra.mxu0 0.0
      %3421 = vmatprep.subr.mxu0 0.0
      %3422 = vmatpush1.msra.mxu0 0.0
      %3423 = vmatprep.subr.mxu0 0.0
      %3424 = vmatpush1.msra.mxu0 0.0
      %3425 = vmatprep.subr.mxu0 0.0
      %3426 = vmatpush1.msra.mxu0 0.0
      %3427 = vmatprep.subr.mxu0 0.0
      %3428 = vmatpush1.msra.mxu0 0.0
      %3429 = vmatprep.subr.mxu0 0.0
      %3430 = vmatpush1.msra.mxu0 0.0
      %3431 = vmatprep.subr.mxu0 0.0
      %3432 = vmatpush1.msra.mxu0 0.0
      %3433 = vmatprep.subr.mxu0 0.0
      %3434 = vmatpush1.msra.mxu0 0.0
      %3435 = vmatprep.subr.mxu0 0.0
      %3436 = vmatpush1.msra.mxu0 0.0
      %3437 = vmatprep.subr.mxu0 0.0
      %3438 = vmatpush1.msra.mxu0 0.0
      %3439 = vmatprep.subr.mxu0 0.0
      %3440 = vmatpush1.msra.mxu0 0.0
      %3441 = vmatprep.subr.mxu0 0.0
      %3442 = vmatpush1.msra.mxu0 0.0
      %3443 = vmatprep.subr.mxu0 0.0
      %3444 = vmatpush1.msra.mxu0 0.0
      %3445 = vmatprep.subr.mxu0 0.0
      %3446 = vmatpush1.msra.mxu0 0.0
      %3447 = vmatprep.subr.mxu0 0.0
      %3448 = vmatpush1.msra.mxu0 0.0
      %3449 = vmatprep.subr.mxu0 0.0
      %3450 = vmatpush1.msra.mxu0 0.0
      %3451 = vmatprep.subr.mxu0 0.0
      %3452 = vmatpush1.msra.mxu0 0.0
      %3453 = vmatprep.subr.mxu0 0.0
      %3454 = vmatpush1.msra.mxu0 0.0
      %3455 = vmatprep.mubr.f32.mxu0 0.0
      %3456 = vmatmul.mubr.f32.gmra.mrb[0].mxu0 %v2486
      %v3457 = vpop.f32.mrb[0].mxu0
      %v3458 = vadd.f32 0.0, %v3457
      %v3459 = vpop.f32.mrb[0].mxu0
      %3460 = vmatprep.mubr.f32.mxu0 0.0
      %3461 = vmatmul.mubr.f32.gmra.mrb[0].mxu0 %v2489
      %v3462 = vpop.f32.mrb[0].mxu0
      %v3463 = vadd.f32 0.0, %v3462
      %v3464 = vpop.f32.mrb[0].mxu0
      %3465 = vmatprep.mubr.f32.mxu0 0.0
      %3466 = vmatmul.mubr.f32.gmra.mrb[0].mxu0 %v2492
      %v3467 = vpop.f32.mrb[0].mxu0
      %v3468 = vadd.f32 0.0, %v3467
      %v3469 = vpop.f32.mrb[0].mxu0
      %3470 = vmatprep.mubr.f32.mxu0 0.0
      %3471 = vmatmul.mubr.f32.gmra.mrb[0].mxu0 %v2495
      %v3472 = vpop.f32.mrb[0].mxu0
      %v3473 = vadd.f32 0.0, %v3472
      %v3474 = vpop.f32.mrb[0].mxu0
      %3475 = vmatprep.mubr.f32.mxu0 0.0
      %3476 = vmatmul.mubr.f32.gmra.mrb[0].mxu0 %v2498
      %v3477 = vpop.f32.mrb[0].mxu0
      %v3478 = vadd.f32 0.0, %v3477
      %v3479 = vpop.f32.mrb[0].mxu0
      %3480 = vmatprep.mubr.f32.mxu0 0.0
      %3481 = vmatmul.mubr.f32.gmra.mrb[0].mxu0 %v2501
      %v3482 = vpop.f32.mrb[0].mxu0
      %v3483 = vadd.f32 0.0, %v3482
      %v3484 = vpop.f32.mrb[0].mxu0
      %3485 = vmatprep.mubr.f32.mxu0 0.0
      %3486 = vmatmul.mubr.f32.gmra.mrb[0].mxu0 %v2504
      %v3487 = vpop.f32.mrb[0].mxu0
      %v3488 = vadd.f32 0.0, %v3487
      %v3489 = vpop.f32.mrb[0].mxu0
      %3490 = vmatprep.mubr.f32.mxu0 0.0
      %3491 = vmatmul.mubr.f32.gmra.mrb[0].mxu0 %v2507
      %v3492 = vpop.f32.mrb[0].mxu0
      %v3493 = vadd.f32 0.0, %v3492
      %v3494 = vpop.f32.mrb[0].mxu0
      %3495 = vmatprep.mubr.f32.mxu0 0.0
      %3496 = vmatmul.mubr.f32.gmra.mrb[0].mxu0 %v2510
      %v3497 = vpop.f32.mrb[0].mxu0
      %v3498 = vadd.f32 0.0, %v3497
      %v3499 = vpop.f32.mrb[0].mxu0
      %3500 = vmatprep.mubr.f32.mxu0 0.0
      %3501 = vmatmul.mubr.f32.gmra.mrb[0].mxu0 %v2513
      %v3502 = vpop.f32.mrb[0].mxu0
      %v3503 = vadd.f32 0.0, %v3502
      %v3504 = vpop.f32.mrb[0].mxu0
      %3505 = vmatprep.mubr.f32.mxu0 0.0
      %3506 = vmatmul.mubr.f32.gmra.mrb[0].mxu0 %v2516
      %v3507 = vpop.f32.mrb[0].mxu0
      %v3508 = vadd.f32 0.0, %v3507
      %v3509 = vpop.f32.mrb[0].mxu0
      %3510 = vmatprep.mubr.f32.mxu0 0.0
      %3511 = vmatmul.mubr.f32.gmra.mrb[0].mxu0 %v2519
      %v3512 = vpop.f32.mrb[0].mxu0
      %v3513 = vadd.f32 0.0, %v3512
      %v3514 = vpop.f32.mrb[0].mxu0
      %3515 = vmatprep.mubr.f32.mxu0 0.0
      %3516 = vmatmul.mubr.f32.gmra.mrb[0].mxu0 %v2522
      %v3517 = vpop.f32.mrb[0].mxu0
      %v3518 = vadd.f32 0.0, %v3517
      %v3519 = vpop.f32.mrb[0].mxu0
      %3520 = vmatprep.mubr.f32.mxu0 0.0
      %3521 = vmatmul.mubr.f32.gmra.mrb[0].mxu0 %v2525
      %v3522 = vpop.f32.mrb[0].mxu0
      %v3523 = vadd.f32 0.0, %v3522
      %v3524 = vpop.f32.mrb[0].mxu0
      %3525 = vmatprep.mubr.f32.mxu0 0.0
      %3526 = vmatmul.mubr.f32.gmra.mrb[0].mxu0 %v2528
      %v3527 = vpop.f32.mrb[0].mxu0
      %v3528 = vadd.f32 0.0, %v3527
      %v3529 = vpop.f32.mrb[0].mxu0
      %3530 = vmatprep.mubr.f32.mxu0 0.0
      %3531 = vmatmul.mubr.f32.gmra.mrb[0].mxu0 %v2531
      %v3532 = vpop.f32.mrb[0].mxu0
      %v3533 = vadd.f32 0.0, %v3532
      %v3534 = vpop.f32.mrb[0].mxu0
      %3535 = vmatprep.mubr.f32.mxu0 0.0
      %3536 = vmatmul.mubr.f32.gmra.mrb[0].mxu0 %v2534
      %v3537 = vpop.f32.mrb[0].mxu0
      %v3538 = vadd.f32 0.0, %v3537
      %v3539 = vpop.f32.mrb[0].mxu0
      %3540 = vmatprep.mubr.f32.mxu0 0.0
      %3541 = vmatmul.mubr.f32.gmra.mrb[0].mxu0 %v2537
      %v3542 = vpop.f32.mrb[0].mxu0
      %v3543 = vadd.f32 0.0, %v3542
      %v3544 = vpop.f32.mrb[0].mxu0
      %3545 = vmatprep.mubr.f32.mxu0 0.0
      %3546 = vmatmul.mubr.f32.gmra.mrb[0].mxu0 %v2540
      %v3547 = vpop.f32.mrb[0].mxu0
      %v3548 = vadd.f32 0.0, %v3547
      %v3549 = vpop.f32.mrb[0].mxu0
      %3550 = vmatprep.mubr.f32.mxu0 0.0
      %3551 = vmatmul.mubr.f32.gmra.mrb[0].mxu0 %v2543
      %v3552 = vpop.f32.mrb[0].mxu0
      %v3553 = vadd.f32 0.0, %v3552
      %v3554 = vpop.f32.mrb[0].mxu0
      %3555 = vmatprep.mubr.f32.mxu0 0.0
      %3556 = vmatmul.mubr.f32.gmra.mrb[0].mxu0 %v2546
      %v3557 = vpop.f32.mrb[0].mxu0
      %v3558 = vadd.f32 0.0, %v3557
      %v3559 = vpop.f32.mrb[0].mxu0
      %3560 = vmatprep.mubr.f32.mxu0 0.0
      %3561 = vmatmul.mubr.f32.gmra.mrb[0].mxu0 %v2549
      %v3562 = vpop.f32.mrb[0].mxu0
      %v3563 = vadd.f32 0.0, %v3562
      %v3564 = vpop.f32.mrb[0].mxu0
      %3565 = vmatprep.mubr.f32.mxu0 0.0
      %3566 = vmatmul.mubr.f32.gmra.mrb[0].mxu0 %v2552
      %v3567 = vpop.f32.mrb[0].mxu0
      %v3568 = vadd.f32 0.0, %v3567
      %v3569 = vpop.f32.mrb[0].mxu0
      %3570 = vmatprep.mubr.f32.mxu0 0.0
      %3571 = vmatmul.mubr.f32.gmra.mrb[0].mxu0 %v2555
      %v3572 = vpop.f32.mrb[0].mxu0
      %v3573 = vadd.f32 0.0, %v3572
      %v3574 = vpop.f32.mrb[0].mxu0
      %3575 = vmatprep.mubr.f32.mxu0 0.0
      %3576 = vmatmul.mubr.f32.gmra.mrb[0].mxu0 %v2558
      %v3577 = vpop.f32.mrb[0].mxu0
      %v3578 = vadd.f32 0.0, %v3577
      %v3579 = vpop.f32.mrb[0].mxu0
      %3580 = vmatprep.mubr.f32.mxu0 0.0
      %3581 = vmatmul.mubr.f32.gmra.mrb[0].mxu0 %v2561
      %v3582 = vpop.f32.mrb[0].mxu0
      %v3583 = vadd.f32 0.0, %v3582
      %v3584 = vpop.f32.mrb[0].mxu0
      %3585 = vmatprep.mubr.f32.mxu0 0.0
      %3586 = vmatmul.mubr.f32.gmra.mrb[0].mxu0 %v2564
      %v3587 = vpop.f32.mrb[0].mxu0
      %v3588 = vadd.f32 0.0, %v3587
      %v3589 = vpop.f32.mrb[0].mxu0
      %3590 = vmatprep.mubr.f32.mxu0 0.0
      %3591 = vmatmul.mubr.f32.gmra.mrb[0].mxu0 %v2567
      %v3592 = vpop.f32.mrb[0].mxu0
      %v3593 = vadd.f32 0.0, %v3592
      %v3594 = vpop.f32.mrb[0].mxu0
      %3595 = vmatprep.mubr.f32.mxu0 0.0
      %3596 = vmatmul.mubr.f32.gmra.mrb[0].mxu0 %v2570
      %v3597 = vpop.f32.mrb[0].mxu0
      %v3598 = vadd.f32 0.0, %v3597
      %v3599 = vpop.f32.mrb[0].mxu0
      %3600 = vmatprep.mubr.f32.mxu0 0.0
      %3601 = vmatmul.mubr.f32.gmra.mrb[0].mxu0 %v2573
      %v3602 = vpop.f32.mrb[0].mxu0
      %v3603 = vadd.f32 0.0, %v3602
      %v3604 = vpop.f32.mrb[0].mxu0
      %3605 = vmatprep.mubr.f32.mxu0 0.0
      %3606 = vmatmul.mubr.f32.gmra.mrb[0].mxu0 %v3386
      %v3607 = vpop.f32.mrb[0].mxu0
      %v3608 = vadd.f32 0.0, %v3607
      %v3609 = vpop.f32.mrb[0].mxu0
      %3610 = vmatprep.mubr.f32.mxu0 0.0
      %3611 = vmatmul.mubr.f32.gmra.mrb[0].mxu0 %v3389
      %v3612 = vpop.f32.mrb[0].mxu0
      %v3613 = vadd.f32 0.0, %v3612
      %v3614 = vpop.f32.mrb[0].mxu0
      %3615 = vdwg.mxu0
      %v3616 = vadd.f32 %v3344, %v3458
      %v3617 = vadd.f32 %v3345, %v3463
      %v3618 = vadd.f32 %v3346, %v3468
      %v3619 = vadd.f32 %v3347, %v3473
      %v3620 = vadd.f32 %v3348, %v3478
      %v3621 = vadd.f32 %v3349, %v3483
      %v3622 = vadd.f32 %v3350, %v3488
      %v3623 = vadd.f32 %v3351, %v3493
      %v3624 = vadd.f32 %v3352, %v3498
      %v3625 = vadd.f32 %v3353, %v3503
      %v3626 = vadd.f32 %v3354, %v3508
      %v3627 = vadd.f32 %v3355, %v3513
      %v3628 = vadd.f32 %v3356, %v3518
      %v3629 = vadd.f32 %v3357, %v3523
      %v3630 = vadd.f32 %v3358, %v3528
      %v3631 = vadd.f32 %v3359, %v3533
      %v3632 = vadd.f32 %v3360, %v3538
      %v3633 = vadd.f32 %v3361, %v3543
      %v3634 = vadd.f32 %v3362, %v3548
      %v3635 = vadd.f32 %v3363, %v3553
      %v3636 = vadd.f32 %v3364, %v3558
      %v3637 = vadd.f32 %v3365, %v3563
      %v3638 = vadd.f32 %v3366, %v3568
      %v3639 = vadd.f32 %v3367, %v3573
      %v3640 = vadd.f32 %v3368, %v3578
      %v3641 = vadd.f32 %v3369, %v3583
      %v3642 = vadd.f32 %v3370, %v3588
      %v3643 = vadd.f32 %v3371, %v3593
      %v3644 = vadd.f32 %v3372, %v3598
      %v3645 = vadd.f32 %v3373, %v3603
      %v3646 = vadd.f32 %v3374, %v3608
      %v3647 = vadd.f32 %v3375, %v3613
      %s3648 = scalar_lea.vmem %s4, 384
      %v3649 = vld [vmem:[%s3648] sm:$0xff]
      %v3650 = vld [vmem:[%s3648 + $0x8] sm:$0xff]
      %v3651 = vld [vmem:[%s3648 + $0x10] sm:$0xff]
      %v3652 = vld [vmem:[%s3648 + $0x18] sm:$0xff]
      %v3653 = vld [vmem:[%s3648 + $0x20] sm:$0xff]
      %v3654 = vld [vmem:[%s3648 + $0x28] sm:$0xff]
      %v3655 = vld [vmem:[%s3648 + $0x30] sm:$0xff]
      %v3656 = vld [vmem:[%s3648 + $0x38] sm:$0xff]
      %v3658 = vsel %vm455, %v1443, 0
      %v3661 = vsel %vm455, %v1448, 0
      %3663 = vmatprep.subr.mxu0 0.0
      %3664 = vmatpush1.msra.mxu0 %v3649
      %3665 = vmatprep.subr.mxu0 0.0
      %3666 = vmatpush1.msra.mxu0 %v3650
      %3667 = vmatprep.subr.mxu0 0.0
      %3668 = vmatpush1.msra.mxu0 %v3651
      %3669 = vmatprep.subr.mxu0 0.0
      %3670 = vmatpush1.msra.mxu0 %v3652
      %3671 = vmatprep.subr.mxu0 0.0
      %3672 = vmatpush1.msra.mxu0 %v3653
      %3673 = vmatprep.subr.mxu0 0.0
      %3674 = vmatpush1.msra.mxu0 %v3654
      %3675 = vmatprep.subr.mxu0 0.0
      %3676 = vmatpush1.msra.mxu0 %v3655
      %3677 = vmatprep.subr.mxu0 0.0
      %3678 = vmatpush1.msra.mxu0 %v3656
      %3679 = vmatprep.subr.mxu0 0.0
      %3680 = vmatpush1.msra.mxu0 0.0
      %3681 = vmatprep.subr.mxu0 0.0
      %3682 = vmatpush1.msra.mxu0 0.0
      %3683 = vmatprep.subr.mxu0 0.0
      %3684 = vmatpush1.msra.mxu0 0.0
      %3685 = vmatprep.subr.mxu0 0.0
      %3686 = vmatpush1.msra.mxu0 0.0
      %3687 = vmatprep.subr.mxu0 0.0
      %3688 = vmatpush1.msra.mxu0 0.0
      %3689 = vmatprep.subr.mxu0 0.0
      %3690 = vmatpush1.msra.mxu0 0.0
      %3691 = vmatprep.subr.mxu0 0.0
      %3692 = vmatpush1.msra.mxu0 0.0
      %3693 = vmatprep.subr.mxu0 0.0
      %3694 = vmatpush1.msra.mxu0 0.0
      %3695 = vmatprep.subr.mxu0 0.0
      %3696 = vmatpush1.msra.mxu0 0.0
      %3697 = vmatprep.subr.mxu0 0.0
      %3698 = vmatpush1.msra.mxu0 0.0
      %3699 = vmatprep.subr.mxu0 0.0
      %3700 = vmatpush1.msra.mxu0 0.0
      %3701 = vmatprep.subr.mxu0 0.0
      %3702 = vmatpush1.msra.mxu0 0.0
      %3703 = vmatprep.subr.mxu0 0.0
      %3704 = vmatpush1.msra.mxu0 0.0
      %3705 = vmatprep.subr.mxu0 0.0
      %3706 = vmatpush1.msra.mxu0 0.0
      %3707 = vmatprep.subr.mxu0 0.0
      %3708 = vmatpush1.msra.mxu0 0.0
      %3709 = vmatprep.subr.mxu0 0.0
      %3710 = vmatpush1.msra.mxu0 0.0
      %3711 = vmatprep.subr.mxu0 0.0
      %3712 = vmatpush1.msra.mxu0 0.0
      %3713 = vmatprep.subr.mxu0 0.0
      %3714 = vmatpush1.msra.mxu0 0.0
      %3715 = vmatprep.subr.mxu0 0.0
      %3716 = vmatpush1.msra.mxu0 0.0
      %3717 = vmatprep.subr.mxu0 0.0
      %3718 = vmatpush1.msra.mxu0 0.0
      %3719 = vmatprep.subr.mxu0 0.0
      %3720 = vmatpush1.msra.mxu0 0.0
      %3721 = vmatprep.subr.mxu0 0.0
      %3722 = vmatpush1.msra.mxu0 0.0
      %3723 = vmatprep.subr.mxu0 0.0
      %3724 = vmatpush1.msra.mxu0 0.0
      %3725 = vmatprep.subr.mxu0 0.0
      %3726 = vmatpush1.msra.mxu0 0.0
      %3727 = vmatprep.mubr.f32.mxu0 0.0
      %3728 = vmatmul.mubr.f32.gmra.mrb[0].mxu0 %v2162
      %v3729 = vpop.f32.mrb[0].mxu0
      %v3730 = vadd.f32 0.0, %v3729
      %v3731 = vpop.f32.mrb[0].mxu0
      %3732 = vmatprep.mubr.f32.mxu0 0.0
      %3733 = vmatmul.mubr.f32.gmra.mrb[0].mxu0 %v2165
      %v3734 = vpop.f32.mrb[0].mxu0
      %v3735 = vadd.f32 0.0, %v3734
      %v3736 = vpop.f32.mrb[0].mxu0
      %3737 = vmatprep.mubr.f32.mxu0 0.0
      %3738 = vmatmul.mubr.f32.gmra.mrb[0].mxu0 %v2168
      %v3739 = vpop.f32.mrb[0].mxu0
      %v3740 = vadd.f32 0.0, %v3739
      %v3741 = vpop.f32.mrb[0].mxu0
      %3742 = vmatprep.mubr.f32.mxu0 0.0
      %3743 = vmatmul.mubr.f32.gmra.mrb[0].mxu0 %v2171
      %v3744 = vpop.f32.mrb[0].mxu0
      %v3745 = vadd.f32 0.0, %v3744
      %v3746 = vpop.f32.mrb[0].mxu0
      %3747 = vmatprep.mubr.f32.mxu0 0.0
      %3748 = vmatmul.mubr.f32.gmra.mrb[0].mxu0 %v2174
      %v3749 = vpop.f32.mrb[0].mxu0
      %v3750 = vadd.f32 0.0, %v3749
      %v3751 = vpop.f32.mrb[0].mxu0
      %3752 = vmatprep.mubr.f32.mxu0 0.0
      %3753 = vmatmul.mubr.f32.gmra.mrb[0].mxu0 %v2177
      %v3754 = vpop.f32.mrb[0].mxu0
      %v3755 = vadd.f32 0.0, %v3754
      %v3756 = vpop.f32.mrb[0].mxu0
      %3757 = vmatprep.mubr.f32.mxu0 0.0
      %3758 = vmatmul.mubr.f32.gmra.mrb[0].mxu0 %v2180
      %v3759 = vpop.f32.mrb[0].mxu0
      %v3760 = vadd.f32 0.0, %v3759
      %v3761 = vpop.f32.mrb[0].mxu0
      %3762 = vmatprep.mubr.f32.mxu0 0.0
      %3763 = vmatmul.mubr.f32.gmra.mrb[0].mxu0 %v2183
      %v3764 = vpop.f32.mrb[0].mxu0
      %v3765 = vadd.f32 0.0, %v3764
      %v3766 = vpop.f32.mrb[0].mxu0
      %3767 = vmatprep.mubr.f32.mxu0 0.0
      %3768 = vmatmul.mubr.f32.gmra.mrb[0].mxu0 %v2186
      %v3769 = vpop.f32.mrb[0].mxu0
      %v3770 = vadd.f32 0.0, %v3769
      %v3771 = vpop.f32.mrb[0].mxu0
      %3772 = vmatprep.mubr.f32.mxu0 0.0
      %3773 = vmatmul.mubr.f32.gmra.mrb[0].mxu0 %v2189
      %v3774 = vpop.f32.mrb[0].mxu0
      %v3775 = vadd.f32 0.0, %v3774
      %v3776 = vpop.f32.mrb[0].mxu0
      %3777 = vmatprep.mubr.f32.mxu0 0.0
      %3778 = vmatmul.mubr.f32.gmra.mrb[0].mxu0 %v2192
      %v3779 = vpop.f32.mrb[0].mxu0
      %v3780 = vadd.f32 0.0, %v3779
      %v3781 = vpop.f32.mrb[0].mxu0
      %3782 = vmatprep.mubr.f32.mxu0 0.0
      %3783 = vmatmul.mubr.f32.gmra.mrb[0].mxu0 %v2195
      %v3784 = vpop.f32.mrb[0].mxu0
      %v3785 = vadd.f32 0.0, %v3784
      %v3786 = vpop.f32.mrb[0].mxu0
      %3787 = vmatprep.mubr.f32.mxu0 0.0
      %3788 = vmatmul.mubr.f32.gmra.mrb[0].mxu0 %v2198
      %v3789 = vpop.f32.mrb[0].mxu0
      %v3790 = vadd.f32 0.0, %v3789
      %v3791 = vpop.f32.mrb[0].mxu0
      %3792 = vmatprep.mubr.f32.mxu0 0.0
      %3793 = vmatmul.mubr.f32.gmra.mrb[0].mxu0 %v2201
      %v3794 = vpop.f32.mrb[0].mxu0
      %v3795 = vadd.f32 0.0, %v3794
      %v3796 = vpop.f32.mrb[0].mxu0
      %3797 = vmatprep.mubr.f32.mxu0 0.0
      %3798 = vmatmul.mubr.f32.gmra.mrb[0].mxu0 %v2204
      %v3799 = vpop.f32.mrb[0].mxu0
      %v3800 = vadd.f32 0.0, %v3799
      %v3801 = vpop.f32.mrb[0].mxu0
      %3802 = vmatprep.mubr.f32.mxu0 0.0
      %3803 = vmatmul.mubr.f32.gmra.mrb[0].mxu0 %v2207
      %v3804 = vpop.f32.mrb[0].mxu0
      %v3805 = vadd.f32 0.0, %v3804
      %v3806 = vpop.f32.mrb[0].mxu0
      %3807 = vmatprep.mubr.f32.mxu0 0.0
      %3808 = vmatmul.mubr.f32.gmra.mrb[0].mxu0 %v2210
      %v3809 = vpop.f32.mrb[0].mxu0
      %v3810 = vadd.f32 0.0, %v3809
      %v3811 = vpop.f32.mrb[0].mxu0
      %3812 = vmatprep.mubr.f32.mxu0 0.0
      %3813 = vmatmul.mubr.f32.gmra.mrb[0].mxu0 %v2213
      %v3814 = vpop.f32.mrb[0].mxu0
      %v3815 = vadd.f32 0.0, %v3814
      %v3816 = vpop.f32.mrb[0].mxu0
      %3817 = vmatprep.mubr.f32.mxu0 0.0
      %3818 = vmatmul.mubr.f32.gmra.mrb[0].mxu0 %v2216
      %v3819 = vpop.f32.mrb[0].mxu0
      %v3820 = vadd.f32 0.0, %v3819
      %v3821 = vpop.f32.mrb[0].mxu0
      %3822 = vmatprep.mubr.f32.mxu0 0.0
      %3823 = vmatmul.mubr.f32.gmra.mrb[0].mxu0 %v2219
      %v3824 = vpop.f32.mrb[0].mxu0
      %v3825 = vadd.f32 0.0, %v3824
      %v3826 = vpop.f32.mrb[0].mxu0
      %3827 = vmatprep.mubr.f32.mxu0 0.0
      %3828 = vmatmul.mubr.f32.gmra.mrb[0].mxu0 %v2222
      %v3829 = vpop.f32.mrb[0].mxu0
      %v3830 = vadd.f32 0.0, %v3829
      %v3831 = vpop.f32.mrb[0].mxu0
      %3832 = vmatprep.mubr.f32.mxu0 0.0
      %3833 = vmatmul.mubr.f32.gmra.mrb[0].mxu0 %v2225
      %v3834 = vpop.f32.mrb[0].mxu0
      %v3835 = vadd.f32 0.0, %v3834
      %v3836 = vpop.f32.mrb[0].mxu0
      %3837 = vmatprep.mubr.f32.mxu0 0.0
      %3838 = vmatmul.mubr.f32.gmra.mrb[0].mxu0 %v2228
      %v3839 = vpop.f32.mrb[0].mxu0
      %v3840 = vadd.f32 0.0, %v3839
      %v3841 = vpop.f32.mrb[0].mxu0
      %3842 = vmatprep.mubr.f32.mxu0 0.0
      %3843 = vmatmul.mubr.f32.gmra.mrb[0].mxu0 %v2231
      %v3844 = vpop.f32.mrb[0].mxu0
      %v3845 = vadd.f32 0.0, %v3844
      %v3846 = vpop.f32.mrb[0].mxu0
      %3847 = vmatprep.mubr.f32.mxu0 0.0
      %3848 = vmatmul.mubr.f32.gmra.mrb[0].mxu0 %v2234
      %v3849 = vpop.f32.mrb[0].mxu0
      %v3850 = vadd.f32 0.0, %v3849
      %v3851 = vpop.f32.mrb[0].mxu0
      %3852 = vmatprep.mubr.f32.mxu0 0.0
      %3853 = vmatmul.mubr.f32.gmra.mrb[0].mxu0 %v2237
      %v3854 = vpop.f32.mrb[0].mxu0
      %v3855 = vadd.f32 0.0, %v3854
      %v3856 = vpop.f32.mrb[0].mxu0
      %3857 = vmatprep.mubr.f32.mxu0 0.0
      %3858 = vmatmul.mubr.f32.gmra.mrb[0].mxu0 %v2240
      %v3859 = vpop.f32.mrb[0].mxu0
      %v3860 = vadd.f32 0.0, %v3859
      %v3861 = vpop.f32.mrb[0].mxu0
      %3862 = vmatprep.mubr.f32.mxu0 0.0
      %3863 = vmatmul.mubr.f32.gmra.mrb[0].mxu0 %v2243
      %v3864 = vpop.f32.mrb[0].mxu0
      %v3865 = vadd.f32 0.0, %v3864
      %v3866 = vpop.f32.mrb[0].mxu0
      %3867 = vmatprep.mubr.f32.mxu0 0.0
      %3868 = vmatmul.mubr.f32.gmra.mrb[0].mxu0 %v2842
      %v3869 = vpop.f32.mrb[0].mxu0
      %v3870 = vadd.f32 0.0, %v3869
      %v3871 = vpop.f32.mrb[0].mxu0
      %3872 = vmatprep.mubr.f32.mxu0 0.0
      %3873 = vmatmul.mubr.f32.gmra.mrb[0].mxu0 %v2845
      %v3874 = vpop.f32.mrb[0].mxu0
      %v3875 = vadd.f32 0.0, %v3874
      %v3876 = vpop.f32.mrb[0].mxu0
      %3877 = vmatprep.mubr.f32.mxu0 0.0
      %3878 = vmatmul.mubr.f32.gmra.mrb[0].mxu0 %v3658
      %v3879 = vpop.f32.mrb[0].mxu0
      %v3880 = vadd.f32 0.0, %v3879
      %v3881 = vpop.f32.mrb[0].mxu0
      %3882 = vmatprep.mubr.f32.mxu0 0.0
      %3883 = vmatmul.mubr.f32.gmra.mrb[0].mxu0 %v3661
      %v3884 = vpop.f32.mrb[0].mxu0
      %v3885 = vadd.f32 0.0, %v3884
      %v3886 = vpop.f32.mrb[0].mxu0
      %3887 = vdwg.mxu0
      %v3888 = vadd.f32 %v3616, %v3730
      %v3889 = vadd.f32 %v3617, %v3735
      %v3890 = vadd.f32 %v3618, %v3740
      %v3891 = vadd.f32 %v3619, %v3745
      %v3892 = vadd.f32 %v3620, %v3750
      %v3893 = vadd.f32 %v3621, %v3755
      %v3894 = vadd.f32 %v3622, %v3760
      %v3895 = vadd.f32 %v3623, %v3765
      %v3896 = vadd.f32 %v3624, %v3770
      %v3897 = vadd.f32 %v3625, %v3775
      %v3898 = vadd.f32 %v3626, %v3780
      %v3899 = vadd.f32 %v3627, %v3785
      %v3900 = vadd.f32 %v3628, %v3790
      %v3901 = vadd.f32 %v3629, %v3795
      %v3902 = vadd.f32 %v3630, %v3800
      %v3903 = vadd.f32 %v3631, %v3805
      %v3904 = vadd.f32 %v3632, %v3810
      %v3905 = vadd.f32 %v3633, %v3815
      %v3906 = vadd.f32 %v3634, %v3820
      %v3907 = vadd.f32 %v3635, %v3825
      %v3908 = vadd.f32 %v3636, %v3830
      %v3909 = vadd.f32 %v3637, %v3835
      %v3910 = vadd.f32 %v3638, %v3840
      %v3911 = vadd.f32 %v3639, %v3845
      %v3912 = vadd.f32 %v3640, %v3850
      %v3913 = vadd.f32 %v3641, %v3855
      %v3914 = vadd.f32 %v3642, %v3860
      %v3915 = vadd.f32 %v3643, %v3865
      %v3916 = vadd.f32 %v3644, %v3870
      %v3917 = vadd.f32 %v3645, %v3875
      %v3918 = vadd.f32 %v3646, %v3880
      %v3919 = vadd.f32 %v3647, %v3885
      %s3920 = scalar_lea.vmem %s4, 448
      %v3921 = vld [vmem:[%s3920] sm:$0xff]
      %v3922 = vld [vmem:[%s3920 + $0x8] sm:$0xff]
      %v3923 = vld [vmem:[%s3920 + $0x10] sm:$0xff]
      %v3924 = vld [vmem:[%s3920 + $0x18] sm:$0xff]
      %v3925 = vld [vmem:[%s3920 + $0x20] sm:$0xff]
      %v3926 = vld [vmem:[%s3920 + $0x28] sm:$0xff]
      %v3927 = vld [vmem:[%s3920 + $0x30] sm:$0xff]
      %v3928 = vld [vmem:[%s3920 + $0x38] sm:$0xff]
      %v3930 = vsel %vm455, %v1623, 0
      %v3933 = vsel %vm455, %v1628, 0
      %3935 = vmatprep.subr.mxu0 0.0
      %3936 = vmatpush1.msra.mxu0 %v3921
      %3937 = vmatprep.subr.mxu0 0.0
      %3938 = vmatpush1.msra.mxu0 %v3922
      %3939 = vmatprep.subr.mxu0 0.0
      %3940 = vmatpush1.msra.mxu0 %v3923
      %3941 = vmatprep.subr.mxu0 0.0
      %3942 = vmatpush1.msra.mxu0 %v3924
      %3943 = vmatprep.subr.mxu0 0.0
      %3944 = vmatpush1.msra.mxu0 %v3925
      %3945 = vmatprep.subr.mxu0 0.0
      %3946 = vmatpush1.msra.mxu0 %v3926
      %3947 = vmatprep.subr.mxu0 0.0
      %3948 = vmatpush1.msra.mxu0 %v3927
      %3949 = vmatprep.subr.mxu0 0.0
      %3950 = vmatpush1.msra.mxu0 %v3928
      %3951 = vmatprep.subr.mxu0 0.0
      %3952 = vmatpush1.msra.mxu0 0.0
      %3953 = vmatprep.subr.mxu0 0.0
      %3954 = vmatpush1.msra.mxu0 0.0
      %3955 = vmatprep.subr.mxu0 0.0
      %3956 = vmatpush1.msra.mxu0 0.0
      %3957 = vmatprep.subr.mxu0 0.0
      %3958 = vmatpush1.msra.mxu0 0.0
      %3959 = vmatprep.subr.mxu0 0.0
      %3960 = vmatpush1.msra.mxu0 0.0
      %3961 = vmatprep.subr.mxu0 0.0
      %3962 = vmatpush1.msra.mxu0 0.0
      %3963 = vmatprep.subr.mxu0 0.0
      %3964 = vmatpush1.msra.mxu0 0.0
      %3965 = vmatprep.subr.mxu0 0.0
      %3966 = vmatpush1.msra.mxu0 0.0
      %3967 = vmatprep.subr.mxu0 0.0
      %3968 = vmatpush1.msra.mxu0 0.0
      %3969 = vmatprep.subr.mxu0 0.0
      %3970 = vmatpush1.msra.mxu0 0.0
      %3971 = vmatprep.subr.mxu0 0.0
      %3972 = vmatpush1.msra.mxu0 0.0
      %3973 = vmatprep.subr.mxu0 0.0
      %3974 = vmatpush1.msra.mxu0 0.0
      %3975 = vmatprep.subr.mxu0 0.0
      %3976 = vmatpush1.msra.mxu0 0.0
      %3977 = vmatprep.subr.mxu0 0.0
      %3978 = vmatpush1.msra.mxu0 0.0
      %3979 = vmatprep.subr.mxu0 0.0
      %3980 = vmatpush1.msra.mxu0 0.0
      %3981 = vmatprep.subr.mxu0 0.0
      %3982 = vmatpush1.msra.mxu0 0.0
      %3983 = vmatprep.subr.mxu0 0.0
      %3984 = vmatpush1.msra.mxu0 0.0
      %3985 = vmatprep.subr.mxu0 0.0
      %3986 = vmatpush1.msra.mxu0 0.0
      %3987 = vmatprep.subr.mxu0 0.0
      %3988 = vmatpush1.msra.mxu0 0.0
      %3989 = vmatprep.subr.mxu0 0.0
      %3990 = vmatpush1.msra.mxu0 0.0
      %3991 = vmatprep.subr.mxu0 0.0
      %3992 = vmatpush1.msra.mxu0 0.0
      %3993 = vmatprep.subr.mxu0 0.0
      %3994 = vmatpush1.msra.mxu0 0.0
      %3995 = vmatprep.subr.mxu0 0.0
      %3996 = vmatpush1.msra.mxu0 0.0
      %3997 = vmatprep.subr.mxu0 0.0
      %3998 = vmatpush1.msra.mxu0 0.0
      %3999 = vmatprep.mubr.f32.mxu0 0.0
      %4000 = vmatmul.mubr.f32.gmra.mrb[0].mxu0 %v1841
      %v4001 = vpop.f32.mrb[0].mxu0
      %v4002 = vadd.f32 0.0, %v4001
      %v4003 = vpop.f32.mrb[0].mxu0
      %4004 = vmatprep.mubr.f32.mxu0 0.0
      %4005 = vmatmul.mubr.f32.gmra.mrb[0].mxu0 %v1844
      %v4006 = vpop.f32.mrb[0].mxu0
      %v4007 = vadd.f32 0.0, %v4006
      %v4008 = vpop.f32.mrb[0].mxu0
      %4009 = vmatprep.mubr.f32.mxu0 0.0
      %4010 = vmatmul.mubr.f32.gmra.mrb[0].mxu0 %v1847
      %v4011 = vpop.f32.mrb[0].mxu0
      %v4012 = vadd.f32 0.0, %v4011
      %v4013 = vpop.f32.mrb[0].mxu0
      %4014 = vmatprep.mubr.f32.mxu0 0.0
      %4015 = vmatmul.mubr.f32.gmra.mrb[0].mxu0 %v1850
      %v4016 = vpop.f32.mrb[0].mxu0
      %v4017 = vadd.f32 0.0, %v4016
      %v4018 = vpop.f32.mrb[0].mxu0
      %4019 = vmatprep.mubr.f32.mxu0 0.0
      %4020 = vmatmul.mubr.f32.gmra.mrb[0].mxu0 %v1853
      %v4021 = vpop.f32.mrb[0].mxu0
      %v4022 = vadd.f32 0.0, %v4021
      %v4023 = vpop.f32.mrb[0].mxu0
      %4024 = vmatprep.mubr.f32.mxu0 0.0
      %4025 = vmatmul.mubr.f32.gmra.mrb[0].mxu0 %v1856
      %v4026 = vpop.f32.mrb[0].mxu0
      %v4027 = vadd.f32 0.0, %v4026
      %v4028 = vpop.f32.mrb[0].mxu0
      %4029 = vmatprep.mubr.f32.mxu0 0.0
      %4030 = vmatmul.mubr.f32.gmra.mrb[0].mxu0 %v1859
      %v4031 = vpop.f32.mrb[0].mxu0
      %v4032 = vadd.f32 0.0, %v4031
      %v4033 = vpop.f32.mrb[0].mxu0
      %4034 = vmatprep.mubr.f32.mxu0 0.0
      %4035 = vmatmul.mubr.f32.gmra.mrb[0].mxu0 %v1862
      %v4036 = vpop.f32.mrb[0].mxu0
      %v4037 = vadd.f32 0.0, %v4036
      %v4038 = vpop.f32.mrb[0].mxu0
      %4039 = vmatprep.mubr.f32.mxu0 0.0
      %4040 = vmatmul.mubr.f32.gmra.mrb[0].mxu0 %v1865
      %v4041 = vpop.f32.mrb[0].mxu0
      %v4042 = vadd.f32 0.0, %v4041
      %v4043 = vpop.f32.mrb[0].mxu0
      %4044 = vmatprep.mubr.f32.mxu0 0.0
      %4045 = vmatmul.mubr.f32.gmra.mrb[0].mxu0 %v1868
      %v4046 = vpop.f32.mrb[0].mxu0
      %v4047 = vadd.f32 0.0, %v4046
      %v4048 = vpop.f32.mrb[0].mxu0
      %4049 = vmatprep.mubr.f32.mxu0 0.0
      %4050 = vmatmul.mubr.f32.gmra.mrb[0].mxu0 %v1871
      %v4051 = vpop.f32.mrb[0].mxu0
      %v4052 = vadd.f32 0.0, %v4051
      %v4053 = vpop.f32.mrb[0].mxu0
      %4054 = vmatprep.mubr.f32.mxu0 0.0
      %4055 = vmatmul.mubr.f32.gmra.mrb[0].mxu0 %v1874
      %v4056 = vpop.f32.mrb[0].mxu0
      %v4057 = vadd.f32 0.0, %v4056
      %v4058 = vpop.f32.mrb[0].mxu0
      %4059 = vmatprep.mubr.f32.mxu0 0.0
      %4060 = vmatmul.mubr.f32.gmra.mrb[0].mxu0 %v1877
      %v4061 = vpop.f32.mrb[0].mxu0
      %v4062 = vadd.f32 0.0, %v4061
      %v4063 = vpop.f32.mrb[0].mxu0
      %4064 = vmatprep.mubr.f32.mxu0 0.0
      %4065 = vmatmul.mubr.f32.gmra.mrb[0].mxu0 %v1880
      %v4066 = vpop.f32.mrb[0].mxu0
      %v4067 = vadd.f32 0.0, %v4066
      %v4068 = vpop.f32.mrb[0].mxu0
      %4069 = vmatprep.mubr.f32.mxu0 0.0
      %4070 = vmatmul.mubr.f32.gmra.mrb[0].mxu0 %v1883
      %v4071 = vpop.f32.mrb[0].mxu0
      %v4072 = vadd.f32 0.0, %v4071
      %v4073 = vpop.f32.mrb[0].mxu0
      %4074 = vmatprep.mubr.f32.mxu0 0.0
      %4075 = vmatmul.mubr.f32.gmra.mrb[0].mxu0 %v1886
      %v4076 = vpop.f32.mrb[0].mxu0
      %v4077 = vadd.f32 0.0, %v4076
      %v4078 = vpop.f32.mrb[0].mxu0
      %4079 = vmatprep.mubr.f32.mxu0 0.0
      %4080 = vmatmul.mubr.f32.gmra.mrb[0].mxu0 %v1889
      %v4081 = vpop.f32.mrb[0].mxu0
      %v4082 = vadd.f32 0.0, %v4081
      %v4083 = vpop.f32.mrb[0].mxu0
      %4084 = vmatprep.mubr.f32.mxu0 0.0
      %4085 = vmatmul.mubr.f32.gmra.mrb[0].mxu0 %v1892
      %v4086 = vpop.f32.mrb[0].mxu0
      %v4087 = vadd.f32 0.0, %v4086
      %v4088 = vpop.f32.mrb[0].mxu0
      %4089 = vmatprep.mubr.f32.mxu0 0.0
      %4090 = vmatmul.mubr.f32.gmra.mrb[0].mxu0 %v1895
      %v4091 = vpop.f32.mrb[0].mxu0
      %v4092 = vadd.f32 0.0, %v4091
      %v4093 = vpop.f32.mrb[0].mxu0
      %4094 = vmatprep.mubr.f32.mxu0 0.0
      %4095 = vmatmul.mubr.f32.gmra.mrb[0].mxu0 %v1898
      %v4096 = vpop.f32.mrb[0].mxu0
      %v4097 = vadd.f32 0.0, %v4096
      %v4098 = vpop.f32.mrb[0].mxu0
      %4099 = vmatprep.mubr.f32.mxu0 0.0
      %4100 = vmatmul.mubr.f32.gmra.mrb[0].mxu0 %v1901
      %v4101 = vpop.f32.mrb[0].mxu0
      %v4102 = vadd.f32 0.0, %v4101
      %v4103 = vpop.f32.mrb[0].mxu0
      %4104 = vmatprep.mubr.f32.mxu0 0.0
      %4105 = vmatmul.mubr.f32.gmra.mrb[0].mxu0 %v1904
      %v4106 = vpop.f32.mrb[0].mxu0
      %v4107 = vadd.f32 0.0, %v4106
      %v4108 = vpop.f32.mrb[0].mxu0
      %4109 = vmatprep.mubr.f32.mxu0 0.0
      %4110 = vmatmul.mubr.f32.gmra.mrb[0].mxu0 %v1907
      %v4111 = vpop.f32.mrb[0].mxu0
      %v4112 = vadd.f32 0.0, %v4111
      %v4113 = vpop.f32.mrb[0].mxu0
      %4114 = vmatprep.mubr.f32.mxu0 0.0
      %4115 = vmatmul.mubr.f32.gmra.mrb[0].mxu0 %v1910
      %v4116 = vpop.f32.mrb[0].mxu0
      %v4117 = vadd.f32 0.0, %v4116
      %v4118 = vpop.f32.mrb[0].mxu0
      %4119 = vmatprep.mubr.f32.mxu0 0.0
      %4120 = vmatmul.mubr.f32.gmra.mrb[0].mxu0 %v1913
      %v4121 = vpop.f32.mrb[0].mxu0
      %v4122 = vadd.f32 0.0, %v4121
      %v4123 = vpop.f32.mrb[0].mxu0
      %4124 = vmatprep.mubr.f32.mxu0 0.0
      %4125 = vmatmul.mubr.f32.gmra.mrb[0].mxu0 %v1916
      %v4126 = vpop.f32.mrb[0].mxu0
      %v4127 = vadd.f32 0.0, %v4126
      %v4128 = vpop.f32.mrb[0].mxu0
      %4129 = vmatprep.mubr.f32.mxu0 0.0
      %4130 = vmatmul.mubr.f32.gmra.mrb[0].mxu0 %v1919
      %v4131 = vpop.f32.mrb[0].mxu0
      %v4132 = vadd.f32 0.0, %v4131
      %v4133 = vpop.f32.mrb[0].mxu0
      %4134 = vmatprep.mubr.f32.mxu0 0.0
      %4135 = vmatmul.mubr.f32.gmra.mrb[0].mxu0 %v1922
      %v4136 = vpop.f32.mrb[0].mxu0
      %v4137 = vadd.f32 0.0, %v4136
      %v4138 = vpop.f32.mrb[0].mxu0
      %4139 = vmatprep.mubr.f32.mxu0 0.0
      %4140 = vmatmul.mubr.f32.gmra.mrb[0].mxu0 %v3114
      %v4141 = vpop.f32.mrb[0].mxu0
      %v4142 = vadd.f32 0.0, %v4141
      %v4143 = vpop.f32.mrb[0].mxu0
      %4144 = vmatprep.mubr.f32.mxu0 0.0
      %4145 = vmatmul.mubr.f32.gmra.mrb[0].mxu0 %v3117
      %v4146 = vpop.f32.mrb[0].mxu0
      %v4147 = vadd.f32 0.0, %v4146
      %v4148 = vpop.f32.mrb[0].mxu0
      %4149 = vmatprep.mubr.f32.mxu0 0.0
      %4150 = vmatmul.mubr.f32.gmra.mrb[0].mxu0 %v3930
      %v4151 = vpop.f32.mrb[0].mxu0
      %v4152 = vadd.f32 0.0, %v4151
      %v4153 = vpop.f32.mrb[0].mxu0
      %4154 = vmatprep.mubr.f32.mxu0 0.0
      %4155 = vmatmul.mubr.f32.gmra.mrb[0].mxu0 %v3933
      %v4156 = vpop.f32.mrb[0].mxu0
      %v4157 = vadd.f32 0.0, %v4156
      %v4158 = vpop.f32.mrb[0].mxu0
      %4159 = vdwg.mxu0
      %v4160 = vadd.f32 %v3888, %v4002
      %v4161 = vadd.f32 %v3889, %v4007
      %v4162 = vadd.f32 %v3890, %v4012
      %v4163 = vadd.f32 %v3891, %v4017
      %v4164 = vadd.f32 %v3892, %v4022
      %v4165 = vadd.f32 %v3893, %v4027
      %v4166 = vadd.f32 %v3894, %v4032
      %v4167 = vadd.f32 %v3895, %v4037
      %v4168 = vadd.f32 %v3896, %v4042
      %v4169 = vadd.f32 %v3897, %v4047
      %v4170 = vadd.f32 %v3898, %v4052
      %v4171 = vadd.f32 %v3899, %v4057
      %v4172 = vadd.f32 %v3900, %v4062
      %v4173 = vadd.f32 %v3901, %v4067
      %v4174 = vadd.f32 %v3902, %v4072
      %v4175 = vadd.f32 %v3903, %v4077
      %v4176 = vadd.f32 %v3904, %v4082
      %v4177 = vadd.f32 %v3905, %v4087
      %v4178 = vadd.f32 %v3906, %v4092
      %v4179 = vadd.f32 %v3907, %v4097
      %v4180 = vadd.f32 %v3908, %v4102
      %v4181 = vadd.f32 %v3909, %v4107
      %v4182 = vadd.f32 %v3910, %v4112
      %v4183 = vadd.f32 %v3911, %v4117
      %v4184 = vadd.f32 %v3912, %v4122
      %v4185 = vadd.f32 %v3913, %v4127
      %v4186 = vadd.f32 %v3914, %v4132
      %v4187 = vadd.f32 %v3915, %v4137
      %v4188 = vadd.f32 %v3916, %v4142
      %v4189 = vadd.f32 %v3917, %v4147
      %v4190 = vadd.f32 %v3918, %v4152
      %v4191 = vadd.f32 %v3919, %v4157
      %s4192 = scalar_lea.vmem %s4, 512
      %v4193 = vld [vmem:[%s4192] sm:$0xff]
      %v4194 = vld [vmem:[%s4192 + $0x8] sm:$0xff]
      %v4195 = vld [vmem:[%s4192 + $0x10] sm:$0xff]
      %v4196 = vld [vmem:[%s4192 + $0x18] sm:$0xff]
      %v4197 = vld [vmem:[%s4192 + $0x20] sm:$0xff]
      %v4198 = vld [vmem:[%s4192 + $0x28] sm:$0xff]
      %v4199 = vld [vmem:[%s4192 + $0x30] sm:$0xff]
      %v4200 = vld [vmem:[%s4192 + $0x38] sm:$0xff]
      %v4202 = vsel %vm455, %v1803, 0
      %v4205 = vsel %vm455, %v1808, 0
      %4207 = vmatprep.subr.mxu0 0.0
      %4208 = vmatpush1.msra.mxu0 %v4193
      %4209 = vmatprep.subr.mxu0 0.0
      %4210 = vmatpush1.msra.mxu0 %v4194
      %4211 = vmatprep.subr.mxu0 0.0
      %4212 = vmatpush1.msra.mxu0 %v4195
      %4213 = vmatprep.subr.mxu0 0.0
      %4214 = vmatpush1.msra.mxu0 %v4196
      %4215 = vmatprep.subr.mxu0 0.0
      %4216 = vmatpush1.msra.mxu0 %v4197
      %4217 = vmatprep.subr.mxu0 0.0
      %4218 = vmatpush1.msra.mxu0 %v4198
      %4219 = vmatprep.subr.mxu0 0.0
      %4220 = vmatpush1.msra.mxu0 %v4199
      %4221 = vmatprep.subr.mxu0 0.0
      %4222 = vmatpush1.msra.mxu0 %v4200
      %4223 = vmatprep.subr.mxu0 0.0
      %4224 = vmatpush1.msra.mxu0 0.0
      %4225 = vmatprep.subr.mxu0 0.0
      %4226 = vmatpush1.msra.mxu0 0.0
      %4227 = vmatprep.subr.mxu0 0.0
      %4228 = vmatpush1.msra.mxu0 0.0
      %4229 = vmatprep.subr.mxu0 0.0
      %4230 = vmatpush1.msra.mxu0 0.0
      %4231 = vmatprep.subr.mxu0 0.0
      %4232 = vmatpush1.msra.mxu0 0.0
      %4233 = vmatprep.subr.mxu0 0.0
      %4234 = vmatpush1.msra.mxu0 0.0
      %4235 = vmatprep.subr.mxu0 0.0
      %4236 = vmatpush1.msra.mxu0 0.0
      %4237 = vmatprep.subr.mxu0 0.0
      %4238 = vmatpush1.msra.mxu0 0.0
      %4239 = vmatprep.subr.mxu0 0.0
      %4240 = vmatpush1.msra.mxu0 0.0
      %4241 = vmatprep.subr.mxu0 0.0
      %4242 = vmatpush1.msra.mxu0 0.0
      %4243 = vmatprep.subr.mxu0 0.0
      %4244 = vmatpush1.msra.mxu0 0.0
      %4245 = vmatprep.subr.mxu0 0.0
      %4246 = vmatpush1.msra.mxu0 0.0
      %4247 = vmatprep.subr.mxu0 0.0
      %4248 = vmatpush1.msra.mxu0 0.0
      %4249 = vmatprep.subr.mxu0 0.0
      %4250 = vmatpush1.msra.mxu0 0.0
      %4251 = vmatprep.subr.mxu0 0.0
      %4252 = vmatpush1.msra.mxu0 0.0
      %4253 = vmatprep.subr.mxu0 0.0
      %4254 = vmatpush1.msra.mxu0 0.0
      %4255 = vmatprep.subr.mxu0 0.0
      %4256 = vmatpush1.msra.mxu0 0.0
      %4257 = vmatprep.subr.mxu0 0.0
      %4258 = vmatpush1.msra.mxu0 0.0
      %4259 = vmatprep.subr.mxu0 0.0
      %4260 = vmatpush1.msra.mxu0 0.0
      %4261 = vmatprep.subr.mxu0 0.0
      %4262 = vmatpush1.msra.mxu0 0.0
      %4263 = vmatprep.subr.mxu0 0.0
      %4264 = vmatpush1.msra.mxu0 0.0
      %4265 = vmatprep.subr.mxu0 0.0
      %4266 = vmatpush1.msra.mxu0 0.0
      %4267 = vmatprep.subr.mxu0 0.0
      %4268 = vmatpush1.msra.mxu0 0.0
      %4269 = vmatprep.subr.mxu0 0.0
      %4270 = vmatpush1.msra.mxu0 0.0
      %4271 = vmatprep.mubr.f32.mxu0 0.0
      %4272 = vmatmul.mubr.f32.gmra.mrb[0].mxu0 %v2492
      %v4273 = vpop.f32.mrb[0].mxu0
      %v4274 = vadd.f32 0.0, %v4273
      %v4275 = vpop.f32.mrb[0].mxu0
      %4276 = vmatprep.mubr.f32.mxu0 0.0
      %4277 = vmatmul.mubr.f32.gmra.mrb[0].mxu0 %v2495
      %v4278 = vpop.f32.mrb[0].mxu0
      %v4279 = vadd.f32 0.0, %v4278
      %v4280 = vpop.f32.mrb[0].mxu0
      %4281 = vmatprep.mubr.f32.mxu0 0.0
      %4282 = vmatmul.mubr.f32.gmra.mrb[0].mxu0 %v2498
      %v4283 = vpop.f32.mrb[0].mxu0
      %v4284 = vadd.f32 0.0, %v4283
      %v4285 = vpop.f32.mrb[0].mxu0
      %4286 = vmatprep.mubr.f32.mxu0 0.0
      %4287 = vmatmul.mubr.f32.gmra.mrb[0].mxu0 %v2501
      %v4288 = vpop.f32.mrb[0].mxu0
      %v4289 = vadd.f32 0.0, %v4288
      %v4290 = vpop.f32.mrb[0].mxu0
      %4291 = vmatprep.mubr.f32.mxu0 0.0
      %4292 = vmatmul.mubr.f32.gmra.mrb[0].mxu0 %v2504
      %v4293 = vpop.f32.mrb[0].mxu0
      %v4294 = vadd.f32 0.0, %v4293
      %v4295 = vpop.f32.mrb[0].mxu0
      %4296 = vmatprep.mubr.f32.mxu0 0.0
      %4297 = vmatmul.mubr.f32.gmra.mrb[0].mxu0 %v2507
      %v4298 = vpop.f32.mrb[0].mxu0
      %v4299 = vadd.f32 0.0, %v4298
      %v4300 = vpop.f32.mrb[0].mxu0
      %4301 = vmatprep.mubr.f32.mxu0 0.0
      %4302 = vmatmul.mubr.f32.gmra.mrb[0].mxu0 %v2510
      %v4303 = vpop.f32.mrb[0].mxu0
      %v4304 = vadd.f32 0.0, %v4303
      %v4305 = vpop.f32.mrb[0].mxu0
      %4306 = vmatprep.mubr.f32.mxu0 0.0
      %4307 = vmatmul.mubr.f32.gmra.mrb[0].mxu0 %v2513
      %v4308 = vpop.f32.mrb[0].mxu0
      %v4309 = vadd.f32 0.0, %v4308
      %v4310 = vpop.f32.mrb[0].mxu0
      %4311 = vmatprep.mubr.f32.mxu0 0.0
      %4312 = vmatmul.mubr.f32.gmra.mrb[0].mxu0 %v2516
      %v4313 = vpop.f32.mrb[0].mxu0
      %v4314 = vadd.f32 0.0, %v4313
      %v4315 = vpop.f32.mrb[0].mxu0
      %4316 = vmatprep.mubr.f32.mxu0 0.0
      %4317 = vmatmul.mubr.f32.gmra.mrb[0].mxu0 %v2519
      %v4318 = vpop.f32.mrb[0].mxu0
      %v4319 = vadd.f32 0.0, %v4318
      %v4320 = vpop.f32.mrb[0].mxu0
      %4321 = vmatprep.mubr.f32.mxu0 0.0
      %4322 = vmatmul.mubr.f32.gmra.mrb[0].mxu0 %v2522
      %v4323 = vpop.f32.mrb[0].mxu0
      %v4324 = vadd.f32 0.0, %v4323
      %v4325 = vpop.f32.mrb[0].mxu0
      %4326 = vmatprep.mubr.f32.mxu0 0.0
      %4327 = vmatmul.mubr.f32.gmra.mrb[0].mxu0 %v2525
      %v4328 = vpop.f32.mrb[0].mxu0
      %v4329 = vadd.f32 0.0, %v4328
      %v4330 = vpop.f32.mrb[0].mxu0
      %4331 = vmatprep.mubr.f32.mxu0 0.0
      %4332 = vmatmul.mubr.f32.gmra.mrb[0].mxu0 %v2528
      %v4333 = vpop.f32.mrb[0].mxu0
      %v4334 = vadd.f32 0.0, %v4333
      %v4335 = vpop.f32.mrb[0].mxu0
      %4336 = vmatprep.mubr.f32.mxu0 0.0
      %4337 = vmatmul.mubr.f32.gmra.mrb[0].mxu0 %v2531
      %v4338 = vpop.f32.mrb[0].mxu0
      %v4339 = vadd.f32 0.0, %v4338
      %v4340 = vpop.f32.mrb[0].mxu0
      %4341 = vmatprep.mubr.f32.mxu0 0.0
      %4342 = vmatmul.mubr.f32.gmra.mrb[0].mxu0 %v2534
      %v4343 = vpop.f32.mrb[0].mxu0
      %v4344 = vadd.f32 0.0, %v4343
      %v4345 = vpop.f32.mrb[0].mxu0
      %4346 = vmatprep.mubr.f32.mxu0 0.0
      %4347 = vmatmul.mubr.f32.gmra.mrb[0].mxu0 %v2537
      %v4348 = vpop.f32.mrb[0].mxu0
      %v4349 = vadd.f32 0.0, %v4348
      %v4350 = vpop.f32.mrb[0].mxu0
      %4351 = vmatprep.mubr.f32.mxu0 0.0
      %4352 = vmatmul.mubr.f32.gmra.mrb[0].mxu0 %v2540
      %v4353 = vpop.f32.mrb[0].mxu0
      %v4354 = vadd.f32 0.0, %v4353
      %v4355 = vpop.f32.mrb[0].mxu0
      %4356 = vmatprep.mubr.f32.mxu0 0.0
      %4357 = vmatmul.mubr.f32.gmra.mrb[0].mxu0 %v2543
      %v4358 = vpop.f32.mrb[0].mxu0
      %v4359 = vadd.f32 0.0, %v4358
      %v4360 = vpop.f32.mrb[0].mxu0
      %4361 = vmatprep.mubr.f32.mxu0 0.0
      %4362 = vmatmul.mubr.f32.gmra.mrb[0].mxu0 %v2546
      %v4363 = vpop.f32.mrb[0].mxu0
      %v4364 = vadd.f32 0.0, %v4363
      %v4365 = vpop.f32.mrb[0].mxu0
      %4366 = vmatprep.mubr.f32.mxu0 0.0
      %4367 = vmatmul.mubr.f32.gmra.mrb[0].mxu0 %v2549
      %v4368 = vpop.f32.mrb[0].mxu0
      %v4369 = vadd.f32 0.0, %v4368
      %v4370 = vpop.f32.mrb[0].mxu0
      %4371 = vmatprep.mubr.f32.mxu0 0.0
      %4372 = vmatmul.mubr.f32.gmra.mrb[0].mxu0 %v2552
      %v4373 = vpop.f32.mrb[0].mxu0
      %v4374 = vadd.f32 0.0, %v4373
      %v4375 = vpop.f32.mrb[0].mxu0
      %4376 = vmatprep.mubr.f32.mxu0 0.0
      %4377 = vmatmul.mubr.f32.gmra.mrb[0].mxu0 %v2555
      %v4378 = vpop.f32.mrb[0].mxu0
      %v4379 = vadd.f32 0.0, %v4378
      %v4380 = vpop.f32.mrb[0].mxu0
      %4381 = vmatprep.mubr.f32.mxu0 0.0
      %4382 = vmatmul.mubr.f32.gmra.mrb[0].mxu0 %v2558
      %v4383 = vpop.f32.mrb[0].mxu0
      %v4384 = vadd.f32 0.0, %v4383
      %v4385 = vpop.f32.mrb[0].mxu0
      %4386 = vmatprep.mubr.f32.mxu0 0.0
      %4387 = vmatmul.mubr.f32.gmra.mrb[0].mxu0 %v2561
      %v4388 = vpop.f32.mrb[0].mxu0
      %v4389 = vadd.f32 0.0, %v4388
      %v4390 = vpop.f32.mrb[0].mxu0
      %4391 = vmatprep.mubr.f32.mxu0 0.0
      %4392 = vmatmul.mubr.f32.gmra.mrb[0].mxu0 %v2564
      %v4393 = vpop.f32.mrb[0].mxu0
      %v4394 = vadd.f32 0.0, %v4393
      %v4395 = vpop.f32.mrb[0].mxu0
      %4396 = vmatprep.mubr.f32.mxu0 0.0
      %4397 = vmatmul.mubr.f32.gmra.mrb[0].mxu0 %v2567
      %v4398 = vpop.f32.mrb[0].mxu0
      %v4399 = vadd.f32 0.0, %v4398
      %v4400 = vpop.f32.mrb[0].mxu0
      %4401 = vmatprep.mubr.f32.mxu0 0.0
      %4402 = vmatmul.mubr.f32.gmra.mrb[0].mxu0 %v2570
      %v4403 = vpop.f32.mrb[0].mxu0
      %v4404 = vadd.f32 0.0, %v4403
      %v4405 = vpop.f32.mrb[0].mxu0
      %4406 = vmatprep.mubr.f32.mxu0 0.0
      %4407 = vmatmul.mubr.f32.gmra.mrb[0].mxu0 %v2573
      %v4408 = vpop.f32.mrb[0].mxu0
      %v4409 = vadd.f32 0.0, %v4408
      %v4410 = vpop.f32.mrb[0].mxu0
      %4411 = vmatprep.mubr.f32.mxu0 0.0
      %4412 = vmatmul.mubr.f32.gmra.mrb[0].mxu0 %v3386
      %v4413 = vpop.f32.mrb[0].mxu0
      %v4414 = vadd.f32 0.0, %v4413
      %v4415 = vpop.f32.mrb[0].mxu0
      %4416 = vmatprep.mubr.f32.mxu0 0.0
      %4417 = vmatmul.mubr.f32.gmra.mrb[0].mxu0 %v3389
      %v4418 = vpop.f32.mrb[0].mxu0
      %v4419 = vadd.f32 0.0, %v4418
      %v4420 = vpop.f32.mrb[0].mxu0
      %4421 = vmatprep.mubr.f32.mxu0 0.0
      %4422 = vmatmul.mubr.f32.gmra.mrb[0].mxu0 %v4202
      %v4423 = vpop.f32.mrb[0].mxu0
      %v4424 = vadd.f32 0.0, %v4423
      %v4425 = vpop.f32.mrb[0].mxu0
      %4426 = vmatprep.mubr.f32.mxu0 0.0
      %4427 = vmatmul.mubr.f32.gmra.mrb[0].mxu0 %v4205
      %v4428 = vpop.f32.mrb[0].mxu0
      %v4429 = vadd.f32 0.0, %v4428
      %v4430 = vpop.f32.mrb[0].mxu0
      %4431 = vdwg.mxu0
      %v4432 = vadd.f32 %v4160, %v4274
      %v4433 = vadd.f32 %v4161, %v4279
      %v4434 = vadd.f32 %v4162, %v4284
      %v4435 = vadd.f32 %v4163, %v4289
      %v4436 = vadd.f32 %v4164, %v4294
      %v4437 = vadd.f32 %v4165, %v4299
      %v4438 = vadd.f32 %v4166, %v4304
      %v4439 = vadd.f32 %v4167, %v4309
      %v4440 = vadd.f32 %v4168, %v4314
      %v4441 = vadd.f32 %v4169, %v4319
      %v4442 = vadd.f32 %v4170, %v4324
      %v4443 = vadd.f32 %v4171, %v4329
      %v4444 = vadd.f32 %v4172, %v4334
      %v4445 = vadd.f32 %v4173, %v4339
      %v4446 = vadd.f32 %v4174, %v4344
      %v4447 = vadd.f32 %v4175, %v4349
      %v4448 = vadd.f32 %v4176, %v4354
      %v4449 = vadd.f32 %v4177, %v4359
      %v4450 = vadd.f32 %v4178, %v4364
      %v4451 = vadd.f32 %v4179, %v4369
      %v4452 = vadd.f32 %v4180, %v4374
      %v4453 = vadd.f32 %v4181, %v4379
      %v4454 = vadd.f32 %v4182, %v4384
      %v4455 = vadd.f32 %v4183, %v4389
      %v4456 = vadd.f32 %v4184, %v4394
      %v4457 = vadd.f32 %v4185, %v4399
      %v4458 = vadd.f32 %v4186, %v4404
      %v4459 = vadd.f32 %v4187, %v4409
      %v4460 = vadd.f32 %v4188, %v4414
      %v4461 = vadd.f32 %v4189, %v4419
      %v4462 = vadd.f32 %v4190, %v4424
      %v4463 = vadd.f32 %v4191, %v4429
      %v4464 = vld [vmem:[%s5] sm:$0x1]
      %v4466 = vlaneseq
      %v4467 = vshrl.u32 %v4466, 7
      %v4468 = vsub.s32 0, %v4467
      %v4469 = vrot.slane %v4464, %v4468
      %v4471 = vadd.f32 %v4432, %v4469
      %v4472 = vadd.f32 %v4433, %v4469
      %v4473 = vadd.f32 %v4434, %v4469
      %v4474 = vadd.f32 %v4435, %v4469
      %v4475 = vadd.f32 %v4436, %v4469
      %v4476 = vadd.f32 %v4437, %v4469
      %v4477 = vadd.f32 %v4438, %v4469
      %v4478 = vadd.f32 %v4439, %v4469
      %v4479 = vadd.f32 %v4440, %v4469
      %v4480 = vadd.f32 %v4441, %v4469
      %v4481 = vadd.f32 %v4442, %v4469
      %v4482 = vadd.f32 %v4443, %v4469
      %v4483 = vadd.f32 %v4444, %v4469
      %v4484 = vadd.f32 %v4445, %v4469
      %v4485 = vadd.f32 %v4446, %v4469
      %v4486 = vadd.f32 %v4447, %v4469
      %v4487 = vadd.f32 %v4448, %v4469
      %v4488 = vadd.f32 %v4449, %v4469
      %v4489 = vadd.f32 %v4450, %v4469
      %v4490 = vadd.f32 %v4451, %v4469
      %v4491 = vadd.f32 %v4452, %v4469
      %v4492 = vadd.f32 %v4453, %v4469
      %v4493 = vadd.f32 %v4454, %v4469
      %v4494 = vadd.f32 %v4455, %v4469
      %v4495 = vadd.f32 %v4456, %v4469
      %v4496 = vadd.f32 %v4457, %v4469
      %v4497 = vadd.f32 %v4458, %v4469
      %v4498 = vadd.f32 %v4459, %v4469
      %v4499 = vadd.f32 %v4460, %v4469
      %v4500 = vadd.f32 %v4461, %v4469
      %v4501 = vadd.f32 %v4462, %v4469
      %v4502 = vadd.f32 %v4463, %v4469
      %v4503 = vmax.f32 %v4471, 0.0
      %v4504 = vmax.f32 %v4472, 0.0
      %v4505 = vmax.f32 %v4473, 0.0
      %v4506 = vmax.f32 %v4474, 0.0
      %v4507 = vmax.f32 %v4475, 0.0
      %v4508 = vmax.f32 %v4476, 0.0
      %v4509 = vmax.f32 %v4477, 0.0
      %v4510 = vmax.f32 %v4478, 0.0
      %v4511 = vmax.f32 %v4479, 0.0
      %v4512 = vmax.f32 %v4480, 0.0
      %v4513 = vmax.f32 %v4481, 0.0
      %v4514 = vmax.f32 %v4482, 0.0
      %v4515 = vmax.f32 %v4483, 0.0
      %v4516 = vmax.f32 %v4484, 0.0
      %v4517 = vmax.f32 %v4485, 0.0
      %v4518 = vmax.f32 %v4486, 0.0
      %v4519 = vmax.f32 %v4487, 0.0
      %v4520 = vmax.f32 %v4488, 0.0
      %v4521 = vmax.f32 %v4489, 0.0
      %v4522 = vmax.f32 %v4490, 0.0
      %v4523 = vmax.f32 %v4491, 0.0
      %v4524 = vmax.f32 %v4492, 0.0
      %v4525 = vmax.f32 %v4493, 0.0
      %v4526 = vmax.f32 %v4494, 0.0
      %v4527 = vmax.f32 %v4495, 0.0
      %v4528 = vmax.f32 %v4496, 0.0
      %v4529 = vmax.f32 %v4497, 0.0
      %v4530 = vmax.f32 %v4498, 0.0
      %v4531 = vmax.f32 %v4499, 0.0
      %v4532 = vmax.f32 %v4500, 0.0
      %v4533 = vmax.f32 %v4501, 0.0
      %v4534 = vmax.f32 %v4502, 0.0
      %4535 = vst [vmem:[%s293] sm:$0xff] %v4503
      %4536 = vst [vmem:[%s293 + $0x8] sm:$0xff] %v4504
      %4537 = vst [vmem:[%s293 + $0x10] sm:$0xff] %v4505
      %4538 = vst [vmem:[%s293 + $0x18] sm:$0xff] %v4506
      %4539 = vst [vmem:[%s293 + $0x20] sm:$0xff] %v4507
      %4540 = vst [vmem:[%s293 + $0x28] sm:$0xff] %v4508
      %4541 = vst [vmem:[%s293 + $0x30] sm:$0xff] %v4509
      %4542 = vst [vmem:[%s293 + $0x38] sm:$0xff] %v4510
      %4543 = vst [vmem:[%s293 + $0x40] sm:$0xff] %v4511
      %4544 = vst [vmem:[%s293 + $0x48] sm:$0xff] %v4512
      %4545 = vst [vmem:[%s293 + $0x50] sm:$0xff] %v4513
      %4546 = vst [vmem:[%s293 + $0x58] sm:$0xff] %v4514
      %4547 = vst [vmem:[%s293 + $0x60] sm:$0xff] %v4515
      %4548 = vst [vmem:[%s293 + $0x68] sm:$0xff] %v4516
      %4549 = vst [vmem:[%s293 + $0x70] sm:$0xff] %v4517
      %4550 = vst [vmem:[%s293 + $0x78] sm:$0xff] %v4518
      %4551 = vst [vmem:[%s293 + $0x80] sm:$0xff] %v4519
      %4552 = vst [vmem:[%s293 + $0x88] sm:$0xff] %v4520
      %4553 = vst [vmem:[%s293 + $0x90] sm:$0xff] %v4521
      %4554 = vst [vmem:[%s293 + $0x98] sm:$0xff] %v4522
      %4555 = vst [vmem:[%s293 + $0xa0] sm:$0xff] %v4523
      %4556 = vst [vmem:[%s293 + $0xa8] sm:$0xff] %v4524
      %4557 = vst [vmem:[%s293 + $0xb0] sm:$0xff] %v4525
      %4558 = vst [vmem:[%s293 + $0xb8] sm:$0xff] %v4526
      %4559 = vst [vmem:[%s293 + $0xc0] sm:$0xff] %v4527
      %4560 = vst [vmem:[%s293 + $0xc8] sm:$0xff] %v4528
      %4561 = vst [vmem:[%s293 + $0xd0] sm:$0xff] %v4529
      %4562 = vst [vmem:[%s293 + $0xd8] sm:$0xff] %v4530
      %4563 = vst [vmem:[%s293 + $0xe0] sm:$0xff] %v4531
      %4564 = vst [vmem:[%s293 + $0xe8] sm:$0xff] %v4532
      %4565 = vst [vmem:[%s293 + $0xf0] sm:$0xff] %v4533
      %4566 = vst [vmem:[%s293 + $0xf8] sm:$0xff] %v4534
      %s4567 = smul.u32 32, %s22
      %p4568 = scmp.lt.s32.totalorder %s21, 1
      %s4569 = scalar_select %p4568, %s21, 1
      %p4570 = scmp.lt.s32.totalorder %s4567, 31
      %s4571 = scalar_select %p4570, %s4567, 31
      %s4572 = smul.addr %s4569, 32
      %s4573 = sadd.s32 %s4571, %s4572
      %s4574 = smul.addr %s4573, 8
      %s4575 = scalar_lea.vmem %s6, %s4574
      // Predicated region
      $region45: #{upsampling_forward.1} parent=43 // pred_check
        %p4576 = pneg %p185
      $region46: #{upsampling_forward.1} parent=43 // pred_check_branch
        %4578 = sbr.rel (%p4576) target = $region48
      $region47: #{upsampling_forward.1} parent=43 // pred_region
        %s4579 = smul.u32 32, %s22
      $region48: #{upsampling_forward.1} parent=43 // pred_fallthru
        _
    $region44: #{upsampling_forward.1} parent=5 // pred_fallthru
      _
    %p4580 = scmp.le.s32.totalorder 2, %s12
    // Predicated region
    $region49: #{upsampling_forward.1} parent=5 // pred_check
      %p4581 = pneg %p4580
    $region50: #{upsampling_forward.1} parent=5 // pred_check_branch
      %4583 = sbr.rel (%p4581) target = $region52
    $region51: #{upsampling_forward.1} parent=5 // pred_region
      %s4584 = ssub.s32 %s12, 2
      // Predicated region
      $region53: #{upsampling_forward.1} parent=51 // pred_check
        %p4585 = pneg %p191
      $region54: #{upsampling_forward.1} parent=51 // pred_check_branch
        %4587 = sbr.rel (%p4585) target = $region56
      $region55: #{upsampling_forward.1} parent=51 // pred_region
        %s4588 = smul.u32 32, %s24
        %p4589 = scmp.lt.s32.totalorder %s23, 1
        %s4590 = scalar_select %p4589, %s23, 1
        %p4591 = scmp.lt.s32.totalorder %s4588, 31
        %s4592 = scalar_select %p4591, %s4588, 31
        %s4593 = smul.addr %s4590, 32
        %s4594 = sadd.s32 %s4592, %s4593
        %s4595 = smul.addr %s4594, 8
        %s4596 = scalar_lea.vmem %s6, %s4595
      $region56: #{upsampling_forward.1} parent=51 // pred_fallthru
        _
    $region52: #{upsampling_forward.1} parent=5 // pred_fallthru
      _
  $region6: #{upsampling_forward.1} parent=0 // loop_footer
    %s16 = sadd.s32 1, %s12
  $region7: #{upsampling_forward.1} parent=0 // loop_footer_branch
    %11 = sbr.rel target = $region3
  $region8: #{upsampling_forward.1} parent=0 // loop_exit
    _

</llo_original>
